<compile_context>
chip_gen: v7x
topology: tpu7x:2x2x1
jax: 0.10.0
libtpu: 0.0.40
codegen_flags: <defaults>
</compile_context>

<pallas_src>
import functools
import math

import jax
import jax.numpy as jnp
from jax.experimental import pallas as pl
from jax.experimental.pallas import tpu as pltpu

LANE = 128


def _ru(x, m):
    return ((x + m - 1) // m) * m


def _bdot(a, b):
    """MXU matmul: bf16 operands, f32 accumulation."""
    return jnp.dot(a.astype(jnp.bfloat16), b.astype(jnp.bfloat16),
                   preferred_element_type=jnp.float32)


_VMEM_LIMIT = None


def _vmem_limit_bytes():
    """Generation-aware VMEM budget (~3/4 of physical, capped at 100 MiB)."""
    global _VMEM_LIMIT
    if _VMEM_LIMIT is None:
        try:
            cap = int(pltpu.get_tpu_info().vmem_capacity_bytes)
        except Exception:
            cap = 64 * 1024 * 1024   # conservative fallback (safe on v7x too)
        _VMEM_LIMIT = min(cap * 3 // 4, 100 * 1024 * 1024)
    return _VMEM_LIMIT


def _compiler_params(sem):
    return pltpu.CompilerParams(dimension_semantics=sem,
                                vmem_limit_bytes=_vmem_limit_bytes())


# ----------------------------------------------------------------------------
# Kernels
# ----------------------------------------------------------------------------

def ggnn_layer_kernel(bn, h0_hbm, a_hbm, w_ref, wih_ref, whh_ref, bih_ref,
                      bhh_ref, out_hbm, h_state, xw_state, a_vmem, dma_sem):
    """All timesteps of one GatedGraphConv layer, fused.

    grid = (timestep t, dst-node block nb).  h_state is the resident f32 GRU
    state, a_vmem is the resident bf16 adjacency (both DMA'd once at the first
    grid step), xw_state holds x @ W[t] staged once per timestep.  The final
    state is DMA'd to HBM exactly once at the last grid step.
    """
    t = pl.program_id(0)
    nb = pl.program_id(1)
    t_last = pl.num_programs(0) - 1
    nb_last = pl.num_programs(1) - 1
    ep = h_state.shape[1]
    dst = pl.multiple_of(nb * bn, bn)

    # One-time DMA of the layer input and adjacency into resident VMEM.
    @pl.when(jnp.logical_and(t == 0, nb == 0))
    def _():
        cp_h = pltpu.make_async_copy(h0_hbm, h_state, dma_sem.at[0])
        cp_a = pltpu.make_async_copy(a_hbm, a_vmem, dma_sem.at[1])
        cp_h.start()
        cp_a.start()
        cp_h.wait()
        cp_a.wait()

    # Stage x @ W[t] for all src nodes once per timestep (pre-update h).
    @pl.when(nb == 0)
    def _():
        xw_state[...] = _bdot(h_state[...], w_ref[0]).astype(jnp.bfloat16)

    # Message aggregation for this dst tile: full-width K over resident A.
    m = jnp.dot(a_vmem[pl.ds(dst, bn), :], xw_state[...],
                preferred_element_type=jnp.float32)

    # GRU cell (gates live at 128-aligned lane offsets r | z | n).
    h_old = h_state[pl.ds(dst, bn), :]
    gi = _bdot(m, wih_ref[...]) + bih_ref[...]
    gh = _bdot(h_old, whh_ref[...]) + bhh_ref[...]
    r = jax.nn.sigmoid(gi[:, :ep] + gh[:, :ep])
    z = jax.nn.sigmoid(gi[:, ep:2 * ep] + gh[:, ep:2 * ep])
    n = jnp.tanh(gi[:, 2 * ep:] + r * gh[:, 2 * ep:])
    h_state[pl.ds(dst, bn), :] = (1.0 - z) * n + z * h_old

    # Single HBM writeback of the final state (no per-timestep writebacks).
    @pl.when(jnp.logical_and(t == t_last, nb == nb_last))
    def _():
        cp_out = pltpu.make_async_copy(h_state, out_hbm, dma_sem.at[0])
        cp_out.start()
        cp_out.wait()


def tail_kernel(h_ref, h0_ref, wlh_ref, wlx_ref, bl_ref, wrh_ref, wrx_ref,
                br_ref, p_ref, wall_ref, ball_ref, out_ref, pooled_acc):
    """Fused classifier + global_add_pool + all prediction heads.

    node_out = sigmoid(hx @ Wl + bl) * tanh(hx @ Wr + br) with hx = [h | h0]
    (split weights) is produced per node block, immediately pooled into a
    resident (g_pad, e_pad) accumulator (P_block @ node_out_block), and the
    per-head linear layers run once in the epilogue.  node_out never hits HBM.
    """
    i = pl.program_id(0)
    h = h_ref[...].astype(jnp.bfloat16)
    h0 = h0_ref[...].astype(jnp.bfloat16)
    left = jax.nn.sigmoid(
        jnp.dot(h, wlh_ref[...], preferred_element_type=jnp.float32)
        + jnp.dot(h0, wlx_ref[...], preferred_element_type=jnp.float32)
        + bl_ref[...])
    right = jnp.tanh(
        jnp.dot(h, wrh_ref[...], preferred_element_type=jnp.float32)
        + jnp.dot(h0, wrx_ref[...], preferred_element_type=jnp.float32)
        + br_ref[...])
    node_out = (left * right).astype(jnp.bfloat16)

    @pl.when(i == 0)
    def _():
        pooled_acc[...] = jnp.zeros(pooled_acc.shape, pooled_acc.dtype)

    pooled_acc[...] += jnp.dot(p_ref[...], node_out,
                               preferred_element_type=jnp.float32)

    @pl.when(i == pl.num_programs(0) - 1)
    def _():
        out_ref[...] = _bdot(pooled_acc[...], wall_ref[...]) + ball_ref[...]


# ----------------------------------------------------------------------------
# pallas_call wrappers
# ----------------------------------------------------------------------------

def ggnn_layer(h0_pad, adj, w_stack, w_ih, w_hh, b_ih, b_hh, *, bn=256):
    n_pad, e_pad = h0_pad.shape
    t_steps = w_stack.shape[0]
    grid = (t_steps, n_pad // bn)

    # Residency budget check (resident A + states + double-buffered weights).
    resident_bytes = n_pad * n_pad * 2 + n_pad * e_pad * (4 + 2)
    weight_bytes = 2 * (e_pad * e_pad * 2 + 2 * e_pad * 3 * e_pad * 2
                        + 2 * 3 * e_pad * 4)
    if resident_bytes + weight_bytes > _vmem_limit_bytes() - (4 << 20):
        # TODO(synk): streaming / block-sparse adjacency fallback for graphs
        # whose dense A does not fit the VMEM residency budget.
        raise NotImplementedError(
            "dense adjacency does not fit the VMEM residency budget")

    flops = t_steps * (2 * n_pad * e_pad * e_pad            # x @ W[t]
                       + 2 * n_pad * n_pad * e_pad          # A @ xW
                       + 2 * n_pad * e_pad * 6 * e_pad)     # GRU gate matmuls
    bytes_accessed = (adj.size * 2                           # A read once
                      + 2 * n_pad * e_pad * 4                # h0 in + h out
                      + w_stack.size * 2 + w_ih.size * 2 + w_hh.size * 2)

    return pl.pallas_call(
        functools.partial(ggnn_layer_kernel, bn),
        out_shape=jax.ShapeDtypeStruct((n_pad, e_pad), jnp.float32),
        grid_spec=pltpu.PrefetchScalarGridSpec(
            num_scalar_prefetch=0,
            grid=grid,
            in_specs=[
                pl.BlockSpec(memory_space=pl.ANY),    # h0 (HBM, one-time DMA)
                pl.BlockSpec(memory_space=pl.ANY),    # A  (HBM, one-time DMA)
                pl.BlockSpec((1, e_pad, e_pad), lambda t, i: (t, 0, 0)),  # W[t]
                pl.BlockSpec((e_pad, 3 * e_pad), lambda t, i: (0, 0)),    # w_ih
                pl.BlockSpec((e_pad, 3 * e_pad), lambda t, i: (0, 0)),    # w_hh
                pl.BlockSpec((1, 3 * e_pad), lambda t, i: (0, 0)),        # b_ih
                pl.BlockSpec((1, 3 * e_pad), lambda t, i: (0, 0)),        # b_hh
            ],
            out_specs=pl.BlockSpec(memory_space=pl.ANY),   # written via DMA
            scratch_shapes=[
                pltpu.VMEM((n_pad, e_pad), jnp.float32),    # resident GRU state
                pltpu.VMEM((n_pad, e_pad), jnp.bfloat16),   # staged x @ W[t]
                pltpu.VMEM((n_pad, n_pad), jnp.bfloat16),   # resident adjacency
                pltpu.SemaphoreType.DMA((2,)),
            ]),
        # Both axes "arbitrary": the resident VMEM state is shared across the
        # whole grid, so it must stay on one core and run sequentially.
        compiler_params=_compiler_params(("arbitrary", "arbitrary")),
        cost_estimate=pl.CostEstimate(
            flops=int(flops),
            transcendentals=int(t_steps * n_pad * 3 * e_pad),
            bytes_accessed=int(bytes_accessed)),
    )(h0_pad, adj, w_stack, w_ih, w_hh, b_ih, b_hh)


def fused_tail(h_pad, h0_pad, wl_h, wl_x, bl, wr_h, wr_x, br,
               pool_mat, w_all, b_all, *, bn=256):
    n_pad, e_pad = h_pad.shape
    g_pad = pool_mat.shape[0]
    width = w_all.shape[1]
    return pl.pallas_call(
        tail_kernel,
        out_shape=jax.ShapeDtypeStruct((g_pad, width), jnp.float32),
        grid_spec=pltpu.PrefetchScalarGridSpec(
            num_scalar_prefetch=0,
            grid=(n_pad // bn,),
            in_specs=[
                pl.BlockSpec((bn, e_pad), lambda i: (i, 0)),       # h
                pl.BlockSpec((bn, e_pad), lambda i: (i, 0)),       # h0
                pl.BlockSpec((e_pad, e_pad), lambda i: (0, 0)),    # Wl (h part)
                pl.BlockSpec((e_pad, e_pad), lambda i: (0, 0)),    # Wl (h0 part)
                pl.BlockSpec((1, e_pad), lambda i: (0, 0)),        # bl
                pl.BlockSpec((e_pad, e_pad), lambda i: (0, 0)),    # Wr (h part)
                pl.BlockSpec((e_pad, e_pad), lambda i: (0, 0)),    # Wr (h0 part)
                pl.BlockSpec((1, e_pad), lambda i: (0, 0)),        # br
                pl.BlockSpec((g_pad, bn), lambda i: (0, i)),       # pooling tile
                pl.BlockSpec((e_pad, width), lambda i: (0, 0)),    # head weights
                pl.BlockSpec((1, width), lambda i: (0, 0)),        # head biases
            ],
            out_specs=pl.BlockSpec((g_pad, width), lambda i: (0, 0)),
            scratch_shapes=[pltpu.VMEM((g_pad, e_pad), jnp.float32)]),
        # Accumulator output pattern -> single grid axis is a reduction.
        compiler_params=_compiler_params(("arbitrary",)),
    )(h_pad, h0_pad, wl_h, wl_x, bl, wr_h, wr_x, br, pool_mat, w_all, b_all)


# ----------------------------------------------------------------------------
# Padding helpers (zero-padded so padding never leaks into valid outputs)
# ----------------------------------------------------------------------------

def _pad2(x, shape):
    out = jnp.zeros(shape, x.dtype)
    return out.at[tuple(slice(0, s) for s in x.shape)].set(x)


def _pad_gates(w, e, e_pad):
    """(in, 3e) packed [r|z|n] -> (e_pad, 3*e_pad), each gate 128-aligned."""
    in_dim = w.shape[0]
    out = jnp.zeros((e_pad, 3 * e_pad), w.dtype)
    for g in range(3):
        out = out.at[:in_dim, g * e_pad:g * e_pad + e].set(w[:, g * e:(g + 1) * e])
    return out


def _pad_gate_bias(b, e, e_pad):
    out = jnp.zeros((1, 3 * e_pad), b.dtype)
    for g in range(3):
        out = out.at[:, g * e_pad:g * e_pad + e].set(b[:, g * e:(g + 1) * e])
    return out


# ----------------------------------------------------------------------------
# Model wrapper (JAX glue around the kernels)
# ----------------------------------------------------------------------------

def ggnn_simple_forward(params, x_feat, edge_index, node_depth, batch,
                        num_graphs, layer_timesteps, *, bn=256, tail_bn=256):
    n = x_feat.shape[0]
    emb = params["type_emb"].shape[1]
    e_pad = _ru(emb, LANE)
    n_pad = _ru(n, math.lcm(bn, tail_bn))
    g_pad = _ru(num_graphs, 8)

    # node_encoder (embedding gathers; JAX glue, not the hot path)
    h0 = (params["type_emb"][x_feat[:, 0]]
          + params["attr_emb"][x_feat[:, 1]]
          + params["depth_emb"][node_depth.reshape(-1)]).astype(jnp.float32)
    h0_pad = _pad2(h0, (n_pad, e_pad))

    # Dense adjacency A[dst, src] += 1 per edge == scatter-add aggregation.
    # Built directly in bf16 (exact for edge multiplicity <= 256); padded
    # rows/cols are zero so padding never leaks into real nodes.
    src, dst = edge_index[0], edge_index[1]
    adj = (jnp.zeros((n_pad, n_pad), jnp.bfloat16)
           .at[dst, src].add(jnp.ones(src.shape, jnp.bfloat16)))

    # Fused GatedGraphConv layers (all timesteps of a layer in one call,
    # adjacency + GRU state resident in VMEM).
    h_pad = h0_pad
    for layer_idx, t_steps in enumerate(layer_timesteps):
        conv = params["convs"][layer_idx]
        w_stack = _pad2(conv["weight"], (t_steps, e_pad, e_pad)).astype(jnp.bfloat16)
        w_ih = _pad_gates(conv["w_ih_t"], emb, e_pad).astype(jnp.bfloat16)
        w_hh = _pad_gates(conv["w_hh_t"], emb, e_pad).astype(jnp.bfloat16)
        b_ih = _pad_gate_bias(conv["b_ih"], emb, e_pad)
        b_hh = _pad_gate_bias(conv["b_hh"], emb, e_pad)
        h_pad = ggnn_layer(h_pad, adj, w_stack, w_ih, w_hh, b_ih, b_hh, bn=bn)

    # classifier_l(hx)*classifier_r(hx), global_add_pool and all heads fused.
    wl_h = _pad2(params["wl_t"][:emb], (e_pad, e_pad)).astype(jnp.bfloat16)
    wl_x = _pad2(params["wl_t"][emb:], (e_pad, e_pad)).astype(jnp.bfloat16)
    wr_h = _pad2(params["wr_t"][:emb], (e_pad, e_pad)).astype(jnp.bfloat16)
    wr_x = _pad2(params["wr_t"][emb:], (e_pad, e_pad)).astype(jnp.bfloat16)
    bl = _pad2(params["bl"], (1, e_pad))
    br = _pad2(params["br"], (1, e_pad))

    pool_mat = (jnp.zeros((g_pad, n_pad), jnp.bfloat16)
                .at[batch, jnp.arange(n)].set(jnp.ones(n, jnp.bfloat16)))

    max_seq_len, num_vocab = params["pred_b"].shape
    v_pad = _ru(num_vocab, LANE)
    w_all = jnp.zeros((e_pad, max_seq_len * v_pad), jnp.float32)
    b_all = jnp.zeros((1, max_seq_len * v_pad), jnp.float32)
    for i in range(max_seq_len):
        w_all = w_all.at[:emb, i * v_pad:i * v_pad + num_vocab].set(
            params["pred_w_t"][i])
        b_all = b_all.at[0, i * v_pad:i * v_pad + num_vocab].set(
            params["pred_b"][i])

    flat = fused_tail(h_pad, h0_pad, wl_h, wl_x, bl, wr_h, wr_x, br,
                      pool_mat, w_all.astype(jnp.bfloat16), b_all, bn=tail_bn)

    return [flat[:num_graphs, i * v_pad:i * v_pad + num_vocab]
            for i in range(max_seq_len)]


# ----------------------------------------------------------------------------
# Pure-JAX reference with the same bf16-MXU math (for correctness check)
# ----------------------------------------------------------------------------

def reference_forward(params, x_feat, edge_index, node_depth, batch,
                      num_graphs, layer_timesteps):
    n = x_feat.shape[0]
    emb = params["type_emb"].shape[1]
    h0 = (params["type_emb"][x_feat[:, 0]]
          + params["attr_emb"][x_feat[:, 1]]
          + params["depth_emb"][node_depth.reshape(-1)]).astype(jnp.float32)
    src, dst = edge_index[0], edge_index[1]
    adj = jnp.zeros((n, n), jnp.float32).at[dst, src].add(1.0)

    h = h0
    for layer_idx, t_steps in enumerate(layer_timesteps):
        conv = params["convs"][layer_idx]
        for t in range(t_steps):
            m = _bdot(adj, _bdot(h, conv["weight"][t]))
            gi = _bdot(m, conv["w_ih_t"]) + conv["b_ih"]
            gh = _bdot(h, conv["w_hh_t"]) + conv["b_hh"]
            r = jax.nn.sigmoid(gi[:, :emb] + gh[:, :emb])
            z = jax.nn.sigmoid(gi[:, emb:2 * emb] + gh[:, emb:2 * emb])
            nn_ = jnp.tanh(gi[:, 2 * emb:] + r * gh[:, 2 * emb:])
            h = (1.0 - z) * nn_ + z * h

    hx = jnp.concatenate([h, h0], axis=-1)
    node_out = (jax.nn.sigmoid(_bdot(hx, params["wl_t"]) + params["bl"])
                * jnp.tanh(_bdot(hx, params["wr_t"]) + params["br"]))
    pool = jnp.zeros((num_graphs, n), jnp.float32).at[batch, jnp.arange(n)].add(1.0)
    pooled = _bdot(pool, node_out)
    max_seq_len, _ = params["pred_b"].shape
    return [_bdot(pooled, params["pred_w_t"][i]) + params["pred_b"][i]
            for i in range(max_seq_len)]


# ----------------------------------------------------------------------------
# Deterministic parameter / input construction
# ----------------------------------------------------------------------------

def make_params(key, emb_dim, num_vocab, max_seq_len, layer_timesteps,
                type_vocab, attr_vocab, max_depth):
    ks = iter(jax.random.split(key, 32))

    def rnd(shape, scale=0.1):
        return scale * jax.random.normal(next(ks), shape, jnp.float32)

    convs = []
    for num_timesteps in layer_timesteps:
        convs.append(dict(
            weight=rnd((num_timesteps, emb_dim, emb_dim)),     # per-timestep W
            w_ih_t=rnd((emb_dim, 3 * emb_dim)),                # GRU weight_ih.T
            w_hh_t=rnd((emb_dim, 3 * emb_dim)),                # GRU weight_hh.T
            b_ih=rnd((1, 3 * emb_dim)),
            b_hh=rnd((1, 3 * emb_dim)),
        ))

    return dict(
        type_emb=rnd((type_vocab, emb_dim)),
        attr_emb=rnd((attr_vocab, emb_dim)),
        depth_emb=rnd((max_depth, emb_dim)),
        convs=convs,
        wl_t=rnd((2 * emb_dim, emb_dim)), bl=rnd((1, emb_dim)),
        wr_t=rnd((2 * emb_dim, emb_dim)), br=rnd((1, emb_dim)),
        pred_w_t=rnd((max_seq_len, emb_dim, num_vocab)),
        pred_b=rnd((max_seq_len, num_vocab)),
    )


if __name__ == "__main__":
    NUM_NODES = 300          # pads to 512 -> two 256-row dst tiles exercised
    EMB_DIM = 32
    NUM_EDGES = 900
    NUM_GRAPHS = 3
    MAX_SEQ_LEN = 4
    NUM_VOCAB = 10
    LAYER_TIMESTEPS = [3]
    TYPE_VOCAB, ATTR_VOCAB, MAX_DEPTH = 8, 6, 5

    key = jax.random.PRNGKey(0)
    k_p, k_x, k_a, k_d, k_e = jax.random.split(key, 5)

    params = make_params(k_p, EMB_DIM, NUM_VOCAB, MAX_SEQ_LEN, LAYER_TIMESTEPS,
                         TYPE_VOCAB, ATTR_VOCAB, MAX_DEPTH)

    x_feat = jnp.stack([
        jax.random.randint(k_x, (NUM_NODES,), 0, TYPE_VOCAB),
        jax.random.randint(k_a, (NUM_NODES,), 0, ATTR_VOCAB),
    ], axis=-1)
    node_depth = jax.random.randint(k_d, (NUM_NODES,), 0, MAX_DEPTH)
    edge_index = jax.random.randint(k_e, (2, NUM_EDGES), 0, NUM_NODES)
    batch = jnp.repeat(jnp.arange(NUM_GRAPHS, dtype=jnp.int32),
                       NUM_NODES // NUM_GRAPHS)

    pred_list = ggnn_simple_forward(params, x_feat, edge_index, node_depth,
                                    batch, NUM_GRAPHS, LAYER_TIMESTEPS)
    pred_list = [jax.block_until_ready(p) for p in pred_list]

    ref_list = reference_forward(params, x_feat, edge_index, node_depth,
                                 batch, NUM_GRAPHS, LAYER_TIMESTEPS)
    # tolerance accounts for bf16 MXU inputs / differing accumulation order.
    for got, ref in zip(pred_list, ref_list):
        assert got.shape == (NUM_GRAPHS, NUM_VOCAB)
        err = float(jnp.max(jnp.abs(got - ref)))
        assert jnp.allclose(got, ref, atol=1e-2, rtol=1e-2), err

    print("KERNEL_OK")
</pallas_src>

<mosaic_0001>
module attributes {stable_mosaic.version = 11 : i64} {
  func.func @ggnn_layer_kernel(%arg0: i32, %arg1: i32, %arg2: memref<512x128xf32, #tpu.memory_space<any>>, %arg3: memref<512x512xbf16, #tpu.memory_space<any>>, %arg4: memref<1x128x128xbf16, #tpu.memory_space<vmem>>, %arg5: memref<128x384xbf16, #tpu.memory_space<vmem>>, %arg6: memref<128x384xbf16, #tpu.memory_space<vmem>>, %arg7: memref<1x384xf32, #tpu.memory_space<vmem>>, %arg8: memref<1x384xf32, #tpu.memory_space<vmem>>, %arg9: memref<512x128xf32, #tpu.memory_space<any>>, %arg10: memref<512x128xf32, #tpu.memory_space<vmem>>, %arg11: memref<512x128xbf16, #tpu.memory_space<vmem>>, %arg12: memref<512x512xbf16, #tpu.memory_space<vmem>>, %arg13: memref<2x!tpu.dma_semaphore, #tpu.memory_space<semaphore_mem>>) attributes {dimension_semantics = [#tpu.dimension_semantics<arbitrary>, #tpu.dimension_semantics<arbitrary>], iteration_bounds = array<i64: 3, 2>, scalar_prefetch = 0 : i64, scratch_operands = 4 : i64, tpu.core_type = #tpu.core_type<tc>, window_params = [{}, {}, {transform_indices = @transform_2, window_bounds = array<i64: 1, 128, 128>}, {pipeline_mode = #tpu.pipeline_mode<synchronous>, transform_indices = @transform_3, window_bounds = array<i64: 128, 384>}, {pipeline_mode = #tpu.pipeline_mode<synchronous>, transform_indices = @transform_4, window_bounds = array<i64: 128, 384>}, {pipeline_mode = #tpu.pipeline_mode<synchronous>, transform_indices = @transform_5, window_bounds = array<i64: 1, 384>}, {pipeline_mode = #tpu.pipeline_mode<synchronous>, transform_indices = @transform_6, window_bounds = array<i64: 1, 384>}, {}]} {
    %c256_i32 = arith.constant 256 : i32
    %0 = arith.muli %arg1, %c256_i32 : i32
    %1 = tpu.assume_multiple %0, 256 : i32
    %c0_i32 = arith.constant 0 : i32
    %2 = arith.cmpi eq, %arg0, %c0_i32 : i32
    %c0_i32_0 = arith.constant 0 : i32
    %3 = arith.cmpi eq, %arg1, %c0_i32_0 : i32
    %4 = arith.andi %2, %3 : i1
    %5 = arith.extui %4 : i1 to i32
    %c0_i32_1 = arith.constant 0 : i32
    %6 = arith.cmpi ne, %5, %c0_i32_1 : i32
    scf.if %6 {
      %c0_i32_22 = arith.constant 0 : i32
      %61 = tpu.memref_slice %arg13[%c0_i32_22] : memref<2x!tpu.dma_semaphore, #tpu.memory_space<semaphore_mem>> -> memref<1x!tpu.dma_semaphore, #tpu.memory_space<semaphore_mem>>
      %62 = tpu.memref_squeeze %61 : memref<1x!tpu.dma_semaphore, #tpu.memory_space<semaphore_mem>> -> memref<!tpu.dma_semaphore, #tpu.memory_space<semaphore_mem>>
      tpu.enqueue_dma source(%arg2 : memref<512x128xf32, #tpu.memory_space<any>>) target(%arg10 : memref<512x128xf32, #tpu.memory_space<vmem>>) target_semaphore(%62 : memref<!tpu.dma_semaphore, #tpu.memory_space<semaphore_mem>>)
      %c1_i32_23 = arith.constant 1 : i32
      %63 = tpu.memref_slice %arg13[%c1_i32_23] : memref<2x!tpu.dma_semaphore, #tpu.memory_space<semaphore_mem>> -> memref<1x!tpu.dma_semaphore, #tpu.memory_space<semaphore_mem>>
      %64 = tpu.memref_squeeze %63 : memref<1x!tpu.dma_semaphore, #tpu.memory_space<semaphore_mem>> -> memref<!tpu.dma_semaphore, #tpu.memory_space<semaphore_mem>>
      tpu.enqueue_dma source(%arg3 : memref<512x512xbf16, #tpu.memory_space<any>>) target(%arg12 : memref<512x512xbf16, #tpu.memory_space<vmem>>) target_semaphore(%64 : memref<!tpu.dma_semaphore, #tpu.memory_space<semaphore_mem>>)
      %c0_i32_24 = arith.constant 0 : i32
      %65 = tpu.memref_slice %arg13[%c0_i32_24] : memref<2x!tpu.dma_semaphore, #tpu.memory_space<semaphore_mem>> -> memref<1x!tpu.dma_semaphore, #tpu.memory_space<semaphore_mem>>
      %66 = tpu.memref_squeeze %65 : memref<1x!tpu.dma_semaphore, #tpu.memory_space<semaphore_mem>> -> memref<!tpu.dma_semaphore, #tpu.memory_space<semaphore_mem>>
      tpu.wait_dma2 semaphore(%66 : memref<!tpu.dma_semaphore, #tpu.memory_space<semaphore_mem>>) src(%arg2 : memref<512x128xf32, #tpu.memory_space<any>>) dst(%arg10 : memref<512x128xf32, #tpu.memory_space<vmem>>)
      %c1_i32_25 = arith.constant 1 : i32
      %67 = tpu.memref_slice %arg13[%c1_i32_25] : memref<2x!tpu.dma_semaphore, #tpu.memory_space<semaphore_mem>> -> memref<1x!tpu.dma_semaphore, #tpu.memory_space<semaphore_mem>>
      %68 = tpu.memref_squeeze %67 : memref<1x!tpu.dma_semaphore, #tpu.memory_space<semaphore_mem>> -> memref<!tpu.dma_semaphore, #tpu.memory_space<semaphore_mem>>
      tpu.wait_dma2 semaphore(%68 : memref<!tpu.dma_semaphore, #tpu.memory_space<semaphore_mem>>) src(%arg3 : memref<512x512xbf16, #tpu.memory_space<any>>) dst(%arg12 : memref<512x512xbf16, #tpu.memory_space<vmem>>)
    } else {
    }
    %c0_i32_2 = arith.constant 0 : i32
    %7 = arith.cmpi eq, %arg1, %c0_i32_2 : i32
    %8 = arith.extui %7 : i1 to i32
    %c0_i32_3 = arith.constant 0 : i32
    %9 = arith.cmpi ne, %8, %c0_i32_3 : i32
    scf.if %9 {
      %c0_22 = arith.constant 0 : index
      %c0_23 = arith.constant 0 : index
      %61 = vector.load %arg10[%c0_22, %c0_23] : memref<512x128xf32, #tpu.memory_space<vmem>>, vector<512x128xf32>
      %c0_24 = arith.constant 0 : index
      %c0_25 = arith.constant 0 : index
      %c0_26 = arith.constant 0 : index
      %62 = vector.load %arg4[%c0_24, %c0_25, %c0_26] : memref<1x128x128xbf16, #tpu.memory_space<vmem>>, vector<1x128x128xbf16>
      %63 = vector.shape_cast %62 : vector<1x128x128xbf16> to vector<128x128xbf16>
      %64 = arith.truncf %61 : vector<512x128xf32> to vector<512x128xbf16>
      %cst_27 = arith.constant dense<0.000000e+00> : vector<512x128xf32>
      %65 = tpu.matmul %64, %63, %cst_27 {dimension_numbers = #tpu.dot_dimension_numbers<[1], [0], [0], [1], [0, 0, 1, 1], [], []>} : vector<512x128xbf16>, vector<128x128xbf16>, vector<512x128xf32> -> vector<512x128xf32>
      %66 = arith.truncf %65 : vector<512x128xf32> to vector<512x128xbf16>
      %c0_28 = arith.constant 0 : index
      %c0_29 = arith.constant 0 : index
      %67 = vector.load %arg11[%c0_28, %c0_29] : memref<512x128xbf16, #tpu.memory_space<vmem>>, vector<512x128xbf16>
      tpu.vector_store %arg11[%c0_28, %c0_29], %66 {strides = array<i32>} : memref<512x128xbf16, #tpu.memory_space<vmem>>, vector<512x128xbf16>,
    } else {
    }
    %10 = arith.index_cast %1 : i32 to index
    %c0 = arith.constant 0 : index
    %11 = vector.load %arg12[%10, %c0] : memref<512x512xbf16, #tpu.memory_space<vmem>>, vector<256x512xbf16>
    %c0_4 = arith.constant 0 : index
    %c0_5 = arith.constant 0 : index
    %12 = vector.load %arg11[%c0_4, %c0_5] : memref<512x128xbf16, #tpu.memory_space<vmem>>, vector<512x128xbf16>
    %cst = arith.constant dense<0.000000e+00> : vector<256x128xf32>
    %13 = tpu.matmul %11, %12, %cst {dimension_numbers = #tpu.dot_dimension_numbers<[1], [0], [0], [1], [0, 0, 1, 1], [], []>} : vector<256x512xbf16>, vector<512x128xbf16>, vector<256x128xf32> -> vector<256x128xf32>
    %14 = arith.index_cast %1 : i32 to index
    %c0_6 = arith.constant 0 : index
    %15 = vector.load %arg10[%14, %c0_6] : memref<512x128xf32, #tpu.memory_space<vmem>>, vector<256x128xf32>
    %c0_7 = arith.constant 0 : index
    %c0_8 = arith.constant 0 : index
    %16 = vector.load %arg5[%c0_7, %c0_8] : memref<128x384xbf16, #tpu.memory_space<vmem>>, vector<128x384xbf16>
    %17 = arith.truncf %13 : vector<256x128xf32> to vector<256x128xbf16>
    %cst_9 = arith.constant dense<0.000000e+00> : vector<256x384xf32>
    %18 = tpu.matmul %17, %16, %cst_9 {dimension_numbers = #tpu.dot_dimension_numbers<[1], [0], [0], [1], [0, 0, 1, 1], [], []>} : vector<256x128xbf16>, vector<128x384xbf16>, vector<256x384xf32> -> vector<256x384xf32>
    %c0_10 = arith.constant 0 : index
    %c0_11 = arith.constant 0 : index
    %19 = vector.load %arg7[%c0_10, %c0_11] : memref<1x384xf32, #tpu.memory_space<vmem>>, vector<1x384xf32>
    %20 = vector.broadcast %19 : vector<1x384xf32> to vector<256x384xf32>
    %21 = arith.addf %18, %20 : vector<256x384xf32>
    %c0_12 = arith.constant 0 : index
    %c0_13 = arith.constant 0 : index
    %22 = vector.load %arg6[%c0_12, %c0_13] : memref<128x384xbf16, #tpu.memory_space<vmem>>, vector<128x384xbf16>
    %23 = arith.truncf %15 : vector<256x128xf32> to vector<256x128xbf16>
    %cst_14 = arith.constant dense<0.000000e+00> : vector<256x384xf32>
    %24 = tpu.matmul %23, %22, %cst_14 {dimension_numbers = #tpu.dot_dimension_numbers<[1], [0], [0], [1], [0, 0, 1, 1], [], []>} : vector<256x128xbf16>, vector<128x384xbf16>, vector<256x384xf32> -> vector<256x384xf32>
    %c0_15 = arith.constant 0 : index
    %c0_16 = arith.constant 0 : index
    %25 = vector.load %arg8[%c0_15, %c0_16] : memref<1x384xf32, #tpu.memory_space<vmem>>, vector<1x384xf32>
    %26 = vector.broadcast %25 : vector<1x384xf32> to vector<256x384xf32>
    %27 = arith.addf %24, %26 : vector<256x384xf32>
    %28 = vector.extract_strided_slice %21 {offsets = [0, 0], sizes = [256, 128], strides = [1, 1]} : vector<256x384xf32> to vector<256x128xf32>
    %29 = vector.extract_strided_slice %27 {offsets = [0, 0], sizes = [256, 128], strides = [1, 1]} : vector<256x384xf32> to vector<256x128xf32>
    %30 = arith.addf %28, %29 : vector<256x128xf32>
    %31 = arith.negf %30 : vector<256x128xf32>
    %32 = math.exp %31 : vector<256x128xf32>
    %cst_17 = arith.constant 1.000000e+00 : f32
    %33 = vector.broadcast %cst_17 : f32 to vector<256x128xf32>
    %34 = arith.addf %33, %32 : vector<256x128xf32>
    %35 = arith.divf %33, %34 : vector<256x128xf32>
    %36 = vector.extract_strided_slice %21 {offsets = [0, 128], sizes = [256, 128], strides = [1, 1]} : vector<256x384xf32> to vector<256x128xf32>
    %37 = vector.extract_strided_slice %27 {offsets = [0, 128], sizes = [256, 128], strides = [1, 1]} : vector<256x384xf32> to vector<256x128xf32>
    %38 = arith.addf %36, %37 : vector<256x128xf32>
    %39 = arith.negf %38 : vector<256x128xf32>
    %40 = math.exp %39 : vector<256x128xf32>
    %cst_18 = arith.constant 1.000000e+00 : f32
    %41 = vector.broadcast %cst_18 : f32 to vector<256x128xf32>
    %42 = arith.addf %41, %40 : vector<256x128xf32>
    %43 = arith.divf %41, %42 : vector<256x128xf32>
    %44 = vector.extract_strided_slice %21 {offsets = [0, 256], sizes = [256, 128], strides = [1, 1]} : vector<256x384xf32> to vector<256x128xf32>
    %45 = vector.extract_strided_slice %27 {offsets = [0, 256], sizes = [256, 128], strides = [1, 1]} : vector<256x384xf32> to vector<256x128xf32>
    %46 = arith.mulf %35, %45 : vector<256x128xf32>
    %47 = arith.addf %44, %46 : vector<256x128xf32>
    %48 = math.tanh %47 : vector<256x128xf32>
    %cst_19 = arith.constant 1.000000e+00 : f32
    %49 = vector.broadcast %cst_19 : f32 to vector<256x128xf32>
    %50 = arith.subf %49, %43 : vector<256x128xf32>
    %51 = arith.mulf %50, %48 : vector<256x128xf32>
    %52 = arith.mulf %43, %15 : vector<256x128xf32>
    %53 = arith.addf %51, %52 : vector<256x128xf32>
    %54 = arith.index_cast %1 : i32 to index
    %c0_20 = arith.constant 0 : index
    %55 = vector.load %arg10[%54, %c0_20] : memref<512x128xf32, #tpu.memory_space<vmem>>, vector<256x128xf32>
    tpu.vector_store %arg10[%54, %c0_20], %53 {strides = array<i32>} : memref<512x128xf32, #tpu.memory_space<vmem>>, vector<256x128xf32>,
    %c2_i32 = arith.constant 2 : i32
    %56 = arith.cmpi eq, %arg0, %c2_i32 : i32
    %c1_i32 = arith.constant 1 : i32
    %57 = arith.cmpi eq, %arg1, %c1_i32 : i32
    %58 = arith.andi %56, %57 : i1
    %59 = arith.extui %58 : i1 to i32
    %c0_i32_21 = arith.constant 0 : i32
    %60 = arith.cmpi ne, %59, %c0_i32_21 : i32
    scf.if %60 {
      %c0_i32_22 = arith.constant 0 : i32
      %61 = tpu.memref_slice %arg13[%c0_i32_22] : memref<2x!tpu.dma_semaphore, #tpu.memory_space<semaphore_mem>> -> memref<1x!tpu.dma_semaphore, #tpu.memory_space<semaphore_mem>>
      %62 = tpu.memref_squeeze %61 : memref<1x!tpu.dma_semaphore, #tpu.memory_space<semaphore_mem>> -> memref<!tpu.dma_semaphore, #tpu.memory_space<semaphore_mem>>
      tpu.enqueue_dma source(%arg10 : memref<512x128xf32, #tpu.memory_space<vmem>>) target(%arg9 : memref<512x128xf32, #tpu.memory_space<any>>) target_semaphore(%62 : memref<!tpu.dma_semaphore, #tpu.memory_space<semaphore_mem>>)
      %c0_i32_23 = arith.constant 0 : i32
      %63 = tpu.memref_slice %arg13[%c0_i32_23] : memref<2x!tpu.dma_semaphore, #tpu.memory_space<semaphore_mem>> -> memref<1x!tpu.dma_semaphore, #tpu.memory_space<semaphore_mem>>
      %64 = tpu.memref_squeeze %63 : memref<1x!tpu.dma_semaphore, #tpu.memory_space<semaphore_mem>> -> memref<!tpu.dma_semaphore, #tpu.memory_space<semaphore_mem>>
      tpu.wait_dma2 semaphore(%64 : memref<!tpu.dma_semaphore, #tpu.memory_space<semaphore_mem>>) src(%arg10 : memref<512x128xf32, #tpu.memory_space<vmem>>) dst(%arg9 : memref<512x128xf32, #tpu.memory_space<any>>)
    } else {
    }
    return
  }
  func.func @transform_2(%arg0: i32, %arg1: i32) -> (i32, i32, i32) {
    %c0_i32 = arith.constant 0 : i32
    %c0_i32_0 = arith.constant 0 : i32
    %c0_i32_1 = arith.constant 0 : i32
    return %arg0, %c0_i32, %c0_i32_0 : i32, i32, i32
  }
  func.func @transform_3(%arg0: i32, %arg1: i32) -> (i32, i32) {
    %c0_i32 = arith.constant 0 : i32
    %c0_i32_0 = arith.constant 0 : i32
    %c0_i32_1 = arith.constant 0 : i32
    return %c0_i32, %c0_i32_0 : i32, i32
  }
  func.func @transform_4(%arg0: i32, %arg1: i32) -> (i32, i32) {
    %c0_i32 = arith.constant 0 : i32
    %c0_i32_0 = arith.constant 0 : i32
    %c0_i32_1 = arith.constant 0 : i32
    return %c0_i32, %c0_i32_0 : i32, i32
  }
  func.func @transform_5(%arg0: i32, %arg1: i32) -> (i32, i32) {
    %c0_i32 = arith.constant 0 : i32
    %c0_i32_0 = arith.constant 0 : i32
    %c0_i32_1 = arith.constant 0 : i32
    return %c0_i32, %c0_i32_0 : i32, i32
  }
  func.func @transform_6(%arg0: i32, %arg1: i32) -> (i32, i32) {
    %c0_i32 = arith.constant 0 : i32
    %c0_i32_0 = arith.constant 0 : i32
    %c0_i32_1 = arith.constant 0 : i32
    return %c0_i32, %c0_i32_0 : i32, i32
  }
}

</mosaic_0001>

<llo_original>
// kernel: tpu_custom_call.1
$region0: #{tpu_custom_call.1}
  #allocation0 [shape = 'u32[]', space=smem, size = 0x4, offset = 0x4, fixed_abs, tag = 'smem constant byte address 0x4 - core index']
  #allocation1 [shape = 'u32[144,128]{1,0:T(1,128)}', space=vmem, size = 0x12000, scoped, tag = 'internal scratch']
  #allocation2 [shape = 'f32[512,128]{1,0:T(8,128)}', space=vmem, size = 0x40000, scoped, tag = 'scratch operand']
  #allocation3 [shape = 'bf16[512,128]{1,0:T(16,128)(2,1)}', space=vmem, size = 0x20000, scoped, tag = 'scratch operand']
  #allocation4 [shape = 'bf16[512,512]{1,0:T(16,128)(2,1)}', space=vmem, size = 0x80000, scoped, tag = 'scratch operand']
  #allocation5 [shape = 's32[2]{0}', space=sflag, size = 0x8, scoped, tag = 'scratch operand']
  #allocation11 [shape = 's32[]', space=sflag, size = 0x4, offset = 0, fixed_abs, tag = 'sflag constant byte address 0x0 - dummy sync flag']
  #allocation12 [shape = 's32[]', space=sflag, size = 0x4, offset = 0, fixed_abs, tag = 'sflag constant byte address 0x0 - dummy sync flag']
  #allocation13 [shape = 'u32[]', space=smem, size = 0x4, offset = 0x44, fixed_abs, tag = 'smem constant byte address 0x44 - assertion arg 0']
  #allocation14 [shape = 'u32[]', space=smem, size = 0x4, offset = 0x48, fixed_abs, tag = 'smem constant byte address 0x48 - assertion arg 1']
  #allocation15 [shape = 's32[]', space=sflag, size = 0x4, offset = 0, fixed_abs, tag = 'sflag constant byte address 0x0 - dummy sync flag']
  #allocation17 [shape = 's32[]', space=sflag, size = 0x4, offset = 0, fixed_abs, tag = 'sflag constant byte address 0x0 - dummy sync flag']
  #allocation18 [shape = 's32[]', space=sflag, size = 0x4, offset = 0, fixed_abs, tag = 'sflag constant byte address 0x0 - dummy sync flag']
  %s0 = inlined_call_operand.hbm [shape: f32[512,128], index: 0, kind: input, shape index: {}]
  %s1 = inlined_call_operand.hbm [shape: bf16[512,512], index: 1, kind: input, shape index: {}]
  %s2 = inlined_call_operand.hbm [shape: bf16[3,128,128], index: 2, kind: input, shape index: {}]
  %s3 = inlined_call_operand.hbm [shape: bf16[128,384], index: 3, kind: input, shape index: {}]
  %s4 = inlined_call_operand.hbm [shape: bf16[128,384], index: 4, kind: input, shape index: {}]
  %s5 = inlined_call_operand.vmem [shape: f32[1,384], index: 5, kind: input, shape index: {}]
  %s6 = inlined_call_operand.vmem [shape: f32[1,384], index: 6, kind: input, shape index: {}]
  %s7 = inlined_call_operand.hbm [shape: f32[512,128], index: 7, kind: output, shape index: {}]
  %s8 = sld [smem:[#allocation0]]
  $region73: #{tpu_custom_call.1} parent=0
    _
  %s10 = ssub.s32 1, %s8
  %s11 = scalar_select 0, %s10, %s8
  $region1: #{tpu_custom_call.1} parent=0
    #allocation6 [shape = 'u8[65536]{0}', space=vmem, size = 0x10000, scoped, tag = 'input window, operand 2']
    #allocation7 [shape = 's32[2]{0}', space=sflag, size = 0x8, scoped, tag = 'scoped memory for tpu_custom_call.1']
    #allocation8 [shape = 'u8[98304]{0}', space=vmem, size = 0x18000, scoped, tag = 'input window, operand 3, single buffered']
    #allocation9 [shape = 's32[1]{0}', space=sflag, size = 0x4, scoped, tag = 'scoped memory for tpu_custom_call.1']
    #allocation10 [shape = 'u8[98304]{0}', space=vmem, size = 0x18000, scoped, tag = 'input window, operand 4, single buffered']
    %12 = vsyncpa [#allocation7], 0
    %s13 = scalar_lea.sflag [#allocation7], 1
    %14 = vsyncpa %s13, 0
    %15 = vsyncpa [#allocation9], 0
    loop: start=0, step=1, limit=7
    $region2: #{tpu_custom_call.1} parent=1 // loop_pre_header
      _
    $region3: #{tpu_custom_call.1} parent=1 // loop_header
      %s17 = sphi 0, %s21
      %p18 = scmp.ge.s32.totalorder %s17, 7
      %s23 = sphi 0, %s33
      %s24 = sphi 0, %s29
      %s25 = sphi 0, %s23
      %s26 = sphi 0, %s24
      %s36 = sphi 0, %s38
      %s39 = sphi 0, %s36
      %s49 = sphi 0, %s39
      %s53 = sphi 0, %s53
      %s55 = sphi 0, %s53
      %s63 = sphi 0, %s55
      %s67 = sphi 0, %s67
      %s69 = sphi 0, %s67
      %s77 = sphi 0, %s69
      %s81 = sphi 0, %s81
      %s83 = sphi 0, %s81
      %s91 = sphi 0, %s83
      %s95 = sphi 0, %s95
      %s97 = sphi 0, %s95
      %s105 = sphi 0, %s97
    $region4: #{tpu_custom_call.1} parent=1 // loop_header_branch
      %20 = sbr.rel (%p18) target = $region8
    $region5: #{tpu_custom_call.1} parent=1 // loop_body
      %s22 = ssub.s32 %s17, 1
      %s27 = sadd.s32 1, %s24
      %p28 = scmp.ge.s32.totalorder %s27, 2
      %s29 = scalar_select %p28, 0, %s27
      %s30 = sadd.s32 1, %s23
      %s31 = scalar_select %p28, %s30, %s23
      %p32 = scmp.ge.s32.totalorder %s31, 3
      %s33 = scalar_select %p32, 0, %s31
      %s34 = ssub.s32 %s23, %s33
      %p35 = scmp.eq.s32.totalorder %s34, 0
      %s37 = sadd.s32 %s36, 1
      %s38 = scalar_select %p35, %s36, %s37
      %p40 = pneg %p35
      %p41 = scmp.eq.s32.totalorder %s17, 5
      %p42 = por %p40, %p41
      %p43 = scmp.ne.s32.totalorder %s36, %s39
      %p44 = scmp.eq.s32.totalorder %s17, 0
      %p45 = por %p43, %p44
      %p46 = scmp.ne.s32.totalorder %s36, %s39
      %p47 = scmp.eq.s32.totalorder %s22, 5
      %p48 = por %p46, %p47
      %p50 = scmp.ne.s32.totalorder %s39, %s49
      %p51 = scmp.eq.s32.totalorder %s22, 0
      %p52 = por %p50, %p51
      %s54 = sadd.s32 %s53, 1
      %p56 = scmp.eq.s32.totalorder %s17, 5
      %p57 = scmp.ne.s32.totalorder %s53, %s55
      %p58 = scmp.eq.s32.totalorder %s17, 0
      %p59 = por %p57, %p58
      %p60 = scmp.ne.s32.totalorder %s53, %s55
      %p61 = scmp.eq.s32.totalorder %s22, 5
      %p62 = por %p60, %p61
      %p64 = scmp.ne.s32.totalorder %s55, %s63
      %p65 = scmp.eq.s32.totalorder %s22, 0
      %p66 = por %p64, %p65
      %s68 = sadd.s32 %s67, 1
      %p70 = scmp.eq.s32.totalorder %s17, 5
      %p71 = scmp.ne.s32.totalorder %s67, %s69
      %p72 = scmp.eq.s32.totalorder %s17, 0
      %p73 = por %p71, %p72
      %p74 = scmp.ne.s32.totalorder %s67, %s69
      %p75 = scmp.eq.s32.totalorder %s22, 5
      %p76 = por %p74, %p75
      %p78 = scmp.ne.s32.totalorder %s69, %s77
      %p79 = scmp.eq.s32.totalorder %s22, 0
      %p80 = por %p78, %p79
      %s82 = sadd.s32 %s81, 1
      %p84 = scmp.eq.s32.totalorder %s17, 5
      %p85 = scmp.ne.s32.totalorder %s81, %s83
      %p86 = scmp.eq.s32.totalorder %s17, 0
      %p87 = por %p85, %p86
      %p88 = scmp.ne.s32.totalorder %s81, %s83
      %p89 = scmp.eq.s32.totalorder %s22, 5
      %p90 = por %p88, %p89
      %p92 = scmp.ne.s32.totalorder %s83, %s91
      %p93 = scmp.eq.s32.totalorder %s22, 0
      %p94 = por %p92, %p93
      %s96 = sadd.s32 %s95, 1
      %p98 = scmp.eq.s32.totalorder %s17, 5
      %p99 = scmp.ne.s32.totalorder %s95, %s97
      %p100 = scmp.eq.s32.totalorder %s17, 0
      %p101 = por %p99, %p100
      %p102 = scmp.ne.s32.totalorder %s95, %s97
      %p103 = scmp.eq.s32.totalorder %s22, 5
      %p104 = por %p102, %p103
      %p106 = scmp.ne.s32.totalorder %s97, %s105
      %p107 = scmp.eq.s32.totalorder %s22, 0
      %p108 = por %p106, %p107
      %p109 = scmp.le.s32.totalorder 1, %s17
      // Predicated region
      $region9: #{tpu_custom_call.1} parent=5 // pred_check
        %p110 = pneg %p109
      $region10: #{tpu_custom_call.1} parent=5 // pred_check_branch
        %112 = sbr.rel (%p110) target = $region12
      $region11: #{tpu_custom_call.1} parent=5 // pred_region
        %s113 = ssub.s32 %s17, 1
        // Predicated region
        $region13: #{tpu_custom_call.1} parent=11 // pred_check
          %p114 = pneg %p66
        $region14: #{tpu_custom_call.1} parent=11 // pred_check_branch
          %116 = sbr.rel (%p114) target = $region16
        $region15: #{tpu_custom_call.1} parent=11 // pred_region
          %s118 = ssub.s32 3072, 3072
          %119 = vsyncadd [#allocation9], %s118
          %s120 = sshll.u32 [#allocation8], 4
          %s121 = int_to_ptr.vmem [resolvable:$true] %s120
          %126 = dma.hbm_to_vmem [thread:$0]  %s3, 3072, %s121, [#allocation9], 192, 192, 12
        $region16: #{tpu_custom_call.1} parent=11 // pred_fallthru
          _
        // Predicated region
        $region17: #{tpu_custom_call.1} parent=11 // pred_check
          %p127 = pneg %p80
        $region18: #{tpu_custom_call.1} parent=11 // pred_check_branch
          %129 = sbr.rel (%p127) target = $region20
        $region19: #{tpu_custom_call.1} parent=11 // pred_region
          %s131 = ssub.s32 3072, 3072
          %132 = vsyncadd [#allocation9], %s131
          %s133 = sshll.u32 [#allocation10], 4
          %s134 = int_to_ptr.vmem [resolvable:$true] %s133
          %139 = dma.hbm_to_vmem [thread:$0]  %s4, 3072, %s134, [#allocation9], 192, 192, 12
        $region20: #{tpu_custom_call.1} parent=11 // pred_fallthru
          _
        // Predicated region
        $region21: #{tpu_custom_call.1} parent=11 // pred_check
          %p140 = pneg %p94
        $region22: #{tpu_custom_call.1} parent=11 // pred_check_branch
          %142 = sbr.rel (%p140) target = $region24
        $region23: #{tpu_custom_call.1} parent=11 // pred_region
          _
        $region24: #{tpu_custom_call.1} parent=11 // pred_fallthru
          _
        // Predicated region
        $region25: #{tpu_custom_call.1} parent=11 // pred_check
          %p143 = pneg %p108
        $region26: #{tpu_custom_call.1} parent=11 // pred_check_branch
          %145 = sbr.rel (%p143) target = $region28
        $region27: #{tpu_custom_call.1} parent=11 // pred_region
          _
        $region28: #{tpu_custom_call.1} parent=11 // pred_fallthru
          _
      $region12: #{tpu_custom_call.1} parent=5 // pred_fallthru
        _
      %p146 = scmp.lt.s32.totalorder %s17, 6
      // Predicated region
      $region29: #{tpu_custom_call.1} parent=5 // pred_check
        %p147 = pneg %p146
      $region30: #{tpu_custom_call.1} parent=5 // pred_check_branch
        %149 = sbr.rel (%p147) target = $region32
      $region31: #{tpu_custom_call.1} parent=5 // pred_region
        // Predicated region
        $region33: #{tpu_custom_call.1} parent=31 // pred_check
          %p150 = pneg %p45
        $region34: #{tpu_custom_call.1} parent=31 // pred_check_branch
          %152 = sbr.rel (%p150) target = $region36
        $region35: #{tpu_custom_call.1} parent=31 // pred_region
          %s153 = sand.u32 %s36, 1
          %s154 = scalar_lea.sflag [#allocation7], %s153
          %s155 = sand.u32 %s36, 1
          %s156 = smul.addr %s155, 64
          %s157 = scalar_lea.vmem [#allocation6], %s156
          %s159 = ssub.s32 1024, 1024
          %160 = vsyncadd %s154, %s159
          %s161 = smul.addr %s23, 16
          %s162 = smul.addr %s161, 64
          %s163 = scalar_lea.hbm %s2, %s162
          %s164 = sshll.u32 %s157, 4
          %s165 = int_to_ptr.vmem [resolvable:$true] %s164
          %170 = dma.hbm_to_vmem [thread:$0]  %s163, 1024, %s165, %s154, 64, 64, 4
        $region36: #{tpu_custom_call.1} parent=31 // pred_fallthru
          _
      $region32: #{tpu_custom_call.1} parent=5 // pred_fallthru
        _
      %p171 = scmp.le.s32.totalorder 1, %s17
      // Predicated region
      $region37: #{tpu_custom_call.1} parent=5 // pred_check
        %p172 = pneg %p171
      $region38: #{tpu_custom_call.1} parent=5 // pred_check_branch
        %174 = sbr.rel (%p172) target = $region40
      $region39: #{tpu_custom_call.1} parent=5 // pred_region
        %s175 = ssub.s32 %s17, 1
        %s176 = sand.u32 %s39, 1
        %s177 = scalar_lea.sflag [#allocation7], %s176
        %s178 = sand.u32 %s39, 1
        %s179 = smul.addr %s178, 64
        %s180 = scalar_lea.vmem [#allocation6], %s179
        // Predicated region
        $region41: #{tpu_custom_call.1} parent=39 // pred_check
          %p181 = pneg %p52
        $region42: #{tpu_custom_call.1} parent=39 // pred_check_branch
          %183 = sbr.rel (%p181) target = $region44
        $region43: #{tpu_custom_call.1} parent=39 // pred_region
          %184 = dma.done %s177, 1024
        $region44: #{tpu_custom_call.1} parent=39 // pred_fallthru
          _
        // Predicated region
        $region45: #{tpu_custom_call.1} parent=39 // pred_check
          %p185 = pneg %p66
        $region46: #{tpu_custom_call.1} parent=39 // pred_check_branch
          %187 = sbr.rel (%p185) target = $region48
        $region47: #{tpu_custom_call.1} parent=39 // pred_region
          %188 = dma.done [#allocation9], 3072
        $region48: #{tpu_custom_call.1} parent=39 // pred_fallthru
          _
        // Predicated region
        $region49: #{tpu_custom_call.1} parent=39 // pred_check
          %p189 = pneg %p80
        $region50: #{tpu_custom_call.1} parent=39 // pred_check_branch
          %191 = sbr.rel (%p189) target = $region52
        $region51: #{tpu_custom_call.1} parent=39 // pred_region
          %192 = dma.done [#allocation9], 3072
        $region52: #{tpu_custom_call.1} parent=39 // pred_fallthru
          _
        %s193 = sand.u32 %s39, 1
        %s194 = scalar_lea.sflag [#allocation7], %s193
        %s195 = sand.u32 %s39, 1
        %s196 = smul.addr %s195, 64
        %s197 = scalar_lea.vmem [#allocation6], %s196
        %p198 = pneg %p52
        %p199 = pneg %p48
        %p200 = pneg %p66
        %p201 = pneg %p62
        %p202 = pneg %p80
        %p203 = pneg %p76
        %p204 = pneg %p94
        %p205 = pneg %p90
        %p206 = pneg %p108
        %p207 = pneg %p104
        %s209 = smul.u32 %s26, 256
        %p210 = scmp.eq.s32.totalorder %s25, 0
        %p211 = scmp.eq.s32.totalorder %s26, 0
        %p212 = pnand %p210, %p211
        %p213 = pneg %p212
        // Predicated region
        $region53: #{tpu_custom_call.1} parent=39 // pred_check
          _
        $region54: #{tpu_custom_call.1} parent=39 // pred_check_branch
          %215 = sbr.rel (%p212) target = $region56
        $region55: #{tpu_custom_call.1} parent=39 // pred_region
          #allocation16 [shape = 'u32[9]{0}', space=smem, size = 0x24, scoped, tag = 'DMA stride descriptor']
          // Predicated region
          $region57: #{tpu_custom_call.1} parent=55 // pred_check
            _
          $region58: #{tpu_custom_call.1} parent=55 // pred_check_branch
            %217 = sbr.rel target = $region60
          $region59: #{tpu_custom_call.1} parent=55 // pred_region
            %218 = sst [smem:[#allocation13]] [#allocation12]
            %219 = sst [smem:[#allocation14]] [#allocation11]
          $region60: #{tpu_custom_call.1} parent=55 // pred_fallthru
            _
          %221 = shalt.err (0)
          %s223 = sshll.u32 [#allocation2], 4
          %s224 = int_to_ptr.vmem [resolvable:$true] %s223
          %226 = dma.hbm_to_vmem [thread:$0]  %s0, 8192, %s224, [#allocation5]
          %s227 = scalar_lea.sflag [#allocation5], 1
          %s229 = sshll.u32 1, 14
          %s230 = sxor.u32 4294967295, %s229
          %s232 = sld [smem:[#allocation0]]
          %s233 = sadd.s32 2, %s232
          %s235 = sshll.u32 7, 26
          %s236 = sxor.u32 4294967295, %s235
          %s237 = sand.u32 0, %s236
          %s238 = sshll.u32 %s233, 26
          %s239 = sor.u32 %s237, %s238
          %s240 = sshll.u32 [#allocation4], 4
          %s241 = int_to_ptr.vmem [resolvable:$true] %s240
          %244 = sst [smem:[#allocation16]] 512
          %s245 = scalar_lea.smem [#allocation16], 1
          %246 = sst [smem:[%s245]] 512
          %s247 = scalar_lea.smem [#allocation16], 2
          %248 = sst [smem:[%s247]] 4
          %s249 = scalar_lea.smem [#allocation16], 3
          %250 = sst [smem:[%s249]] 64
          %s251 = scalar_lea.smem [#allocation16], 4
          %252 = sst [smem:[%s251]] 128
          %s253 = scalar_lea.smem [#allocation16], 5
          %254 = sst [smem:[%s253]] 2
          %s255 = scalar_lea.smem [#allocation16], 6
          %256 = sst [smem:[%s255]] 256
          %s257 = scalar_lea.smem [#allocation16], 7
          %258 = sst [smem:[%s257]] 64
          %s259 = scalar_lea.smem [#allocation16], 8
          %260 = sst [smem:[%s259]] 4
          %262 = dma.general %s1, 16384, %s241, %s227, [#allocation15], [#allocation16], %s239, 0
          %s263 = smul.u32 512, 1
          %s264 = sshll.u32 %s263, 4
          %265 = dma.done [#allocation5], %s264
          %s266 = smul.u32 4, 64
          %s267 = smul.u32 %s266, 4
          %s268 = sshll.u32 %s267, 4
          %269 = dma.done %s227, %s268
        $region56: #{tpu_custom_call.1} parent=39 // pred_fallthru
          _
        // Predicated region
        $region61: #{tpu_custom_call.1} parent=39 // pred_check
          %p270 = pneg %p211
        $region62: #{tpu_custom_call.1} parent=39 // pred_check_branch
          %272 = sbr.rel (%p270) target = $region64
        $region63: #{tpu_custom_call.1} parent=39 // pred_region
          %v273 = vld [vmem:[#allocation2] sm:$0xff]
          %v274 = vld [vmem:[#allocation2 + $0x8] sm:$0xff]
          %v275 = vld [vmem:[#allocation2 + $0x10] sm:$0xff]
          %v276 = vld [vmem:[#allocation2 + $0x18] sm:$0xff]
          %v277 = vld [vmem:[#allocation2 + $0x20] sm:$0xff]
          %v278 = vld [vmem:[#allocation2 + $0x28] sm:$0xff]
          %v279 = vld [vmem:[#allocation2 + $0x30] sm:$0xff]
          %v280 = vld [vmem:[#allocation2 + $0x38] sm:$0xff]
          %v281 = vld [vmem:[#allocation2 + $0x40] sm:$0xff]
          %v282 = vld [vmem:[#allocation2 + $0x48] sm:$0xff]
          %v283 = vld [vmem:[#allocation2 + $0x50] sm:$0xff]
          %v284 = vld [vmem:[#allocation2 + $0x58] sm:$0xff]
          %v285 = vld [vmem:[#allocation2 + $0x60] sm:$0xff]
          %v286 = vld [vmem:[#allocation2 + $0x68] sm:$0xff]
          %v287 = vld [vmem:[#allocation2 + $0x70] sm:$0xff]
          %v288 = vld [vmem:[#allocation2 + $0x78] sm:$0xff]
          %v289 = vld [vmem:[#allocation2 + $0x80] sm:$0xff]
          %v290 = vld [vmem:[#allocation2 + $0x88] sm:$0xff]
          %v291 = vld [vmem:[#allocation2 + $0x90] sm:$0xff]
          %v292 = vld [vmem:[#allocation2 + $0x98] sm:$0xff]
          %v293 = vld [vmem:[#allocation2 + $0xa0] sm:$0xff]
          %v294 = vld [vmem:[#allocation2 + $0xa8] sm:$0xff]
          %v295 = vld [vmem:[#allocation2 + $0xb0] sm:$0xff]
          %v296 = vld [vmem:[#allocation2 + $0xb8] sm:$0xff]
          %v297 = vld [vmem:[#allocation2 + $0xc0] sm:$0xff]
          %v298 = vld [vmem:[#allocation2 + $0xc8] sm:$0xff]
          %v299 = vld [vmem:[#allocation2 + $0xd0] sm:$0xff]
          %v300 = vld [vmem:[#allocation2 + $0xd8] sm:$0xff]
          %v301 = vld [vmem:[#allocation2 + $0xe0] sm:$0xff]
          %v302 = vld [vmem:[#allocation2 + $0xe8] sm:$0xff]
          %v303 = vld [vmem:[#allocation2 + $0xf0] sm:$0xff]
          %v304 = vld [vmem:[#allocation2 + $0xf8] sm:$0xff]
          %v305 = vld [vmem:[#allocation2 + $0x100] sm:$0xff]
          %v306 = vld [vmem:[#allocation2 + $0x108] sm:$0xff]
          %v307 = vld [vmem:[#allocation2 + $0x110] sm:$0xff]
          %v308 = vld [vmem:[#allocation2 + $0x118] sm:$0xff]
          %v309 = vld [vmem:[#allocation2 + $0x120] sm:$0xff]
          %v310 = vld [vmem:[#allocation2 + $0x128] sm:$0xff]
          %v311 = vld [vmem:[#allocation2 + $0x130] sm:$0xff]
          %v312 = vld [vmem:[#allocation2 + $0x138] sm:$0xff]
          %v313 = vld [vmem:[#allocation2 + $0x140] sm:$0xff]
          %v314 = vld [vmem:[#allocation2 + $0x148] sm:$0xff]
          %v315 = vld [vmem:[#allocation2 + $0x150] sm:$0xff]
          %v316 = vld [vmem:[#allocation2 + $0x158] sm:$0xff]
          %v317 = vld [vmem:[#allocation2 + $0x160] sm:$0xff]
          %v318 = vld [vmem:[#allocation2 + $0x168] sm:$0xff]
          %v319 = vld [vmem:[#allocation2 + $0x170] sm:$0xff]
          %v320 = vld [vmem:[#allocation2 + $0x178] sm:$0xff]
          %v321 = vld [vmem:[#allocation2 + $0x180] sm:$0xff]
          %v322 = vld [vmem:[#allocation2 + $0x188] sm:$0xff]
          %v323 = vld [vmem:[#allocation2 + $0x190] sm:$0xff]
          %v324 = vld [vmem:[#allocation2 + $0x198] sm:$0xff]
          %v325 = vld [vmem:[#allocation2 + $0x1a0] sm:$0xff]
          %v326 = vld [vmem:[#allocation2 + $0x1a8] sm:$0xff]
          %v327 = vld [vmem:[#allocation2 + $0x1b0] sm:$0xff]
          %v328 = vld [vmem:[#allocation2 + $0x1b8] sm:$0xff]
          %v329 = vld [vmem:[#allocation2 + $0x1c0] sm:$0xff]
          %v330 = vld [vmem:[#allocation2 + $0x1c8] sm:$0xff]
          %v331 = vld [vmem:[#allocation2 + $0x1d0] sm:$0xff]
          %v332 = vld [vmem:[#allocation2 + $0x1d8] sm:$0xff]
          %v333 = vld [vmem:[#allocation2 + $0x1e0] sm:$0xff]
          %v334 = vld [vmem:[#allocation2 + $0x1e8] sm:$0xff]
          %v335 = vld [vmem:[#allocation2 + $0x1f0] sm:$0xff]
          %v336 = vld [vmem:[#allocation2 + $0x1f8] sm:$0xff]
          %v337 = vld [vmem:[%s180] sm:$0xf]
          %v338 = vld [vmem:[%s180 + $0x4] sm:$0xf]
          %v339 = vld [vmem:[%s180 + $0x8] sm:$0xf]
          %v340 = vld [vmem:[%s180 + $0xc] sm:$0xf]
          %v341 = vld [vmem:[%s180 + $0x10] sm:$0xf]
          %v342 = vld [vmem:[%s180 + $0x14] sm:$0xf]
          %v343 = vld [vmem:[%s180 + $0x18] sm:$0xf]
          %v344 = vld [vmem:[%s180 + $0x1c] sm:$0xf]
          %v345 = vld [vmem:[%s180 + $0x20] sm:$0xf]
          %v346 = vld [vmem:[%s180 + $0x24] sm:$0xf]
          %v347 = vld [vmem:[%s180 + $0x28] sm:$0xf]
          %v348 = vld [vmem:[%s180 + $0x2c] sm:$0xf]
          %v349 = vld [vmem:[%s180 + $0x30] sm:$0xf]
          %v350 = vld [vmem:[%s180 + $0x34] sm:$0xf]
          %v351 = vld [vmem:[%s180 + $0x38] sm:$0xf]
          %v352 = vld [vmem:[%s180 + $0x3c] sm:$0xf]
          %v353 = vpack.c.bf16 %v274, %v273
          %v354 = vpack.c.bf16 %v276, %v275
          %v355 = vpack.c.bf16 %v278, %v277
          %v356 = vpack.c.bf16 %v280, %v279
          %v357 = vpack.c.bf16 %v282, %v281
          %v358 = vpack.c.bf16 %v284, %v283
          %v359 = vpack.c.bf16 %v286, %v285
          %v360 = vpack.c.bf16 %v288, %v287
          %v361 = vpack.c.bf16 %v290, %v289
          %v362 = vpack.c.bf16 %v292, %v291
          %v363 = vpack.c.bf16 %v294, %v293
          %v364 = vpack.c.bf16 %v296, %v295
          %v365 = vpack.c.bf16 %v298, %v297
          %v366 = vpack.c.bf16 %v300, %v299
          %v367 = vpack.c.bf16 %v302, %v301
          %v368 = vpack.c.bf16 %v304, %v303
          %v369 = vpack.c.bf16 %v306, %v305
          %v370 = vpack.c.bf16 %v308, %v307
          %v371 = vpack.c.bf16 %v310, %v309
          %v372 = vpack.c.bf16 %v312, %v311
          %v373 = vpack.c.bf16 %v314, %v313
          %v374 = vpack.c.bf16 %v316, %v315
          %v375 = vpack.c.bf16 %v318, %v317
          %v376 = vpack.c.bf16 %v320, %v319
          %v377 = vpack.c.bf16 %v322, %v321
          %v378 = vpack.c.bf16 %v324, %v323
          %v379 = vpack.c.bf16 %v326, %v325
          %v380 = vpack.c.bf16 %v328, %v327
          %v381 = vpack.c.bf16 %v330, %v329
          %v382 = vpack.c.bf16 %v332, %v331
          %v383 = vpack.c.bf16 %v334, %v333
          %v384 = vpack.c.bf16 %v336, %v335
          %v401 = vunpack.c.l.b16 %v337
          %v402 = vunpack.c.l.b16 %v338
          %v403 = vunpack.c.l.b16 %v339
          %v404 = vunpack.c.l.b16 %v340
          %v405 = vunpack.c.l.b16 %v341
          %v406 = vunpack.c.l.b16 %v342
          %v407 = vunpack.c.l.b16 %v343
          %v408 = vunpack.c.l.b16 %v344
          %v409 = vunpack.c.l.b16 %v345
          %v410 = vunpack.c.l.b16 %v346
          %v411 = vunpack.c.l.b16 %v347
          %v412 = vunpack.c.l.b16 %v348
          %v413 = vunpack.c.l.b16 %v349
          %v414 = vunpack.c.l.b16 %v350
          %v415 = vunpack.c.l.b16 %v351
          %v416 = vunpack.c.l.b16 %v352
          %v417 = vpack.c.b16 %v402, %v401
          %v418 = vpack.c.b16 %v404, %v403
          %v419 = vpack.c.b16 %v406, %v405
          %v420 = vpack.c.b16 %v408, %v407
          %v421 = vpack.c.b16 %v410, %v409
          %v422 = vpack.c.b16 %v412, %v411
          %v423 = vpack.c.b16 %v414, %v413
          %v424 = vpack.c.b16 %v416, %v415
          %433 = vmatprep.subr.bf16.mxu0 0
          %434 = vmatpush1.bf16.msra.mxu0 %v417
          %435 = vmatprep.subr.bf16.mxu0 0
          %436 = vmatpush1.bf16.msra.mxu0 %v418
          %437 = vmatprep.subr.bf16.mxu0 0
          %438 = vmatpush1.bf16.msra.mxu0 %v419
          %439 = vmatprep.subr.bf16.mxu0 0
          %440 = vmatpush1.bf16.msra.mxu0 %v420
          %441 = vmatprep.subr.bf16.mxu0 0
          %442 = vmatpush1.bf16.msra.mxu0 %v421
          %443 = vmatprep.subr.bf16.mxu0 0
          %444 = vmatpush1.bf16.msra.mxu0 %v422
          %445 = vmatprep.subr.bf16.mxu0 0
          %446 = vmatpush1.bf16.msra.mxu0 %v423
          %447 = vmatprep.subr.bf16.mxu0 0
          %448 = vmatpush1.bf16.msra.mxu0 %v424
          %449 = vmatprep.subr.bf16.mxu0 0
          %450 = vmatpush1.bf16.msra.mxu0 0
          %451 = vmatprep.subr.bf16.mxu0 0
          %452 = vmatpush1.bf16.msra.mxu0 0
          %453 = vmatprep.subr.bf16.mxu0 0
          %454 = vmatpush1.bf16.msra.mxu0 0
          %455 = vmatprep.subr.bf16.mxu0 0
          %456 = vmatpush1.bf16.msra.mxu0 0
          %457 = vmatprep.subr.bf16.mxu0 0
          %458 = vmatpush1.bf16.msra.mxu0 0
          %459 = vmatprep.subr.bf16.mxu0 0
          %460 = vmatpush1.bf16.msra.mxu0 0
          %461 = vmatprep.subr.bf16.mxu0 0
          %462 = vmatpush1.bf16.msra.mxu0 0
          %463 = vmatprep.subr.bf16.mxu0 0
          %464 = vmatpush1.bf16.msra.mxu0 0
          %465 = vmatprep.mubr.bf16.mxu0 0
          %466 = vmatmul.mubr.bf16.gmra.mrb[0].mxu0 %v353
          %v467 = vpop.f32.mrb[0].mxu0
          %v468 = vadd.f32 0.0, %v467
          %v469 = vpop.f32.mrb[0].mxu0
          %v470 = vpop.f32.mrb[0].mxu0
          %v471 = vadd.f32 0.0, %v470
          %v472 = vpop.f32.mrb[0].mxu0
          %473 = vmatprep.mubr.bf16.mxu0 0
          %474 = vmatmul.mubr.bf16.gmra.mrb[0].mxu0 %v354
          %v475 = vpop.f32.mrb[0].mxu0
          %v476 = vadd.f32 0.0, %v475
          %v477 = vpop.f32.mrb[0].mxu0
          %v478 = vpop.f32.mrb[0].mxu0
          %v479 = vadd.f32 0.0, %v478
          %v480 = vpop.f32.mrb[0].mxu0
          %481 = vmatprep.mubr.bf16.mxu0 0
          %482 = vmatmul.mubr.bf16.gmra.mrb[0].mxu0 %v355
          %v483 = vpop.f32.mrb[0].mxu0
          %v484 = vadd.f32 0.0, %v483
          %v485 = vpop.f32.mrb[0].mxu0
          %v486 = vpop.f32.mrb[0].mxu0
          %v487 = vadd.f32 0.0, %v486
          %v488 = vpop.f32.mrb[0].mxu0
          %489 = vmatprep.mubr.bf16.mxu0 0
          %490 = vmatmul.mubr.bf16.gmra.mrb[0].mxu0 %v356
          %v491 = vpop.f32.mrb[0].mxu0
          %v492 = vadd.f32 0.0, %v491
          %v493 = vpop.f32.mrb[0].mxu0
          %v494 = vpop.f32.mrb[0].mxu0
          %v495 = vadd.f32 0.0, %v494
          %v496 = vpop.f32.mrb[0].mxu0
          %497 = vmatprep.mubr.bf16.mxu0 0
          %498 = vmatmul.mubr.bf16.gmra.mrb[0].mxu0 %v357
          %v499 = vpop.f32.mrb[0].mxu0
          %v500 = vadd.f32 0.0, %v499
          %v501 = vpop.f32.mrb[0].mxu0
          %v502 = vpop.f32.mrb[0].mxu0
          %v503 = vadd.f32 0.0, %v502
          %v504 = vpop.f32.mrb[0].mxu0
          %505 = vmatprep.mubr.bf16.mxu0 0
          %506 = vmatmul.mubr.bf16.gmra.mrb[0].mxu0 %v358
          %v507 = vpop.f32.mrb[0].mxu0
          %v508 = vadd.f32 0.0, %v507
          %v509 = vpop.f32.mrb[0].mxu0
          %v510 = vpop.f32.mrb[0].mxu0
          %v511 = vadd.f32 0.0, %v510
          %v512 = vpop.f32.mrb[0].mxu0
          %513 = vmatprep.mubr.bf16.mxu0 0
          %514 = vmatmul.mubr.bf16.gmra.mrb[0].mxu0 %v359
          %v515 = vpop.f32.mrb[0].mxu0
          %v516 = vadd.f32 0.0, %v515
          %v517 = vpop.f32.mrb[0].mxu0
          %v518 = vpop.f32.mrb[0].mxu0
          %v519 = vadd.f32 0.0, %v518
          %v520 = vpop.f32.mrb[0].mxu0
          %521 = vmatprep.mubr.bf16.mxu0 0
          %522 = vmatmul.mubr.bf16.gmra.mrb[0].mxu0 %v360
          %v523 = vpop.f32.mrb[0].mxu0
          %v524 = vadd.f32 0.0, %v523
          %v525 = vpop.f32.mrb[0].mxu0
          %v526 = vpop.f32.mrb[0].mxu0
          %v527 = vadd.f32 0.0, %v526
          %v528 = vpop.f32.mrb[0].mxu0
          %529 = vmatprep.mubr.bf16.mxu0 0
          %530 = vmatmul.mubr.bf16.gmra.mrb[0].mxu0 %v361
          %v531 = vpop.f32.mrb[0].mxu0
          %v532 = vadd.f32 0.0, %v531
          %v533 = vpop.f32.mrb[0].mxu0
          %v534 = vpop.f32.mrb[0].mxu0
          %v535 = vadd.f32 0.0, %v534
          %v536 = vpop.f32.mrb[0].mxu0
          %537 = vmatprep.mubr.bf16.mxu0 0
          %538 = vmatmul.mubr.bf16.gmra.mrb[0].mxu0 %v362
          %v539 = vpop.f32.mrb[0].mxu0
          %v540 = vadd.f32 0.0, %v539
          %v541 = vpop.f32.mrb[0].mxu0
          %v542 = vpop.f32.mrb[0].mxu0
          %v543 = vadd.f32 0.0, %v542
          %v544 = vpop.f32.mrb[0].mxu0
          %545 = vmatprep.mubr.bf16.mxu0 0
          %546 = vmatmul.mubr.bf16.gmra.mrb[0].mxu0 %v363
          %v547 = vpop.f32.mrb[0].mxu0
          %v548 = vadd.f32 0.0, %v547
          %v549 = vpop.f32.mrb[0].mxu0
          %v550 = vpop.f32.mrb[0].mxu0
          %v551 = vadd.f32 0.0, %v550
          %v552 = vpop.f32.mrb[0].mxu0
          %553 = vmatprep.mubr.bf16.mxu0 0
          %554 = vmatmul.mubr.bf16.gmra.mrb[0].mxu0 %v364
          %v555 = vpop.f32.mrb[0].mxu0
          %v556 = vadd.f32 0.0, %v555
          %v557 = vpop.f32.mrb[0].mxu0
          %v558 = vpop.f32.mrb[0].mxu0
          %v559 = vadd.f32 0.0, %v558
          %v560 = vpop.f32.mrb[0].mxu0
          %561 = vmatprep.mubr.bf16.mxu0 0
          %562 = vmatmul.mubr.bf16.gmra.mrb[0].mxu0 %v365
          %v563 = vpop.f32.mrb[0].mxu0
          %v564 = vadd.f32 0.0, %v563
          %v565 = vpop.f32.mrb[0].mxu0
          %v566 = vpop.f32.mrb[0].mxu0
          %v567 = vadd.f32 0.0, %v566
          %v568 = vpop.f32.mrb[0].mxu0
          %569 = vmatprep.mubr.bf16.mxu0 0
          %570 = vmatmul.mubr.bf16.gmra.mrb[0].mxu0 %v366
          %v571 = vpop.f32.mrb[0].mxu0
          %v572 = vadd.f32 0.0, %v571
          %v573 = vpop.f32.mrb[0].mxu0
          %v574 = vpop.f32.mrb[0].mxu0
          %v575 = vadd.f32 0.0, %v574
          %v576 = vpop.f32.mrb[0].mxu0
          %577 = vmatprep.mubr.bf16.mxu0 0
          %578 = vmatmul.mubr.bf16.gmra.mrb[0].mxu0 %v367
          %v579 = vpop.f32.mrb[0].mxu0
          %v580 = vadd.f32 0.0, %v579
          %v581 = vpop.f32.mrb[0].mxu0
          %v582 = vpop.f32.mrb[0].mxu0
          %v583 = vadd.f32 0.0, %v582
          %v584 = vpop.f32.mrb[0].mxu0
          %585 = vmatprep.mubr.bf16.mxu0 0
          %586 = vmatmul.mubr.bf16.gmra.mrb[0].mxu0 %v368
          %v587 = vpop.f32.mrb[0].mxu0
          %v588 = vadd.f32 0.0, %v587
          %v589 = vpop.f32.mrb[0].mxu0
          %v590 = vpop.f32.mrb[0].mxu0
          %v591 = vadd.f32 0.0, %v590
          %v592 = vpop.f32.mrb[0].mxu0
          %593 = vmatprep.mubr.bf16.mxu0 0
          %594 = vmatmul.mubr.bf16.gmra.mrb[0].mxu0 %v369
          %v595 = vpop.f32.mrb[0].mxu0
          %v596 = vadd.f32 0.0, %v595
          %v597 = vpop.f32.mrb[0].mxu0
          %v598 = vpop.f32.mrb[0].mxu0
          %v599 = vadd.f32 0.0, %v598
          %v600 = vpop.f32.mrb[0].mxu0
          %601 = vmatprep.mubr.bf16.mxu0 0
          %602 = vmatmul.mubr.bf16.gmra.mrb[0].mxu0 %v370
          %v603 = vpop.f32.mrb[0].mxu0
          %v604 = vadd.f32 0.0, %v603
          %v605 = vpop.f32.mrb[0].mxu0
          %v606 = vpop.f32.mrb[0].mxu0
          %v607 = vadd.f32 0.0, %v606
          %v608 = vpop.f32.mrb[0].mxu0
          %609 = vmatprep.mubr.bf16.mxu0 0
          %610 = vmatmul.mubr.bf16.gmra.mrb[0].mxu0 %v371
          %v611 = vpop.f32.mrb[0].mxu0
          %v612 = vadd.f32 0.0, %v611
          %v613 = vpop.f32.mrb[0].mxu0
          %v614 = vpop.f32.mrb[0].mxu0
          %v615 = vadd.f32 0.0, %v614
          %v616 = vpop.f32.mrb[0].mxu0
          %617 = vmatprep.mubr.bf16.mxu0 0
          %618 = vmatmul.mubr.bf16.gmra.mrb[0].mxu0 %v372
          %v619 = vpop.f32.mrb[0].mxu0
          %v620 = vadd.f32 0.0, %v619
          %v621 = vpop.f32.mrb[0].mxu0
          %v622 = vpop.f32.mrb[0].mxu0
          %v623 = vadd.f32 0.0, %v622
          %v624 = vpop.f32.mrb[0].mxu0
          %625 = vmatprep.mubr.bf16.mxu0 0
          %626 = vmatmul.mubr.bf16.gmra.mrb[0].mxu0 %v373
          %v627 = vpop.f32.mrb[0].mxu0
          %v628 = vadd.f32 0.0, %v627
          %v629 = vpop.f32.mrb[0].mxu0
          %v630 = vpop.f32.mrb[0].mxu0
          %v631 = vadd.f32 0.0, %v630
          %v632 = vpop.f32.mrb[0].mxu0
          %633 = vmatprep.mubr.bf16.mxu0 0
          %634 = vmatmul.mubr.bf16.gmra.mrb[0].mxu0 %v374
          %v635 = vpop.f32.mrb[0].mxu0
          %v636 = vadd.f32 0.0, %v635
          %v637 = vpop.f32.mrb[0].mxu0
          %v638 = vpop.f32.mrb[0].mxu0
          %v639 = vadd.f32 0.0, %v638
          %v640 = vpop.f32.mrb[0].mxu0
          %641 = vmatprep.mubr.bf16.mxu0 0
          %642 = vmatmul.mubr.bf16.gmra.mrb[0].mxu0 %v375
          %v643 = vpop.f32.mrb[0].mxu0
          %v644 = vadd.f32 0.0, %v643
          %v645 = vpop.f32.mrb[0].mxu0
          %v646 = vpop.f32.mrb[0].mxu0
          %v647 = vadd.f32 0.0, %v646
          %v648 = vpop.f32.mrb[0].mxu0
          %649 = vmatprep.mubr.bf16.mxu0 0
          %650 = vmatmul.mubr.bf16.gmra.mrb[0].mxu0 %v376
          %v651 = vpop.f32.mrb[0].mxu0
          %v652 = vadd.f32 0.0, %v651
          %v653 = vpop.f32.mrb[0].mxu0
          %v654 = vpop.f32.mrb[0].mxu0
          %v655 = vadd.f32 0.0, %v654
          %v656 = vpop.f32.mrb[0].mxu0
          %657 = vmatprep.mubr.bf16.mxu0 0
          %658 = vmatmul.mubr.bf16.gmra.mrb[0].mxu0 %v377
          %v659 = vpop.f32.mrb[0].mxu0
          %v660 = vadd.f32 0.0, %v659
          %v661 = vpop.f32.mrb[0].mxu0
          %v662 = vpop.f32.mrb[0].mxu0
          %v663 = vadd.f32 0.0, %v662
          %v664 = vpop.f32.mrb[0].mxu0
          %665 = vmatprep.mubr.bf16.mxu0 0
          %666 = vmatmul.mubr.bf16.gmra.mrb[0].mxu0 %v378
          %v667 = vpop.f32.mrb[0].mxu0
          %v668 = vadd.f32 0.0, %v667
          %v669 = vpop.f32.mrb[0].mxu0
          %v670 = vpop.f32.mrb[0].mxu0
          %v671 = vadd.f32 0.0, %v670
          %v672 = vpop.f32.mrb[0].mxu0
          %673 = vmatprep.mubr.bf16.mxu0 0
          %674 = vmatmul.mubr.bf16.gmra.mrb[0].mxu0 %v379
          %v675 = vpop.f32.mrb[0].mxu0
          %v676 = vadd.f32 0.0, %v675
          %v677 = vpop.f32.mrb[0].mxu0
          %v678 = vpop.f32.mrb[0].mxu0
          %v679 = vadd.f32 0.0, %v678
          %v680 = vpop.f32.mrb[0].mxu0
          %681 = vmatprep.mubr.bf16.mxu0 0
          %682 = vmatmul.mubr.bf16.gmra.mrb[0].mxu0 %v380
          %v683 = vpop.f32.mrb[0].mxu0
          %v684 = vadd.f32 0.0, %v683
          %v685 = vpop.f32.mrb[0].mxu0
          %v686 = vpop.f32.mrb[0].mxu0
          %v687 = vadd.f32 0.0, %v686
          %v688 = vpop.f32.mrb[0].mxu0
          %689 = vmatprep.mubr.bf16.mxu0 0
          %690 = vmatmul.mubr.bf16.gmra.mrb[0].mxu0 %v381
          %v691 = vpop.f32.mrb[0].mxu0
          %v692 = vadd.f32 0.0, %v691
          %v693 = vpop.f32.mrb[0].mxu0
          %v694 = vpop.f32.mrb[0].mxu0
          %v695 = vadd.f32 0.0, %v694
          %v696 = vpop.f32.mrb[0].mxu0
          %697 = vmatprep.mubr.bf16.mxu0 0
          %698 = vmatmul.mubr.bf16.gmra.mrb[0].mxu0 %v382
          %v699 = vpop.f32.mrb[0].mxu0
          %v700 = vadd.f32 0.0, %v699
          %v701 = vpop.f32.mrb[0].mxu0
          %v702 = vpop.f32.mrb[0].mxu0
          %v703 = vadd.f32 0.0, %v702
          %v704 = vpop.f32.mrb[0].mxu0
          %705 = vmatprep.mubr.bf16.mxu0 0
          %706 = vmatmul.mubr.bf16.gmra.mrb[0].mxu0 %v383
          %v707 = vpop.f32.mrb[0].mxu0
          %v708 = vadd.f32 0.0, %v707
          %v709 = vpop.f32.mrb[0].mxu0
          %v710 = vpop.f32.mrb[0].mxu0
          %v711 = vadd.f32 0.0, %v710
          %v712 = vpop.f32.mrb[0].mxu0
          %713 = vmatprep.mubr.bf16.mxu0 0
          %714 = vmatmul.mubr.bf16.gmra.mrb[0].mxu0 %v384
          %v715 = vpop.f32.mrb[0].mxu0
          %v716 = vadd.f32 0.0, %v715
          %v717 = vpop.f32.mrb[0].mxu0
          %v718 = vpop.f32.mrb[0].mxu0
          %v719 = vadd.f32 0.0, %v718
          %v720 = vpop.f32.mrb[0].mxu0
          %721 = vdwg.mxu0
          %v722 = vpack.c.bf16 %v471, %v468
          %v723 = vpack.c.bf16 %v479, %v476
          %v724 = vpack.c.bf16 %v487, %v484
          %v725 = vpack.c.bf16 %v495, %v492
          %v726 = vpack.c.bf16 %v503, %v500
          %v727 = vpack.c.bf16 %v511, %v508
          %v728 = vpack.c.bf16 %v519, %v516
          %v729 = vpack.c.bf16 %v527, %v524
          %v730 = vpack.c.bf16 %v535, %v532
          %v731 = vpack.c.bf16 %v543, %v540
          %v732 = vpack.c.bf16 %v551, %v548
          %v733 = vpack.c.bf16 %v559, %v556
          %v734 = vpack.c.bf16 %v567, %v564
          %v735 = vpack.c.bf16 %v575, %v572
          %v736 = vpack.c.bf16 %v583, %v580
          %v737 = vpack.c.bf16 %v591, %v588
          %v738 = vpack.c.bf16 %v599, %v596
          %v739 = vpack.c.bf16 %v607, %v604
          %v740 = vpack.c.bf16 %v615, %v612
          %v741 = vpack.c.bf16 %v623, %v620
          %v742 = vpack.c.bf16 %v631, %v628
          %v743 = vpack.c.bf16 %v639, %v636
          %v744 = vpack.c.bf16 %v647, %v644
          %v745 = vpack.c.bf16 %v655, %v652
          %v746 = vpack.c.bf16 %v663, %v660
          %v747 = vpack.c.bf16 %v671, %v668
          %v748 = vpack.c.bf16 %v679, %v676
          %v749 = vpack.c.bf16 %v687, %v684
          %v750 = vpack.c.bf16 %v695, %v692
          %v751 = vpack.c.bf16 %v703, %v700
          %v752 = vpack.c.bf16 %v711, %v708
          %v753 = vpack.c.bf16 %v719, %v716
          %754 = vst [vmem:[#allocation3] sm:$0xff] %v722
          %755 = vst [vmem:[#allocation3 + $0x8] sm:$0xff] %v723
          %756 = vst [vmem:[#allocation3 + $0x10] sm:$0xff] %v724
          %757 = vst [vmem:[#allocation3 + $0x18] sm:$0xff] %v725
          %758 = vst [vmem:[#allocation3 + $0x20] sm:$0xff] %v726
          %759 = vst [vmem:[#allocation3 + $0x28] sm:$0xff] %v727
          %760 = vst [vmem:[#allocation3 + $0x30] sm:$0xff] %v728
          %761 = vst [vmem:[#allocation3 + $0x38] sm:$0xff] %v729
          %762 = vst [vmem:[#allocation3 + $0x40] sm:$0xff] %v730
          %763 = vst [vmem:[#allocation3 + $0x48] sm:$0xff] %v731
          %764 = vst [vmem:[#allocation3 + $0x50] sm:$0xff] %v732
          %765 = vst [vmem:[#allocation3 + $0x58] sm:$0xff] %v733
          %766 = vst [vmem:[#allocation3 + $0x60] sm:$0xff] %v734
          %767 = vst [vmem:[#allocation3 + $0x68] sm:$0xff] %v735
          %768 = vst [vmem:[#allocation3 + $0x70] sm:$0xff] %v736
          %769 = vst [vmem:[#allocation3 + $0x78] sm:$0xff] %v737
          %770 = vst [vmem:[#allocation3 + $0x80] sm:$0xff] %v738
          %771 = vst [vmem:[#allocation3 + $0x88] sm:$0xff] %v739
          %772 = vst [vmem:[#allocation3 + $0x90] sm:$0xff] %v740
          %773 = vst [vmem:[#allocation3 + $0x98] sm:$0xff] %v741
          %774 = vst [vmem:[#allocation3 + $0xa0] sm:$0xff] %v742
          %775 = vst [vmem:[#allocation3 + $0xa8] sm:$0xff] %v743
          %776 = vst [vmem:[#allocation3 + $0xb0] sm:$0xff] %v744
          %777 = vst [vmem:[#allocation3 + $0xb8] sm:$0xff] %v745
          %778 = vst [vmem:[#allocation3 + $0xc0] sm:$0xff] %v746
          %779 = vst [vmem:[#allocation3 + $0xc8] sm:$0xff] %v747
          %780 = vst [vmem:[#allocation3 + $0xd0] sm:$0xff] %v748
          %781 = vst [vmem:[#allocation3 + $0xd8] sm:$0xff] %v749
          %782 = vst [vmem:[#allocation3 + $0xe0] sm:$0xff] %v750
          %783 = vst [vmem:[#allocation3 + $0xe8] sm:$0xff] %v751
          %784 = vst [vmem:[#allocation3 + $0xf0] sm:$0xff] %v752
          %785 = vst [vmem:[#allocation3 + $0xf8] sm:$0xff] %v753
        $region64: #{tpu_custom_call.1} parent=39 // pred_fallthru
          _
        %s786 = sshra.s32 %s209, 4
        %s787 = sand.u32 %s209, 15
        %s788 = smul.u32 %s786, 4
        %s789 = smul.addr %s788, 8
        %s790 = scalar_lea.vmem [#allocation4], %s789
        %v791 = vld [vmem:[%s790] sm:$0xff]
        %v792 = vld [vmem:[%s790 + $0x8] sm:$0xff]
        %v793 = vld [vmem:[%s790 + $0x10] sm:$0xff]
        %v794 = vld [vmem:[%s790 + $0x18] sm:$0xff]
        %v795 = vld [vmem:[%s790 + $0x20] sm:$0xff]
        %v796 = vld [vmem:[%s790 + $0x28] sm:$0xff]
        %v797 = vld [vmem:[%s790 + $0x30] sm:$0xff]
        %v798 = vld [vmem:[%s790 + $0x38] sm:$0xff]
        %v799 = vld [vmem:[%s790 + $0x40] sm:$0xff]
        %v800 = vld [vmem:[%s790 + $0x48] sm:$0xff]
        %v801 = vld [vmem:[%s790 + $0x50] sm:$0xff]
        %v802 = vld [vmem:[%s790 + $0x58] sm:$0xff]
        %v803 = vld [vmem:[%s790 + $0x60] sm:$0xff]
        %v804 = vld [vmem:[%s790 + $0x68] sm:$0xff]
        %v805 = vld [vmem:[%s790 + $0x70] sm:$0xff]
        %v806 = vld [vmem:[%s790 + $0x78] sm:$0xff]
        %v807 = vld [vmem:[%s790 + $0x80] sm:$0xff]
        %v808 = vld [vmem:[%s790 + $0x88] sm:$0xff]
        %v809 = vld [vmem:[%s790 + $0x90] sm:$0xff]
        %v810 = vld [vmem:[%s790 + $0x98] sm:$0xff]
        %v811 = vld [vmem:[%s790 + $0xa0] sm:$0xff]
        %v812 = vld [vmem:[%s790 + $0xa8] sm:$0xff]
        %v813 = vld [vmem:[%s790 + $0xb0] sm:$0xff]
        %v814 = vld [vmem:[%s790 + $0xb8] sm:$0xff]
        %v815 = vld [vmem:[%s790 + $0xc0] sm:$0xff]
        %v816 = vld [vmem:[%s790 + $0xc8] sm:$0xff]
        %v817 = vld [vmem:[%s790 + $0xd0] sm:$0xff]
        %v818 = vld [vmem:[%s790 + $0xd8] sm:$0xff]
        %v819 = vld [vmem:[%s790 + $0xe0] sm:$0xff]
        %v820 = vld [vmem:[%s790 + $0xe8] sm:$0xff]
        %v821 = vld [vmem:[%s790 + $0xf0] sm:$0xff]
        %v822 = vld [vmem:[%s790 + $0xf8] sm:$0xff]
        %v823 = vld [vmem:[%s790 + $0x100] sm:$0xff]
        %v824 = vld [vmem:[%s790 + $0x108] sm:$0xff]
        %v825 = vld [vmem:[%s790 + $0x110] sm:$0xff]
        %v826 = vld [vmem:[%s790 + $0x118] sm:$0xff]
        %v827 = vld [vmem:[%s790 + $0x120] sm:$0xff]
        %v828 = vld [vmem:[%s790 + $0x128] sm:$0xff]
        %v829 = vld [vmem:[%s790 + $0x130] sm:$0xff]
        %v830 = vld [vmem:[%s790 + $0x138] sm:$0xff]
        %v831 = vld [vmem:[%s790 + $0x140] sm:$0xff]
        %v832 = vld [vmem:[%s790 + $0x148] sm:$0xff]
        %v833 = vld [vmem:[%s790 + $0x150] sm:$0xff]
        %v834 = vld [vmem:[%s790 + $0x158] sm:$0xff]
        %v835 = vld [vmem:[%s790 + $0x160] sm:$0xff]
        %v836 = vld [vmem:[%s790 + $0x168] sm:$0xff]
        %v837 = vld [vmem:[%s790 + $0x170] sm:$0xff]
        %v838 = vld [vmem:[%s790 + $0x178] sm:$0xff]
        %v839 = vld [vmem:[%s790 + $0x180] sm:$0xff]
        %v840 = vld [vmem:[%s790 + $0x188] sm:$0xff]
        %v841 = vld [vmem:[%s790 + $0x190] sm:$0xff]
        %v842 = vld [vmem:[%s790 + $0x198] sm:$0xff]
        %v843 = vld [vmem:[%s790 + $0x1a0] sm:$0xff]
        %v844 = vld [vmem:[%s790 + $0x1a8] sm:$0xff]
        %v845 = vld [vmem:[%s790 + $0x1b0] sm:$0xff]
        %v846 = vld [vmem:[%s790 + $0x1b8] sm:$0xff]
        %v847 = vld [vmem:[%s790 + $0x1c0] sm:$0xff]
        %v848 = vld [vmem:[%s790 + $0x1c8] sm:$0xff]
        %v849 = vld [vmem:[%s790 + $0x1d0] sm:$0xff]
        %v850 = vld [vmem:[%s790 + $0x1d8] sm:$0xff]
        %v851 = vld [vmem:[%s790 + $0x1e0] sm:$0xff]
        %v852 = vld [vmem:[%s790 + $0x1e8] sm:$0xff]
        %v853 = vld [vmem:[%s790 + $0x1f0] sm:$0xff]
        %v854 = vld [vmem:[%s790 + $0x1f8] sm:$0xff]
        %v855 = vld [vmem:[#allocation3] sm:$0xff]
        %v856 = vld [vmem:[#allocation3 + $0x8] sm:$0xff]
        %v857 = vld [vmem:[#allocation3 + $0x10] sm:$0xff]
        %v858 = vld [vmem:[#allocation3 + $0x18] sm:$0xff]
        %v859 = vld [vmem:[#allocation3 + $0x20] sm:$0xff]
        %v860 = vld [vmem:[#allocation3 + $0x28] sm:$0xff]
        %v861 = vld [vmem:[#allocation3 + $0x30] sm:$0xff]
        %v862 = vld [vmem:[#allocation3 + $0x38] sm:$0xff]
        %v863 = vld [vmem:[#allocation3 + $0x40] sm:$0xff]
        %v864 = vld [vmem:[#allocation3 + $0x48] sm:$0xff]
        %v865 = vld [vmem:[#allocation3 + $0x50] sm:$0xff]
        %v866 = vld [vmem:[#allocation3 + $0x58] sm:$0xff]
        %v867 = vld [vmem:[#allocation3 + $0x60] sm:$0xff]
        %v868 = vld [vmem:[#allocation3 + $0x68] sm:$0xff]
        %v869 = vld [vmem:[#allocation3 + $0x70] sm:$0xff]
        %v870 = vld [vmem:[#allocation3 + $0x78] sm:$0xff]
        %v871 = vld [vmem:[#allocation3 + $0x80] sm:$0xff]
        %v872 = vld [vmem:[#allocation3 + $0x88] sm:$0xff]
        %v873 = vld [vmem:[#allocation3 + $0x90] sm:$0xff]
        %v874 = vld [vmem:[#allocation3 + $0x98] sm:$0xff]
        %v875 = vld [vmem:[#allocation3 + $0xa0] sm:$0xff]
        %v876 = vld [vmem:[#allocation3 + $0xa8] sm:$0xff]
        %v877 = vld [vmem:[#allocation3 + $0xb0] sm:$0xff]
        %v878 = vld [vmem:[#allocation3 + $0xb8] sm:$0xff]
        %v879 = vld [vmem:[#allocation3 + $0xc0] sm:$0xff]
        %v880 = vld [vmem:[#allocation3 + $0xc8] sm:$0xff]
        %v881 = vld [vmem:[#allocation3 + $0xd0] sm:$0xff]
        %v882 = vld [vmem:[#allocation3 + $0xd8] sm:$0xff]
        %v883 = vld [vmem:[#allocation3 + $0xe0] sm:$0xff]
        %v884 = vld [vmem:[#allocation3 + $0xe8] sm:$0xff]
        %v885 = vld [vmem:[#allocation3 + $0xf0] sm:$0xff]
        %v886 = vld [vmem:[#allocation3 + $0xf8] sm:$0xff]
        %887 = vmatprep.subr.bf16.mxu0 0
        %888 = vmatpush1.bf16.msra.mxu0 %v855
        %889 = vmatprep.subr.bf16.mxu0 0
        %890 = vmatpush1.bf16.msra.mxu0 %v856
        %891 = vmatprep.subr.bf16.mxu0 0
        %892 = vmatpush1.bf16.msra.mxu0 %v857
        %893 = vmatprep.subr.bf16.mxu0 0
        %894 = vmatpush1.bf16.msra.mxu0 %v858
        %895 = vmatprep.subr.bf16.mxu0 0
        %896 = vmatpush1.bf16.msra.mxu0 %v859
        %897 = vmatprep.subr.bf16.mxu0 0
        %898 = vmatpush1.bf16.msra.mxu0 %v860
        %899 = vmatprep.subr.bf16.mxu0 0
        %900 = vmatpush1.bf16.msra.mxu0 %v861
        %901 = vmatprep.subr.bf16.mxu0 0
        %902 = vmatpush1.bf16.msra.mxu0 %v862
        %903 = vmatprep.subr.bf16.mxu0 0
        %904 = vmatpush1.bf16.msra.mxu0 %v863
        %905 = vmatprep.subr.bf16.mxu0 0
        %906 = vmatpush1.bf16.msra.mxu0 %v864
        %907 = vmatprep.subr.bf16.mxu0 0
        %908 = vmatpush1.bf16.msra.mxu0 %v865
        %909 = vmatprep.subr.bf16.mxu0 0
        %910 = vmatpush1.bf16.msra.mxu0 %v866
        %911 = vmatprep.subr.bf16.mxu0 0
        %912 = vmatpush1.bf16.msra.mxu0 %v867
        %913 = vmatprep.subr.bf16.mxu0 0
        %914 = vmatpush1.bf16.msra.mxu0 %v868
        %915 = vmatprep.subr.bf16.mxu0 0
        %916 = vmatpush1.bf16.msra.mxu0 %v869
        %917 = vmatprep.subr.bf16.mxu0 0
        %918 = vmatpush1.bf16.msra.mxu0 %v870
        %919 = vmatprep.mubr.bf16.mxu0 %v792
        %920 = vmatmul.mubr.bf16.gmra.mrb[0].mxu0 %v791
        %v921 = vpop.f32.mrb[0].mxu0
        %v922 = vadd.f32 0.0, %v921
        %v923 = vpop.f32.mrb[0].mxu0
        %v924 = vpop.f32.mrb[0].mxu0
        %v925 = vadd.f32 0.0, %v924
        %v926 = vpop.f32.mrb[0].mxu0
        %927 = vmatprep.mubr.bf16.mxu0 %v796
        %928 = vmatmul.mubr.bf16.gmra.mrb[0].mxu0 %v795
        %v929 = vpop.f32.mrb[0].mxu0
        %v930 = vadd.f32 0.0, %v929
        %v931 = vpop.f32.mrb[0].mxu0
        %v932 = vpop.f32.mrb[0].mxu0
        %v933 = vadd.f32 0.0, %v932
        %v934 = vpop.f32.mrb[0].mxu0
        %935 = vmatprep.mubr.bf16.mxu0 %v800
        %936 = vmatmul.mubr.bf16.gmra.mrb[0].mxu0 %v799
        %v937 = vpop.f32.mrb[0].mxu0
        %v938 = vadd.f32 0.0, %v937
        %v939 = vpop.f32.mrb[0].mxu0
        %v940 = vpop.f32.mrb[0].mxu0
        %v941 = vadd.f32 0.0, %v940
        %v942 = vpop.f32.mrb[0].mxu0
        %943 = vmatprep.mubr.bf16.mxu0 %v804
        %944 = vmatmul.mubr.bf16.gmra.mrb[0].mxu0 %v803
        %v945 = vpop.f32.mrb[0].mxu0
        %v946 = vadd.f32 0.0, %v945
        %v947 = vpop.f32.mrb[0].mxu0
        %v948 = vpop.f32.mrb[0].mxu0
        %v949 = vadd.f32 0.0, %v948
        %v950 = vpop.f32.mrb[0].mxu0
        %951 = vmatprep.mubr.bf16.mxu0 %v808
        %952 = vmatmul.mubr.bf16.gmra.mrb[0].mxu0 %v807
        %v953 = vpop.f32.mrb[0].mxu0
        %v954 = vadd.f32 0.0, %v953
        %v955 = vpop.f32.mrb[0].mxu0
        %v956 = vpop.f32.mrb[0].mxu0
        %v957 = vadd.f32 0.0, %v956
        %v958 = vpop.f32.mrb[0].mxu0
        %959 = vmatprep.mubr.bf16.mxu0 %v812
        %960 = vmatmul.mubr.bf16.gmra.mrb[0].mxu0 %v811
        %v961 = vpop.f32.mrb[0].mxu0
        %v962 = vadd.f32 0.0, %v961
        %v963 = vpop.f32.mrb[0].mxu0
        %v964 = vpop.f32.mrb[0].mxu0
        %v965 = vadd.f32 0.0, %v964
        %v966 = vpop.f32.mrb[0].mxu0
        %967 = vmatprep.mubr.bf16.mxu0 %v816
        %968 = vmatmul.mubr.bf16.gmra.mrb[0].mxu0 %v815
        %v969 = vpop.f32.mrb[0].mxu0
        %v970 = vadd.f32 0.0, %v969
        %v971 = vpop.f32.mrb[0].mxu0
        %v972 = vpop.f32.mrb[0].mxu0
        %v973 = vadd.f32 0.0, %v972
        %v974 = vpop.f32.mrb[0].mxu0
        %975 = vmatprep.mubr.bf16.mxu0 %v820
        %976 = vmatmul.mubr.bf16.gmra.mrb[0].mxu0 %v819
        %v977 = vpop.f32.mrb[0].mxu0
        %v978 = vadd.f32 0.0, %v977
        %v979 = vpop.f32.mrb[0].mxu0
        %v980 = vpop.f32.mrb[0].mxu0
        %v981 = vadd.f32 0.0, %v980
        %v982 = vpop.f32.mrb[0].mxu0
        %983 = vmatprep.mubr.bf16.mxu0 %v824
        %984 = vmatmul.mubr.bf16.gmra.mrb[0].mxu0 %v823
        %v985 = vpop.f32.mrb[0].mxu0
        %v986 = vadd.f32 0.0, %v985
        %v987 = vpop.f32.mrb[0].mxu0
        %v988 = vpop.f32.mrb[0].mxu0
        %v989 = vadd.f32 0.0, %v988
        %v990 = vpop.f32.mrb[0].mxu0
        %991 = vmatprep.mubr.bf16.mxu0 %v828
        %992 = vmatmul.mubr.bf16.gmra.mrb[0].mxu0 %v827
        %v993 = vpop.f32.mrb[0].mxu0
        %v994 = vadd.f32 0.0, %v993
        %v995 = vpop.f32.mrb[0].mxu0
        %v996 = vpop.f32.mrb[0].mxu0
        %v997 = vadd.f32 0.0, %v996
        %v998 = vpop.f32.mrb[0].mxu0
        %999 = vmatprep.mubr.bf16.mxu0 %v832
        %1000 = vmatmul.mubr.bf16.gmra.mrb[0].mxu0 %v831
        %v1001 = vpop.f32.mrb[0].mxu0
        %v1002 = vadd.f32 0.0, %v1001
        %v1003 = vpop.f32.mrb[0].mxu0
        %v1004 = vpop.f32.mrb[0].mxu0
        %v1005 = vadd.f32 0.0, %v1004
        %v1006 = vpop.f32.mrb[0].mxu0
        %1007 = vmatprep.mubr.bf16.mxu0 %v836
        %1008 = vmatmul.mubr.bf16.gmra.mrb[0].mxu0 %v835
        %v1009 = vpop.f32.mrb[0].mxu0
        %v1010 = vadd.f32 0.0, %v1009
        %v1011 = vpop.f32.mrb[0].mxu0
        %v1012 = vpop.f32.mrb[0].mxu0
        %v1013 = vadd.f32 0.0, %v1012
        %v1014 = vpop.f32.mrb[0].mxu0
        %1015 = vmatprep.mubr.bf16.mxu0 %v840
        %1016 = vmatmul.mubr.bf16.gmra.mrb[0].mxu0 %v839
        %v1017 = vpop.f32.mrb[0].mxu0
        %v1018 = vadd.f32 0.0, %v1017
        %v1019 = vpop.f32.mrb[0].mxu0
        %v1020 = vpop.f32.mrb[0].mxu0
        %v1021 = vadd.f32 0.0, %v1020
        %v1022 = vpop.f32.mrb[0].mxu0
        %1023 = vmatprep.mubr.bf16.mxu0 %v844
        %1024 = vmatmul.mubr.bf16.gmra.mrb[0].mxu0 %v843
        %v1025 = vpop.f32.mrb[0].mxu0
        %v1026 = vadd.f32 0.0, %v1025
        %v1027 = vpop.f32.mrb[0].mxu0
        %v1028 = vpop.f32.mrb[0].mxu0
        %v1029 = vadd.f32 0.0, %v1028
        %v1030 = vpop.f32.mrb[0].mxu0
        %1031 = vmatprep.mubr.bf16.mxu0 %v848
        %1032 = vmatmul.mubr.bf16.gmra.mrb[0].mxu0 %v847
        %v1033 = vpop.f32.mrb[0].mxu0
        %v1034 = vadd.f32 0.0, %v1033
        %v1035 = vpop.f32.mrb[0].mxu0
        %v1036 = vpop.f32.mrb[0].mxu0
        %v1037 = vadd.f32 0.0, %v1036
        %v1038 = vpop.f32.mrb[0].mxu0
        %1039 = vmatprep.mubr.bf16.mxu0 %v852
        %1040 = vmatmul.mubr.bf16.gmra.mrb[0].mxu0 %v851
        %v1041 = vpop.f32.mrb[0].mxu0
        %v1042 = vadd.f32 0.0, %v1041
        %v1043 = vpop.f32.mrb[0].mxu0
        %v1044 = vpop.f32.mrb[0].mxu0
        %v1045 = vadd.f32 0.0, %v1044
        %v1046 = vpop.f32.mrb[0].mxu0
        %1047 = vdwg.mxu0
        %1048 = vmatprep.subr.bf16.mxu0 0
        %1049 = vmatpush1.bf16.msra.mxu0 %v871
        %1050 = vmatprep.subr.bf16.mxu0 0
        %1051 = vmatpush1.bf16.msra.mxu0 %v872
        %1052 = vmatprep.subr.bf16.mxu0 0
        %1053 = vmatpush1.bf16.msra.mxu0 %v873
        %1054 = vmatprep.subr.bf16.mxu0 0
        %1055 = vmatpush1.bf16.msra.mxu0 %v874
        %1056 = vmatprep.subr.bf16.mxu0 0
        %1057 = vmatpush1.bf16.msra.mxu0 %v875
        %1058 = vmatprep.subr.bf16.mxu0 0
        %1059 = vmatpush1.bf16.msra.mxu0 %v876
        %1060 = vmatprep.subr.bf16.mxu0 0
        %1061 = vmatpush1.bf16.msra.mxu0 %v877
        %1062 = vmatprep.subr.bf16.mxu0 0
        %1063 = vmatpush1.bf16.msra.mxu0 %v878
        %1064 = vmatprep.subr.bf16.mxu0 0
        %1065 = vmatpush1.bf16.msra.mxu0 %v879
        %1066 = vmatprep.subr.bf16.mxu0 0
        %1067 = vmatpush1.bf16.msra.mxu0 %v880
        %1068 = vmatprep.subr.bf16.mxu0 0
        %1069 = vmatpush1.bf16.msra.mxu0 %v881
        %1070 = vmatprep.subr.bf16.mxu0 0
        %1071 = vmatpush1.bf16.msra.mxu0 %v882
        %1072 = vmatprep.subr.bf16.mxu0 0
        %1073 = vmatpush1.bf16.msra.mxu0 %v883
        %1074 = vmatprep.subr.bf16.mxu0 0
        %1075 = vmatpush1.bf16.msra.mxu0 %v884
        %1076 = vmatprep.subr.bf16.mxu0 0
        %1077 = vmatpush1.bf16.msra.mxu0 %v885
        %1078 = vmatprep.subr.bf16.mxu0 0
        %1079 = vmatpush1.bf16.msra.mxu0 %v886
        %1080 = vmatprep.mubr.bf16.mxu0 %v794
        %1081 = vmatmul.mubr.bf16.gmra.mrb[0].mxu0 %v793
        %v1082 = vpop.f32.mrb[0].mxu0
        %v1083 = vadd.f32 %v922, %v1082
        %v1084 = vpop.f32.mrb[0].mxu0
        %v1085 = vpop.f32.mrb[0].mxu0
        %v1086 = vadd.f32 %v925, %v1085
        %v1087 = vpop.f32.mrb[0].mxu0
        %1088 = vmatprep.mubr.bf16.mxu0 %v798
        %1089 = vmatmul.mubr.bf16.gmra.mrb[0].mxu0 %v797
        %v1090 = vpop.f32.mrb[0].mxu0
        %v1091 = vadd.f32 %v930, %v1090
        %v1092 = vpop.f32.mrb[0].mxu0
        %v1093 = vpop.f32.mrb[0].mxu0
        %v1094 = vadd.f32 %v933, %v1093
        %v1095 = vpop.f32.mrb[0].mxu0
        %1096 = vmatprep.mubr.bf16.mxu0 %v802
        %1097 = vmatmul.mubr.bf16.gmra.mrb[0].mxu0 %v801
        %v1098 = vpop.f32.mrb[0].mxu0
        %v1099 = vadd.f32 %v938, %v1098
        %v1100 = vpop.f32.mrb[0].mxu0
        %v1101 = vpop.f32.mrb[0].mxu0
        %v1102 = vadd.f32 %v941, %v1101
        %v1103 = vpop.f32.mrb[0].mxu0
        %1104 = vmatprep.mubr.bf16.mxu0 %v806
        %1105 = vmatmul.mubr.bf16.gmra.mrb[0].mxu0 %v805
        %v1106 = vpop.f32.mrb[0].mxu0
        %v1107 = vadd.f32 %v946, %v1106
        %v1108 = vpop.f32.mrb[0].mxu0
        %v1109 = vpop.f32.mrb[0].mxu0
        %v1110 = vadd.f32 %v949, %v1109
        %v1111 = vpop.f32.mrb[0].mxu0
        %1112 = vmatprep.mubr.bf16.mxu0 %v810
        %1113 = vmatmul.mubr.bf16.gmra.mrb[0].mxu0 %v809
        %v1114 = vpop.f32.mrb[0].mxu0
        %v1115 = vadd.f32 %v954, %v1114
        %v1116 = vpop.f32.mrb[0].mxu0
        %v1117 = vpop.f32.mrb[0].mxu0
        %v1118 = vadd.f32 %v957, %v1117
        %v1119 = vpop.f32.mrb[0].mxu0
        %1120 = vmatprep.mubr.bf16.mxu0 %v814
        %1121 = vmatmul.mubr.bf16.gmra.mrb[0].mxu0 %v813
        %v1122 = vpop.f32.mrb[0].mxu0
        %v1123 = vadd.f32 %v962, %v1122
        %v1124 = vpop.f32.mrb[0].mxu0
        %v1125 = vpop.f32.mrb[0].mxu0
        %v1126 = vadd.f32 %v965, %v1125
        %v1127 = vpop.f32.mrb[0].mxu0
        %1128 = vmatprep.mubr.bf16.mxu0 %v818
        %1129 = vmatmul.mubr.bf16.gmra.mrb[0].mxu0 %v817
        %v1130 = vpop.f32.mrb[0].mxu0
        %v1131 = vadd.f32 %v970, %v1130
        %v1132 = vpop.f32.mrb[0].mxu0
        %v1133 = vpop.f32.mrb[0].mxu0
        %v1134 = vadd.f32 %v973, %v1133
        %v1135 = vpop.f32.mrb[0].mxu0
        %1136 = vmatprep.mubr.bf16.mxu0 %v822
        %1137 = vmatmul.mubr.bf16.gmra.mrb[0].mxu0 %v821
        %v1138 = vpop.f32.mrb[0].mxu0
        %v1139 = vadd.f32 %v978, %v1138
        %v1140 = vpop.f32.mrb[0].mxu0
        %v1141 = vpop.f32.mrb[0].mxu0
        %v1142 = vadd.f32 %v981, %v1141
        %v1143 = vpop.f32.mrb[0].mxu0
        %1144 = vmatprep.mubr.bf16.mxu0 %v826
        %1145 = vmatmul.mubr.bf16.gmra.mrb[0].mxu0 %v825
        %v1146 = vpop.f32.mrb[0].mxu0
        %v1147 = vadd.f32 %v986, %v1146
        %v1148 = vpop.f32.mrb[0].mxu0
        %v1149 = vpop.f32.mrb[0].mxu0
        %v1150 = vadd.f32 %v989, %v1149
        %v1151 = vpop.f32.mrb[0].mxu0
        %1152 = vmatprep.mubr.bf16.mxu0 %v830
        %1153 = vmatmul.mubr.bf16.gmra.mrb[0].mxu0 %v829
        %v1154 = vpop.f32.mrb[0].mxu0
        %v1155 = vadd.f32 %v994, %v1154
        %v1156 = vpop.f32.mrb[0].mxu0
        %v1157 = vpop.f32.mrb[0].mxu0
        %v1158 = vadd.f32 %v997, %v1157
        %v1159 = vpop.f32.mrb[0].mxu0
        %1160 = vmatprep.mubr.bf16.mxu0 %v834
        %1161 = vmatmul.mubr.bf16.gmra.mrb[0].mxu0 %v833
        %v1162 = vpop.f32.mrb[0].mxu0
        %v1163 = vadd.f32 %v1002, %v1162
        %v1164 = vpop.f32.mrb[0].mxu0
        %v1165 = vpop.f32.mrb[0].mxu0
        %v1166 = vadd.f32 %v1005, %v1165
        %v1167 = vpop.f32.mrb[0].mxu0
        %1168 = vmatprep.mubr.bf16.mxu0 %v838
        %1169 = vmatmul.mubr.bf16.gmra.mrb[0].mxu0 %v837
        %v1170 = vpop.f32.mrb[0].mxu0
        %v1171 = vadd.f32 %v1010, %v1170
        %v1172 = vpop.f32.mrb[0].mxu0
        %v1173 = vpop.f32.mrb[0].mxu0
        %v1174 = vadd.f32 %v1013, %v1173
        %v1175 = vpop.f32.mrb[0].mxu0
        %1176 = vmatprep.mubr.bf16.mxu0 %v842
        %1177 = vmatmul.mubr.bf16.gmra.mrb[0].mxu0 %v841
        %v1178 = vpop.f32.mrb[0].mxu0
        %v1179 = vadd.f32 %v1018, %v1178
        %v1180 = vpop.f32.mrb[0].mxu0
        %v1181 = vpop.f32.mrb[0].mxu0
        %v1182 = vadd.f32 %v1021, %v1181
        %v1183 = vpop.f32.mrb[0].mxu0
        %1184 = vmatprep.mubr.bf16.mxu0 %v846
        %1185 = vmatmul.mubr.bf16.gmra.mrb[0].mxu0 %v845
        %v1186 = vpop.f32.mrb[0].mxu0
        %v1187 = vadd.f32 %v1026, %v1186
        %v1188 = vpop.f32.mrb[0].mxu0
        %v1189 = vpop.f32.mrb[0].mxu0
        %v1190 = vadd.f32 %v1029, %v1189
        %v1191 = vpop.f32.mrb[0].mxu0
        %1192 = vmatprep.mubr.bf16.mxu0 %v850
        %1193 = vmatmul.mubr.bf16.gmra.mrb[0].mxu0 %v849
        %v1194 = vpop.f32.mrb[0].mxu0
        %v1195 = vadd.f32 %v1034, %v1194
        %v1196 = vpop.f32.mrb[0].mxu0
        %v1197 = vpop.f32.mrb[0].mxu0
        %v1198 = vadd.f32 %v1037, %v1197
        %v1199 = vpop.f32.mrb[0].mxu0
        %1200 = vmatprep.mubr.bf16.mxu0 %v854
        %1201 = vmatmul.mubr.bf16.gmra.mrb[0].mxu0 %v853
        %v1202 = vpop.f32.mrb[0].mxu0
        %v1203 = vadd.f32 %v1042, %v1202
        %v1204 = vpop.f32.mrb[0].mxu0
        %v1205 = vpop.f32.mrb[0].mxu0
        %v1206 = vadd.f32 %v1045, %v1205
        %v1207 = vpop.f32.mrb[0].mxu0
        %1208 = vdwg.mxu0
        %s1209 = scalar_lea.vmem [#allocation2], %s209
        %v1210 = vld [vmem:[%s1209] sm:$0xff]
        %v1211 = vld [vmem:[%s1209 + $0x8] sm:$0xff]
        %v1212 = vld [vmem:[%s1209 + $0x10] sm:$0xff]
        %v1213 = vld [vmem:[%s1209 + $0x18] sm:$0xff]
        %v1214 = vld [vmem:[%s1209 + $0x20] sm:$0xff]
        %v1215 = vld [vmem:[%s1209 + $0x28] sm:$0xff]
        %v1216 = vld [vmem:[%s1209 + $0x30] sm:$0xff]
        %v1217 = vld [vmem:[%s1209 + $0x38] sm:$0xff]
        %v1218 = vld [vmem:[%s1209 + $0x40] sm:$0xff]
        %v1219 = vld [vmem:[%s1209 + $0x48] sm:$0xff]
        %v1220 = vld [vmem:[%s1209 + $0x50] sm:$0xff]
        %v1221 = vld [vmem:[%s1209 + $0x58] sm:$0xff]
        %v1222 = vld [vmem:[%s1209 + $0x60] sm:$0xff]
        %v1223 = vld [vmem:[%s1209 + $0x68] sm:$0xff]
        %v1224 = vld [vmem:[%s1209 + $0x70] sm:$0xff]
        %v1225 = vld [vmem:[%s1209 + $0x78] sm:$0xff]
        %v1226 = vld [vmem:[%s1209 + $0x80] sm:$0xff]
        %v1227 = vld [vmem:[%s1209 + $0x88] sm:$0xff]
        %v1228 = vld [vmem:[%s1209 + $0x90] sm:$0xff]
        %v1229 = vld [vmem:[%s1209 + $0x98] sm:$0xff]
        %v1230 = vld [vmem:[%s1209 + $0xa0] sm:$0xff]
        %v1231 = vld [vmem:[%s1209 + $0xa8] sm:$0xff]
        %v1232 = vld [vmem:[%s1209 + $0xb0] sm:$0xff]
        %v1233 = vld [vmem:[%s1209 + $0xb8] sm:$0xff]
        %v1234 = vld [vmem:[%s1209 + $0xc0] sm:$0xff]
        %v1235 = vld [vmem:[%s1209 + $0xc8] sm:$0xff]
        %v1236 = vld [vmem:[%s1209 + $0xd0] sm:$0xff]
        %v1237 = vld [vmem:[%s1209 + $0xd8] sm:$0xff]
        %v1238 = vld [vmem:[%s1209 + $0xe0] sm:$0xff]
        %v1239 = vld [vmem:[%s1209 + $0xe8] sm:$0xff]
        %v1240 = vld [vmem:[%s1209 + $0xf0] sm:$0xff]
        %v1241 = vld [vmem:[%s1209 + $0xf8] sm:$0xff]
        %v1242 = vld [vmem:[#allocation8] sm:$0xff]
        %v1243 = vld [vmem:[#allocation8 + $0x8] sm:$0xf]
        %v1244 = vld [vmem:[#allocation8 + $0xc] sm:$0xff]
        %v1245 = vld [vmem:[#allocation8 + $0x14] sm:$0xf]
        %v1246 = vld [vmem:[#allocation8 + $0x18] sm:$0xff]
        %v1247 = vld [vmem:[#allocation8 + $0x20] sm:$0xf]
        %v1248 = vld [vmem:[#allocation8 + $0x24] sm:$0xff]
        %v1249 = vld [vmem:[#allocation8 + $0x2c] sm:$0xf]
        %v1250 = vld [vmem:[#allocation8 + $0x30] sm:$0xff]
        %v1251 = vld [vmem:[#allocation8 + $0x38] sm:$0xf]
        %v1252 = vld [vmem:[#allocation8 + $0x3c] sm:$0xff]
        %v1253 = vld [vmem:[#allocation8 + $0x44] sm:$0xf]
        %v1254 = vld [vmem:[#allocation8 + $0x48] sm:$0xff]
        %v1255 = vld [vmem:[#allocation8 + $0x50] sm:$0xf]
        %v1256 = vld [vmem:[#allocation8 + $0x54] sm:$0xff]
        %v1257 = vld [vmem:[#allocation8 + $0x5c] sm:$0xf]
        %v1258 = vld [vmem:[#allocation8 + $0x60] sm:$0xff]
        %v1259 = vld [vmem:[#allocation8 + $0x68] sm:$0xf]
        %v1260 = vld [vmem:[#allocation8 + $0x6c] sm:$0xff]
        %v1261 = vld [vmem:[#allocation8 + $0x74] sm:$0xf]
        %v1262 = vld [vmem:[#allocation8 + $0x78] sm:$0xff]
        %v1263 = vld [vmem:[#allocation8 + $0x80] sm:$0xf]
        %v1264 = vld [vmem:[#allocation8 + $0x84] sm:$0xff]
        %v1265 = vld [vmem:[#allocation8 + $0x8c] sm:$0xf]
        %v1266 = vld [vmem:[#allocation8 + $0x90] sm:$0xff]
        %v1267 = vld [vmem:[#allocation8 + $0x98] sm:$0xf]
        %v1268 = vld [vmem:[#allocation8 + $0x9c] sm:$0xff]
        %v1269 = vld [vmem:[#allocation8 + $0xa4] sm:$0xf]
        %v1270 = vld [vmem:[#allocation8 + $0xa8] sm:$0xff]
        %v1271 = vld [vmem:[#allocation8 + $0xb0] sm:$0xf]
        %v1272 = vld [vmem:[#allocation8 + $0xb4] sm:$0xff]
        %v1273 = vld [vmem:[#allocation8 + $0xbc] sm:$0xf]
        %v1274 = vpack.c.bf16 %v1086, %v1083
        %v1275 = vpack.c.bf16 %v1094, %v1091
        %v1276 = vpack.c.bf16 %v1102, %v1099
        %v1277 = vpack.c.bf16 %v1110, %v1107
        %v1278 = vpack.c.bf16 %v1118, %v1115
        %v1279 = vpack.c.bf16 %v1126, %v1123
        %v1280 = vpack.c.bf16 %v1134, %v1131
        %v1281 = vpack.c.bf16 %v1142, %v1139
        %v1282 = vpack.c.bf16 %v1150, %v1147
        %v1283 = vpack.c.bf16 %v1158, %v1155
        %v1284 = vpack.c.bf16 %v1166, %v1163
        %v1285 = vpack.c.bf16 %v1174, %v1171
        %v1286 = vpack.c.bf16 %v1182, %v1179
        %v1287 = vpack.c.bf16 %v1190, %v1187
        %v1288 = vpack.c.bf16 %v1198, %v1195
        %v1289 = vpack.c.bf16 %v1206, %v1203
        %v1290 = vld [vmem:[%s5] sm:$0x7]
        %v1292 = vlaneseq
        %v1293 = vshrl.u32 %v1292, 7
        %v1294 = vsub.s32 0, %v1293
        %v1295 = vrot.slane %v1290, %v1294
        %v1296 = vlaneseq
        %v1297 = vshrl.u32 %v1296, 7
        %v1298 = vsub.s32 1, %v1297
        %v1299 = vrot.slane %v1290, %v1298
        %v1300 = vlaneseq
        %v1301 = vshrl.u32 %v1300, 7
        %v1302 = vsub.s32 2, %v1301
        %v1303 = vrot.slane %v1290, %v1302
        %v1339 = vunpack.c.l.b16 %v1242
        %v1340 = vunpack.c.h.b16 %v1242
        %v1341 = vunpack.c.l.b16 %v1243
        %v1342 = vunpack.c.l.b16 %v1244
        %v1343 = vunpack.c.h.b16 %v1244
        %v1344 = vunpack.c.l.b16 %v1245
        %v1345 = vunpack.c.l.b16 %v1246
        %v1346 = vunpack.c.h.b16 %v1246
        %v1347 = vunpack.c.l.b16 %v1247
        %v1348 = vunpack.c.l.b16 %v1248
        %v1349 = vunpack.c.h.b16 %v1248
        %v1350 = vunpack.c.l.b16 %v1249
        %v1351 = vunpack.c.l.b16 %v1250
        %v1352 = vunpack.c.h.b16 %v1250
        %v1353 = vunpack.c.l.b16 %v1251
        %v1354 = vunpack.c.l.b16 %v1252
        %v1355 = vunpack.c.h.b16 %v1252
        %v1356 = vunpack.c.l.b16 %v1253
        %v1357 = vunpack.c.l.b16 %v1254
        %v1358 = vunpack.c.h.b16 %v1254
        %v1359 = vunpack.c.l.b16 %v1255
        %v1360 = vunpack.c.l.b16 %v1256
        %v1361 = vunpack.c.h.b16 %v1256
        %v1362 = vunpack.c.l.b16 %v1257
        %v1363 = vunpack.c.l.b16 %v1258
        %v1364 = vunpack.c.h.b16 %v1258
        %v1365 = vunpack.c.l.b16 %v1259
        %v1366 = vunpack.c.l.b16 %v1260
        %v1367 = vunpack.c.h.b16 %v1260
        %v1368 = vunpack.c.l.b16 %v1261
        %v1369 = vunpack.c.l.b16 %v1262
        %v1370 = vunpack.c.h.b16 %v1262
        %v1371 = vunpack.c.l.b16 %v1263
        %v1372 = vunpack.c.l.b16 %v1264
        %v1373 = vunpack.c.h.b16 %v1264
        %v1374 = vunpack.c.l.b16 %v1265
        %v1375 = vunpack.c.l.b16 %v1266
        %v1376 = vunpack.c.h.b16 %v1266
        %v1377 = vunpack.c.l.b16 %v1267
        %v1378 = vunpack.c.l.b16 %v1268
        %v1379 = vunpack.c.h.b16 %v1268
        %v1380 = vunpack.c.l.b16 %v1269
        %v1381 = vunpack.c.l.b16 %v1270
        %v1382 = vunpack.c.h.b16 %v1270
        %v1383 = vunpack.c.l.b16 %v1271
        %v1384 = vunpack.c.l.b16 %v1272
        %v1385 = vunpack.c.h.b16 %v1272
        %v1386 = vunpack.c.l.b16 %v1273
        %v1387 = vpack.c.b16 %v1342, %v1339
        %v1388 = vpack.c.b16 %v1343, %v1340
        %v1389 = vpack.c.b16 %v1344, %v1341
        %v1390 = vpack.c.b16 %v1348, %v1345
        %v1391 = vpack.c.b16 %v1349, %v1346
        %v1392 = vpack.c.b16 %v1350, %v1347
        %v1393 = vpack.c.b16 %v1354, %v1351
        %v1394 = vpack.c.b16 %v1355, %v1352
        %v1395 = vpack.c.b16 %v1356, %v1353
        %v1396 = vpack.c.b16 %v1360, %v1357
        %v1397 = vpack.c.b16 %v1361, %v1358
        %v1398 = vpack.c.b16 %v1362, %v1359
        %v1399 = vpack.c.b16 %v1366, %v1363
        %v1400 = vpack.c.b16 %v1367, %v1364
        %v1401 = vpack.c.b16 %v1368, %v1365
        %v1402 = vpack.c.b16 %v1372, %v1369
        %v1403 = vpack.c.b16 %v1373, %v1370
        %v1404 = vpack.c.b16 %v1374, %v1371
        %v1405 = vpack.c.b16 %v1378, %v1375
        %v1406 = vpack.c.b16 %v1379, %v1376
        %v1407 = vpack.c.b16 %v1380, %v1377
        %v1408 = vpack.c.b16 %v1384, %v1381
        %v1409 = vpack.c.b16 %v1385, %v1382
        %v1410 = vpack.c.b16 %v1386, %v1383
        %1435 = vmatprep.subr.bf16.mxu0 %v1388
        %1436 = vmatpush1.bf16.msra.mxu0 %v1387
        %1437 = vmatprep.subr.bf16.mxu0 %v1391
        %1438 = vmatpush1.bf16.msra.mxu0 %v1390
        %1439 = vmatprep.subr.bf16.mxu0 %v1394
        %1440 = vmatpush1.bf16.msra.mxu0 %v1393
        %1441 = vmatprep.subr.bf16.mxu0 %v1397
        %1442 = vmatpush1.bf16.msra.mxu0 %v1396
        %1443 = vmatprep.subr.bf16.mxu0 %v1400
        %1444 = vmatpush1.bf16.msra.mxu0 %v1399
        %1445 = vmatprep.subr.bf16.mxu0 %v1403
        %1446 = vmatpush1.bf16.msra.mxu0 %v1402
        %1447 = vmatprep.subr.bf16.mxu0 %v1406
        %1448 = vmatpush1.bf16.msra.mxu0 %v1405
        %1449 = vmatprep.subr.bf16.mxu0 %v1409
        %1450 = vmatpush1.bf16.msra.mxu0 %v1408
        %1451 = vmatprep.subr.bf16.mxu0 0
        %1452 = vmatpush1.bf16.msra.mxu0 0
        %1453 = vmatprep.subr.bf16.mxu0 0
        %1454 = vmatpush1.bf16.msra.mxu0 0
        %1455 = vmatprep.subr.bf16.mxu0 0
        %1456 = vmatpush1.bf16.msra.mxu0 0
        %1457 = vmatprep.subr.bf16.mxu0 0
        %1458 = vmatpush1.bf16.msra.mxu0 0
        %1459 = vmatprep.subr.bf16.mxu0 0
        %1460 = vmatpush1.bf16.msra.mxu0 0
        %1461 = vmatprep.subr.bf16.mxu0 0
        %1462 = vmatpush1.bf16.msra.mxu0 0
        %1463 = vmatprep.subr.bf16.mxu0 0
        %1464 = vmatpush1.bf16.msra.mxu0 0
        %1465 = vmatprep.subr.bf16.mxu0 0
        %1466 = vmatpush1.bf16.msra.mxu0 0
        %1467 = vmatprep.mubr.bf16.mxu0 0
        %1468 = vmatmul.mubr.bf16.gmra.mrb[0].mxu0 %v1274
        %v1469 = vpop.f32.mrb[0].mxu0
        %v1470 = vadd.f32 %v1295, %v1469
        %v1471 = vpop.f32.mrb[0].mxu0
        %v1472 = vadd.f32 %v1299, %v1471
        %v1473 = vpop.f32.mrb[0].mxu0
        %v1474 = vadd.f32 %v1295, %v1473
        %v1475 = vpop.f32.mrb[0].mxu0
        %v1476 = vadd.f32 %v1299, %v1475
        %1477 = vmatprep.mubr.bf16.mxu0 0
        %1478 = vmatmul.mubr.bf16.gmra.mrb[0].mxu0 %v1275
        %v1479 = vpop.f32.mrb[0].mxu0
        %v1480 = vadd.f32 %v1295, %v1479
        %v1481 = vpop.f32.mrb[0].mxu0
        %v1482 = vadd.f32 %v1299, %v1481
        %v1483 = vpop.f32.mrb[0].mxu0
        %v1484 = vadd.f32 %v1295, %v1483
        %v1485 = vpop.f32.mrb[0].mxu0
        %v1486 = vadd.f32 %v1299, %v1485
        %1487 = vmatprep.mubr.bf16.mxu0 0
        %1488 = vmatmul.mubr.bf16.gmra.mrb[0].mxu0 %v1276
        %v1489 = vpop.f32.mrb[0].mxu0
        %v1490 = vadd.f32 %v1295, %v1489
        %v1491 = vpop.f32.mrb[0].mxu0
        %v1492 = vadd.f32 %v1299, %v1491
        %v1493 = vpop.f32.mrb[0].mxu0
        %v1494 = vadd.f32 %v1295, %v1493
        %v1495 = vpop.f32.mrb[0].mxu0
        %v1496 = vadd.f32 %v1299, %v1495
        %1497 = vmatprep.mubr.bf16.mxu0 0
        %1498 = vmatmul.mubr.bf16.gmra.mrb[0].mxu0 %v1277
        %v1499 = vpop.f32.mrb[0].mxu0
        %v1500 = vadd.f32 %v1295, %v1499
        %v1501 = vpop.f32.mrb[0].mxu0
        %v1502 = vadd.f32 %v1299, %v1501
        %v1503 = vpop.f32.mrb[0].mxu0
        %v1504 = vadd.f32 %v1295, %v1503
        %v1505 = vpop.f32.mrb[0].mxu0
        %v1506 = vadd.f32 %v1299, %v1505
        %1507 = vmatprep.mubr.bf16.mxu0 0
        %1508 = vmatmul.mubr.bf16.gmra.mrb[0].mxu0 %v1278
        %v1509 = vpop.f32.mrb[0].mxu0
        %v1510 = vadd.f32 %v1295, %v1509
        %v1511 = vpop.f32.mrb[0].mxu0
        %v1512 = vadd.f32 %v1299, %v1511
        %v1513 = vpop.f32.mrb[0].mxu0
        %v1514 = vadd.f32 %v1295, %v1513
        %v1515 = vpop.f32.mrb[0].mxu0
        %v1516 = vadd.f32 %v1299, %v1515
        %1517 = vmatprep.mubr.bf16.mxu0 0
        %1518 = vmatmul.mubr.bf16.gmra.mrb[0].mxu0 %v1279
        %v1519 = vpop.f32.mrb[0].mxu0
        %v1520 = vadd.f32 %v1295, %v1519
        %v1521 = vpop.f32.mrb[0].mxu0
        %v1522 = vadd.f32 %v1299, %v1521
        %v1523 = vpop.f32.mrb[0].mxu0
        %v1524 = vadd.f32 %v1295, %v1523
        %v1525 = vpop.f32.mrb[0].mxu0
        %v1526 = vadd.f32 %v1299, %v1525
        %1527 = vmatprep.mubr.bf16.mxu0 0
        %1528 = vmatmul.mubr.bf16.gmra.mrb[0].mxu0 %v1280
        %v1529 = vpop.f32.mrb[0].mxu0
        %v1530 = vadd.f32 %v1295, %v1529
        %v1531 = vpop.f32.mrb[0].mxu0
        %v1532 = vadd.f32 %v1299, %v1531
        %v1533 = vpop.f32.mrb[0].mxu0
        %v1534 = vadd.f32 %v1295, %v1533
        %v1535 = vpop.f32.mrb[0].mxu0
        %v1536 = vadd.f32 %v1299, %v1535
        %1537 = vmatprep.mubr.bf16.mxu0 0
        %1538 = vmatmul.mubr.bf16.gmra.mrb[0].mxu0 %v1281
        %v1539 = vpop.f32.mrb[0].mxu0
        %v1540 = vadd.f32 %v1295, %v1539
        %v1541 = vpop.f32.mrb[0].mxu0
        %v1542 = vadd.f32 %v1299, %v1541
        %v1543 = vpop.f32.mrb[0].mxu0
        %v1544 = vadd.f32 %v1295, %v1543
        %v1545 = vpop.f32.mrb[0].mxu0
        %v1546 = vadd.f32 %v1299, %v1545
        %1547 = vmatprep.mubr.bf16.mxu0 0
        %1548 = vmatmul.mubr.bf16.gmra.mrb[0].mxu0 %v1282
        %v1549 = vpop.f32.mrb[0].mxu0
        %v1550 = vadd.f32 %v1295, %v1549
        %v1551 = vpop.f32.mrb[0].mxu0
        %v1552 = vadd.f32 %v1299, %v1551
        %v1553 = vpop.f32.mrb[0].mxu0
        %v1554 = vadd.f32 %v1295, %v1553
        %v1555 = vpop.f32.mrb[0].mxu0
        %v1556 = vadd.f32 %v1299, %v1555
        %1557 = vmatprep.mubr.bf16.mxu0 0
        %1558 = vmatmul.mubr.bf16.gmra.mrb[0].mxu0 %v1283
        %v1559 = vpop.f32.mrb[0].mxu0
        %v1560 = vadd.f32 %v1295, %v1559
        %v1561 = vpop.f32.mrb[0].mxu0
        %v1562 = vadd.f32 %v1299, %v1561
        %v1563 = vpop.f32.mrb[0].mxu0
        %v1564 = vadd.f32 %v1295, %v1563
        %v1565 = vpop.f32.mrb[0].mxu0
        %v1566 = vadd.f32 %v1299, %v1565
        %1567 = vmatprep.mubr.bf16.mxu0 0
        %1568 = vmatmul.mubr.bf16.gmra.mrb[0].mxu0 %v1284
        %v1569 = vpop.f32.mrb[0].mxu0
        %v1570 = vadd.f32 %v1295, %v1569
        %v1571 = vpop.f32.mrb[0].mxu0
        %v1572 = vadd.f32 %v1299, %v1571
        %v1573 = vpop.f32.mrb[0].mxu0
        %v1574 = vadd.f32 %v1295, %v1573
        %v1575 = vpop.f32.mrb[0].mxu0
        %v1576 = vadd.f32 %v1299, %v1575
        %1577 = vmatprep.mubr.bf16.mxu0 0
        %1578 = vmatmul.mubr.bf16.gmra.mrb[0].mxu0 %v1285
        %v1579 = vpop.f32.mrb[0].mxu0
        %v1580 = vadd.f32 %v1295, %v1579
        %v1581 = vpop.f32.mrb[0].mxu0
        %v1582 = vadd.f32 %v1299, %v1581
        %v1583 = vpop.f32.mrb[0].mxu0
        %v1584 = vadd.f32 %v1295, %v1583
        %v1585 = vpop.f32.mrb[0].mxu0
        %v1586 = vadd.f32 %v1299, %v1585
        %1587 = vmatprep.mubr.bf16.mxu0 0
        %1588 = vmatmul.mubr.bf16.gmra.mrb[0].mxu0 %v1286
        %v1589 = vpop.f32.mrb[0].mxu0
        %v1590 = vadd.f32 %v1295, %v1589
        %v1591 = vpop.f32.mrb[0].mxu0
        %v1592 = vadd.f32 %v1299, %v1591
        %v1593 = vpop.f32.mrb[0].mxu0
        %v1594 = vadd.f32 %v1295, %v1593
        %v1595 = vpop.f32.mrb[0].mxu0
        %v1596 = vadd.f32 %v1299, %v1595
        %1597 = vmatprep.mubr.bf16.mxu0 0
        %1598 = vmatmul.mubr.bf16.gmra.mrb[0].mxu0 %v1287
        %v1599 = vpop.f32.mrb[0].mxu0
        %v1600 = vadd.f32 %v1295, %v1599
        %v1601 = vpop.f32.mrb[0].mxu0
        %v1602 = vadd.f32 %v1299, %v1601
        %v1603 = vpop.f32.mrb[0].mxu0
        %v1604 = vadd.f32 %v1295, %v1603
        %v1605 = vpop.f32.mrb[0].mxu0
        %v1606 = vadd.f32 %v1299, %v1605
        %1607 = vmatprep.mubr.bf16.mxu0 0
        %1608 = vmatmul.mubr.bf16.gmra.mrb[0].mxu0 %v1288
        %v1609 = vpop.f32.mrb[0].mxu0
        %v1610 = vadd.f32 %v1295, %v1609
        %v1611 = vpop.f32.mrb[0].mxu0
        %v1612 = vadd.f32 %v1299, %v1611
        %v1613 = vpop.f32.mrb[0].mxu0
        %v1614 = vadd.f32 %v1295, %v1613
        %v1615 = vpop.f32.mrb[0].mxu0
        %v1616 = vadd.f32 %v1299, %v1615
        %1617 = vmatprep.mubr.bf16.mxu0 0
        %1618 = vmatmul.mubr.bf16.gmra.mrb[0].mxu0 %v1289
        %v1619 = vpop.f32.mrb[0].mxu0
        %v1620 = vadd.f32 %v1295, %v1619
        %v1621 = vpop.f32.mrb[0].mxu0
        %v1622 = vadd.f32 %v1299, %v1621
        %v1623 = vpop.f32.mrb[0].mxu0
        %v1624 = vadd.f32 %v1295, %v1623
        %v1625 = vpop.f32.mrb[0].mxu0
        %v1626 = vadd.f32 %v1299, %v1625
        %1627 = vdwg.mxu0
        %1628 = vmatprep.subr.bf16.mxu0 0
        %1629 = vmatpush1.bf16.msra.mxu0 %v1389
        %1630 = vmatprep.subr.bf16.mxu0 0
        %1631 = vmatpush1.bf16.msra.mxu0 %v1392
        %1632 = vmatprep.subr.bf16.mxu0 0
        %1633 = vmatpush1.bf16.msra.mxu0 %v1395
        %1634 = vmatprep.subr.bf16.mxu0 0
        %1635 = vmatpush1.bf16.msra.mxu0 %v1398
        %1636 = vmatprep.subr.bf16.mxu0 0
        %1637 = vmatpush1.bf16.msra.mxu0 %v1401
        %1638 = vmatprep.subr.bf16.mxu0 0
        %1639 = vmatpush1.bf16.msra.mxu0 %v1404
        %1640 = vmatprep.subr.bf16.mxu0 0
        %1641 = vmatpush1.bf16.msra.mxu0 %v1407
        %1642 = vmatprep.subr.bf16.mxu0 0
        %1643 = vmatpush1.bf16.msra.mxu0 %v1410
        %1644 = vmatprep.subr.bf16.mxu0 0
        %1645 = vmatpush1.bf16.msra.mxu0 0
        %1646 = vmatprep.subr.bf16.mxu0 0
        %1647 = vmatpush1.bf16.msra.mxu0 0
        %1648 = vmatprep.subr.bf16.mxu0 0
        %1649 = vmatpush1.bf16.msra.mxu0 0
        %1650 = vmatprep.subr.bf16.mxu0 0
        %1651 = vmatpush1.bf16.msra.mxu0 0
        %1652 = vmatprep.subr.bf16.mxu0 0
        %1653 = vmatpush1.bf16.msra.mxu0 0
        %1654 = vmatprep.subr.bf16.mxu0 0
        %1655 = vmatpush1.bf16.msra.mxu0 0
        %1656 = vmatprep.subr.bf16.mxu0 0
        %1657 = vmatpush1.bf16.msra.mxu0 0
        %1658 = vmatprep.subr.bf16.mxu0 0
        %1659 = vmatpush1.bf16.msra.mxu0 0
        %1660 = vmatprep.mubr.bf16.mxu0 0
        %1661 = vmatmul.mubr.bf16.gmra.mrb[0].mxu0 %v1274
        %v1662 = vpop.f32.mrb[0].mxu0
        %v1663 = vadd.f32 %v1303, %v1662
        %v1664 = vpop.f32.mrb[0].mxu0
        %v1665 = vpop.f32.mrb[0].mxu0
        %v1666 = vadd.f32 %v1303, %v1665
        %v1667 = vpop.f32.mrb[0].mxu0
        %1668 = vmatprep.mubr.bf16.mxu0 0
        %1669 = vmatmul.mubr.bf16.gmra.mrb[0].mxu0 %v1275
        %v1670 = vpop.f32.mrb[0].mxu0
        %v1671 = vadd.f32 %v1303, %v1670
        %v1672 = vpop.f32.mrb[0].mxu0
        %v1673 = vpop.f32.mrb[0].mxu0
        %v1674 = vadd.f32 %v1303, %v1673
        %v1675 = vpop.f32.mrb[0].mxu0
        %1676 = vmatprep.mubr.bf16.mxu0 0
        %1677 = vmatmul.mubr.bf16.gmra.mrb[0].mxu0 %v1276
        %v1678 = vpop.f32.mrb[0].mxu0
        %v1679 = vadd.f32 %v1303, %v1678
        %v1680 = vpop.f32.mrb[0].mxu0
        %v1681 = vpop.f32.mrb[0].mxu0
        %v1682 = vadd.f32 %v1303, %v1681
        %v1683 = vpop.f32.mrb[0].mxu0
        %1684 = vmatprep.mubr.bf16.mxu0 0
        %1685 = vmatmul.mubr.bf16.gmra.mrb[0].mxu0 %v1277
        %v1686 = vpop.f32.mrb[0].mxu0
        %v1687 = vadd.f32 %v1303, %v1686
        %v1688 = vpop.f32.mrb[0].mxu0
        %v1689 = vpop.f32.mrb[0].mxu0
        %v1690 = vadd.f32 %v1303, %v1689
        %v1691 = vpop.f32.mrb[0].mxu0
        %1692 = vmatprep.mubr.bf16.mxu0 0
        %1693 = vmatmul.mubr.bf16.gmra.mrb[0].mxu0 %v1278
        %v1694 = vpop.f32.mrb[0].mxu0
        %v1695 = vadd.f32 %v1303, %v1694
        %v1696 = vpop.f32.mrb[0].mxu0
        %v1697 = vpop.f32.mrb[0].mxu0
        %v1698 = vadd.f32 %v1303, %v1697
        %v1699 = vpop.f32.mrb[0].mxu0
        %1700 = vmatprep.mubr.bf16.mxu0 0
        %1701 = vmatmul.mubr.bf16.gmra.mrb[0].mxu0 %v1279
        %v1702 = vpop.f32.mrb[0].mxu0
        %v1703 = vadd.f32 %v1303, %v1702
        %v1704 = vpop.f32.mrb[0].mxu0
        %v1705 = vpop.f32.mrb[0].mxu0
        %v1706 = vadd.f32 %v1303, %v1705
        %v1707 = vpop.f32.mrb[0].mxu0
        %1708 = vmatprep.mubr.bf16.mxu0 0
        %1709 = vmatmul.mubr.bf16.gmra.mrb[0].mxu0 %v1280
        %v1710 = vpop.f32.mrb[0].mxu0
        %v1711 = vadd.f32 %v1303, %v1710
        %v1712 = vpop.f32.mrb[0].mxu0
        %v1713 = vpop.f32.mrb[0].mxu0
        %v1714 = vadd.f32 %v1303, %v1713
        %v1715 = vpop.f32.mrb[0].mxu0
        %1716 = vmatprep.mubr.bf16.mxu0 0
        %1717 = vmatmul.mubr.bf16.gmra.mrb[0].mxu0 %v1281
        %v1718 = vpop.f32.mrb[0].mxu0
        %v1719 = vadd.f32 %v1303, %v1718
        %v1720 = vpop.f32.mrb[0].mxu0
        %v1721 = vpop.f32.mrb[0].mxu0
        %v1722 = vadd.f32 %v1303, %v1721
        %v1723 = vpop.f32.mrb[0].mxu0
        %1724 = vmatprep.mubr.bf16.mxu0 0
        %1725 = vmatmul.mubr.bf16.gmra.mrb[0].mxu0 %v1282
        %v1726 = vpop.f32.mrb[0].mxu0
        %v1727 = vadd.f32 %v1303, %v1726
        %v1728 = vpop.f32.mrb[0].mxu0
        %v1729 = vpop.f32.mrb[0].mxu0
        %v1730 = vadd.f32 %v1303, %v1729
        %v1731 = vpop.f32.mrb[0].mxu0
        %1732 = vmatprep.mubr.bf16.mxu0 0
        %1733 = vmatmul.mubr.bf16.gmra.mrb[0].mxu0 %v1283
        %v1734 = vpop.f32.mrb[0].mxu0
        %v1735 = vadd.f32 %v1303, %v1734
        %v1736 = vpop.f32.mrb[0].mxu0
        %v1737 = vpop.f32.mrb[0].mxu0
        %v1738 = vadd.f32 %v1303, %v1737
        %v1739 = vpop.f32.mrb[0].mxu0
        %1740 = vmatprep.mubr.bf16.mxu0 0
        %1741 = vmatmul.mubr.bf16.gmra.mrb[0].mxu0 %v1284
        %v1742 = vpop.f32.mrb[0].mxu0
        %v1743 = vadd.f32 %v1303, %v1742
        %v1744 = vpop.f32.mrb[0].mxu0
        %v1745 = vpop.f32.mrb[0].mxu0
        %v1746 = vadd.f32 %v1303, %v1745
        %v1747 = vpop.f32.mrb[0].mxu0
        %1748 = vmatprep.mubr.bf16.mxu0 0
        %1749 = vmatmul.mubr.bf16.gmra.mrb[0].mxu0 %v1285
        %v1750 = vpop.f32.mrb[0].mxu0
        %v1751 = vadd.f32 %v1303, %v1750
        %v1752 = vpop.f32.mrb[0].mxu0
        %v1753 = vpop.f32.mrb[0].mxu0
        %v1754 = vadd.f32 %v1303, %v1753
        %v1755 = vpop.f32.mrb[0].mxu0
        %1756 = vmatprep.mubr.bf16.mxu0 0
        %1757 = vmatmul.mubr.bf16.gmra.mrb[0].mxu0 %v1286
        %v1758 = vpop.f32.mrb[0].mxu0
        %v1759 = vadd.f32 %v1303, %v1758
        %v1760 = vpop.f32.mrb[0].mxu0
        %v1761 = vpop.f32.mrb[0].mxu0
        %v1762 = vadd.f32 %v1303, %v1761
        %v1763 = vpop.f32.mrb[0].mxu0
        %1764 = vmatprep.mubr.bf16.mxu0 0
        %1765 = vmatmul.mubr.bf16.gmra.mrb[0].mxu0 %v1287
        %v1766 = vpop.f32.mrb[0].mxu0
        %v1767 = vadd.f32 %v1303, %v1766
        %v1768 = vpop.f32.mrb[0].mxu0
        %v1769 = vpop.f32.mrb[0].mxu0
        %v1770 = vadd.f32 %v1303, %v1769
        %v1771 = vpop.f32.mrb[0].mxu0
        %1772 = vmatprep.mubr.bf16.mxu0 0
        %1773 = vmatmul.mubr.bf16.gmra.mrb[0].mxu0 %v1288
        %v1774 = vpop.f32.mrb[0].mxu0
        %v1775 = vadd.f32 %v1303, %v1774
        %v1776 = vpop.f32.mrb[0].mxu0
        %v1777 = vpop.f32.mrb[0].mxu0
        %v1778 = vadd.f32 %v1303, %v1777
        %v1779 = vpop.f32.mrb[0].mxu0
        %1780 = vmatprep.mubr.bf16.mxu0 0
        %1781 = vmatmul.mubr.bf16.gmra.mrb[0].mxu0 %v1289
        %v1782 = vpop.f32.mrb[0].mxu0
        %v1783 = vadd.f32 %v1303, %v1782
        %v1784 = vpop.f32.mrb[0].mxu0
        %v1785 = vpop.f32.mrb[0].mxu0
        %v1786 = vadd.f32 %v1303, %v1785
        %v1787 = vpop.f32.mrb[0].mxu0
        %1788 = vdwg.mxu0
        %v1789 = vld [vmem:[#allocation10] sm:$0xff]
        %v1790 = vld [vmem:[#allocation10 + $0x8] sm:$0xf]
        %v1791 = vld [vmem:[#allocation10 + $0xc] sm:$0xff]
        %v1792 = vld [vmem:[#allocation10 + $0x14] sm:$0xf]
        %v1793 = vld [vmem:[#allocation10 + $0x18] sm:$0xff]
        %v1794 = vld [vmem:[#allocation10 + $0x20] sm:$0xf]
        %v1795 = vld [vmem:[#allocation10 + $0x24] sm:$0xff]
        %v1796 = vld [vmem:[#allocation10 + $0x2c] sm:$0xf]
        %v1797 = vld [vmem:[#allocation10 + $0x30] sm:$0xff]
        %v1798 = vld [vmem:[#allocation10 + $0x38] sm:$0xf]
        %v1799 = vld [vmem:[#allocation10 + $0x3c] sm:$0xff]
        %v1800 = vld [vmem:[#allocation10 + $0x44] sm:$0xf]
        %v1801 = vld [vmem:[#allocation10 + $0x48] sm:$0xff]
        %v1802 = vld [vmem:[#allocation10 + $0x50] sm:$0xf]
        %v1803 = vld [vmem:[#allocation10 + $0x54] sm:$0xff]
        %v1804 = vld [vmem:[#allocation10 + $0x5c] sm:$0xf]
        %v1805 = vld [vmem:[#allocation10 + $0x60] sm:$0xff]
        %v1806 = vld [vmem:[#allocation10 + $0x68] sm:$0xf]
        %v1807 = vld [vmem:[#allocation10 + $0x6c] sm:$0xff]
        %v1808 = vld [vmem:[#allocation10 + $0x74] sm:$0xf]
        %v1809 = vld [vmem:[#allocation10 + $0x78] sm:$0xff]
        %v1810 = vld [vmem:[#allocation10 + $0x80] sm:$0xf]
        %v1811 = vld [vmem:[#allocation10 + $0x84] sm:$0xff]
        %v1812 = vld [vmem:[#allocation10 + $0x8c] sm:$0xf]
        %v1813 = vld [vmem:[#allocation10 + $0x90] sm:$0xff]
        %v1814 = vld [vmem:[#allocation10 + $0x98] sm:$0xf]
        %v1815 = vld [vmem:[#allocation10 + $0x9c] sm:$0xff]
        %v1816 = vld [vmem:[#allocation10 + $0xa4] sm:$0xf]
        %v1817 = vld [vmem:[#allocation10 + $0xa8] sm:$0xff]
        %v1818 = vld [vmem:[#allocation10 + $0xb0] sm:$0xf]
        %v1819 = vld [vmem:[#allocation10 + $0xb4] sm:$0xff]
        %v1820 = vld [vmem:[#allocation10 + $0xbc] sm:$0xf]
        %v1821 = vpack.c.bf16 %v1211, %v1210
        %v1822 = vpack.c.bf16 %v1213, %v1212
        %v1823 = vpack.c.bf16 %v1215, %v1214
        %v1824 = vpack.c.bf16 %v1217, %v1216
        %v1825 = vpack.c.bf16 %v1219, %v1218
        %v1826 = vpack.c.bf16 %v1221, %v1220
        %v1827 = vpack.c.bf16 %v1223, %v1222
        %v1828 = vpack.c.bf16 %v1225, %v1224
        %v1829 = vpack.c.bf16 %v1227, %v1226
        %v1830 = vpack.c.bf16 %v1229, %v1228
        %v1831 = vpack.c.bf16 %v1231, %v1230
        %v1832 = vpack.c.bf16 %v1233, %v1232
        %v1833 = vpack.c.bf16 %v1235, %v1234
        %v1834 = vpack.c.bf16 %v1237, %v1236
        %v1835 = vpack.c.bf16 %v1239, %v1238
        %v1836 = vpack.c.bf16 %v1241, %v1240
        %v1837 = vld [vmem:[%s6] sm:$0x7]
        %v1839 = vlaneseq
        %v1840 = vshrl.u32 %v1839, 7
        %v1841 = vsub.s32 0, %v1840
        %v1842 = vrot.slane %v1837, %v1841
        %v1843 = vlaneseq
        %v1844 = vshrl.u32 %v1843, 7
        %v1845 = vsub.s32 1, %v1844
        %v1846 = vrot.slane %v1837, %v1845
        %v1847 = vlaneseq
        %v1848 = vshrl.u32 %v1847, 7
        %v1849 = vsub.s32 2, %v1848
        %v1850 = vrot.slane %v1837, %v1849
        %v1886 = vunpack.c.l.b16 %v1789
        %v1887 = vunpack.c.h.b16 %v1789
        %v1888 = vunpack.c.l.b16 %v1790
        %v1889 = vunpack.c.l.b16 %v1791
        %v1890 = vunpack.c.h.b16 %v1791
        %v1891 = vunpack.c.l.b16 %v1792
        %v1892 = vunpack.c.l.b16 %v1793
        %v1893 = vunpack.c.h.b16 %v1793
        %v1894 = vunpack.c.l.b16 %v1794
        %v1895 = vunpack.c.l.b16 %v1795
        %v1896 = vunpack.c.h.b16 %v1795
        %v1897 = vunpack.c.l.b16 %v1796
        %v1898 = vunpack.c.l.b16 %v1797
        %v1899 = vunpack.c.h.b16 %v1797
        %v1900 = vunpack.c.l.b16 %v1798
        %v1901 = vunpack.c.l.b16 %v1799
        %v1902 = vunpack.c.h.b16 %v1799
        %v1903 = vunpack.c.l.b16 %v1800
        %v1904 = vunpack.c.l.b16 %v1801
        %v1905 = vunpack.c.h.b16 %v1801
        %v1906 = vunpack.c.l.b16 %v1802
        %v1907 = vunpack.c.l.b16 %v1803
        %v1908 = vunpack.c.h.b16 %v1803
        %v1909 = vunpack.c.l.b16 %v1804
        %v1910 = vunpack.c.l.b16 %v1805
        %v1911 = vunpack.c.h.b16 %v1805
        %v1912 = vunpack.c.l.b16 %v1806
        %v1913 = vunpack.c.l.b16 %v1807
        %v1914 = vunpack.c.h.b16 %v1807
        %v1915 = vunpack.c.l.b16 %v1808
        %v1916 = vunpack.c.l.b16 %v1809
        %v1917 = vunpack.c.h.b16 %v1809
        %v1918 = vunpack.c.l.b16 %v1810
        %v1919 = vunpack.c.l.b16 %v1811
        %v1920 = vunpack.c.h.b16 %v1811
        %v1921 = vunpack.c.l.b16 %v1812
        %v1922 = vunpack.c.l.b16 %v1813
        %v1923 = vunpack.c.h.b16 %v1813
        %v1924 = vunpack.c.l.b16 %v1814
        %v1925 = vunpack.c.l.b16 %v1815
        %v1926 = vunpack.c.h.b16 %v1815
        %v1927 = vunpack.c.l.b16 %v1816
        %v1928 = vunpack.c.l.b16 %v1817
        %v1929 = vunpack.c.h.b16 %v1817
        %v1930 = vunpack.c.l.b16 %v1818
        %v1931 = vunpack.c.l.b16 %v1819
        %v1932 = vunpack.c.h.b16 %v1819
        %v1933 = vunpack.c.l.b16 %v1820
        %v1934 = vpack.c.b16 %v1889, %v1886
        %v1935 = vpack.c.b16 %v1890, %v1887
        %v1936 = vpack.c.b16 %v1891, %v1888
        %v1937 = vpack.c.b16 %v1895, %v1892
        %v1938 = vpack.c.b16 %v1896, %v1893
        %v1939 = vpack.c.b16 %v1897, %v1894
        %v1940 = vpack.c.b16 %v1901, %v1898
        %v1941 = vpack.c.b16 %v1902, %v1899
        %v1942 = vpack.c.b16 %v1903, %v1900
        %v1943 = vpack.c.b16 %v1907, %v1904
        %v1944 = vpack.c.b16 %v1908, %v1905
        %v1945 = vpack.c.b16 %v1909, %v1906
        %v1946 = vpack.c.b16 %v1913, %v1910
        %v1947 = vpack.c.b16 %v1914, %v1911
        %v1948 = vpack.c.b16 %v1915, %v1912
        %v1949 = vpack.c.b16 %v1919, %v1916
        %v1950 = vpack.c.b16 %v1920, %v1917
        %v1951 = vpack.c.b16 %v1921, %v1918
        %v1952 = vpack.c.b16 %v1925, %v1922
        %v1953 = vpack.c.b16 %v1926, %v1923
        %v1954 = vpack.c.b16 %v1927, %v1924
        %v1955 = vpack.c.b16 %v1931, %v1928
        %v1956 = vpack.c.b16 %v1932, %v1929
        %v1957 = vpack.c.b16 %v1933, %v1930
        %1982 = vmatprep.subr.bf16.mxu0 %v1935
        %1983 = vmatpush1.bf16.msra.mxu0 %v1934
        %1984 = vmatprep.subr.bf16.mxu0 %v1938
        %1985 = vmatpush1.bf16.msra.mxu0 %v1937
        %1986 = vmatprep.subr.bf16.mxu0 %v1941
        %1987 = vmatpush1.bf16.msra.mxu0 %v1940
        %1988 = vmatprep.subr.bf16.mxu0 %v1944
        %1989 = vmatpush1.bf16.msra.mxu0 %v1943
        %1990 = vmatprep.subr.bf16.mxu0 %v1947
        %1991 = vmatpush1.bf16.msra.mxu0 %v1946
        %1992 = vmatprep.subr.bf16.mxu0 %v1950
        %1993 = vmatpush1.bf16.msra.mxu0 %v1949
        %1994 = vmatprep.subr.bf16.mxu0 %v1953
        %1995 = vmatpush1.bf16.msra.mxu0 %v1952
        %1996 = vmatprep.subr.bf16.mxu0 %v1956
        %1997 = vmatpush1.bf16.msra.mxu0 %v1955
        %1998 = vmatprep.subr.bf16.mxu0 0
        %1999 = vmatpush1.bf16.msra.mxu0 0
        %2000 = vmatprep.subr.bf16.mxu0 0
        %2001 = vmatpush1.bf16.msra.mxu0 0
        %2002 = vmatprep.subr.bf16.mxu0 0
        %2003 = vmatpush1.bf16.msra.mxu0 0
        %2004 = vmatprep.subr.bf16.mxu0 0
        %2005 = vmatpush1.bf16.msra.mxu0 0
        %2006 = vmatprep.subr.bf16.mxu0 0
        %2007 = vmatpush1.bf16.msra.mxu0 0
        %2008 = vmatprep.subr.bf16.mxu0 0
        %2009 = vmatpush1.bf16.msra.mxu0 0
        %2010 = vmatprep.subr.bf16.mxu0 0
        %2011 = vmatpush1.bf16.msra.mxu0 0
        %2012 = vmatprep.subr.bf16.mxu0 0
        %2013 = vmatpush1.bf16.msra.mxu0 0
        %2014 = vmatprep.mubr.bf16.mxu0 0
        %2015 = vmatmul.mubr.bf16.gmra.mrb[0].mxu0 %v1821
        %v2016 = vpop.f32.mrb[0].mxu0
        %v2017 = vadd.f32 %v1842, %v2016
        %v2018 = vpop.f32.mrb[0].mxu0
        %v2019 = vadd.f32 %v1846, %v2018
        %v2020 = vpop.f32.mrb[0].mxu0
        %v2021 = vadd.f32 %v1842, %v2020
        %v2022 = vpop.f32.mrb[0].mxu0
        %v2023 = vadd.f32 %v1846, %v2022
        %2024 = vmatprep.mubr.bf16.mxu0 0
        %2025 = vmatmul.mubr.bf16.gmra.mrb[0].mxu0 %v1822
        %v2026 = vpop.f32.mrb[0].mxu0
        %v2027 = vadd.f32 %v1842, %v2026
        %v2028 = vpop.f32.mrb[0].mxu0
        %v2029 = vadd.f32 %v1846, %v2028
        %v2030 = vpop.f32.mrb[0].mxu0
        %v2031 = vadd.f32 %v1842, %v2030
        %v2032 = vpop.f32.mrb[0].mxu0
        %v2033 = vadd.f32 %v1846, %v2032
        %2034 = vmatprep.mubr.bf16.mxu0 0
        %2035 = vmatmul.mubr.bf16.gmra.mrb[0].mxu0 %v1823
        %v2036 = vpop.f32.mrb[0].mxu0
        %v2037 = vadd.f32 %v1842, %v2036
        %v2038 = vpop.f32.mrb[0].mxu0
        %v2039 = vadd.f32 %v1846, %v2038
        %v2040 = vpop.f32.mrb[0].mxu0
        %v2041 = vadd.f32 %v1842, %v2040
        %v2042 = vpop.f32.mrb[0].mxu0
        %v2043 = vadd.f32 %v1846, %v2042
        %2044 = vmatprep.mubr.bf16.mxu0 0
        %2045 = vmatmul.mubr.bf16.gmra.mrb[0].mxu0 %v1824
        %v2046 = vpop.f32.mrb[0].mxu0
        %v2047 = vadd.f32 %v1842, %v2046
        %v2048 = vpop.f32.mrb[0].mxu0
        %v2049 = vadd.f32 %v1846, %v2048
        %v2050 = vpop.f32.mrb[0].mxu0
        %v2051 = vadd.f32 %v1842, %v2050
        %v2052 = vpop.f32.mrb[0].mxu0
        %v2053 = vadd.f32 %v1846, %v2052
        %2054 = vmatprep.mubr.bf16.mxu0 0
        %2055 = vmatmul.mubr.bf16.gmra.mrb[0].mxu0 %v1825
        %v2056 = vpop.f32.mrb[0].mxu0
        %v2057 = vadd.f32 %v1842, %v2056
        %v2058 = vpop.f32.mrb[0].mxu0
        %v2059 = vadd.f32 %v1846, %v2058
        %v2060 = vpop.f32.mrb[0].mxu0
        %v2061 = vadd.f32 %v1842, %v2060
        %v2062 = vpop.f32.mrb[0].mxu0
        %v2063 = vadd.f32 %v1846, %v2062
        %2064 = vmatprep.mubr.bf16.mxu0 0
        %2065 = vmatmul.mubr.bf16.gmra.mrb[0].mxu0 %v1826
        %v2066 = vpop.f32.mrb[0].mxu0
        %v2067 = vadd.f32 %v1842, %v2066
        %v2068 = vpop.f32.mrb[0].mxu0
        %v2069 = vadd.f32 %v1846, %v2068
        %v2070 = vpop.f32.mrb[0].mxu0
        %v2071 = vadd.f32 %v1842, %v2070
        %v2072 = vpop.f32.mrb[0].mxu0
        %v2073 = vadd.f32 %v1846, %v2072
        %2074 = vmatprep.mubr.bf16.mxu0 0
        %2075 = vmatmul.mubr.bf16.gmra.mrb[0].mxu0 %v1827
        %v2076 = vpop.f32.mrb[0].mxu0
        %v2077 = vadd.f32 %v1842, %v2076
        %v2078 = vpop.f32.mrb[0].mxu0
        %v2079 = vadd.f32 %v1846, %v2078
        %v2080 = vpop.f32.mrb[0].mxu0
        %v2081 = vadd.f32 %v1842, %v2080
        %v2082 = vpop.f32.mrb[0].mxu0
        %v2083 = vadd.f32 %v1846, %v2082
        %2084 = vmatprep.mubr.bf16.mxu0 0
        %2085 = vmatmul.mubr.bf16.gmra.mrb[0].mxu0 %v1828
        %v2086 = vpop.f32.mrb[0].mxu0
        %v2087 = vadd.f32 %v1842, %v2086
        %v2088 = vpop.f32.mrb[0].mxu0
        %v2089 = vadd.f32 %v1846, %v2088
        %v2090 = vpop.f32.mrb[0].mxu0
        %v2091 = vadd.f32 %v1842, %v2090
        %v2092 = vpop.f32.mrb[0].mxu0
        %v2093 = vadd.f32 %v1846, %v2092
        %2094 = vmatprep.mubr.bf16.mxu0 0
        %2095 = vmatmul.mubr.bf16.gmra.mrb[0].mxu0 %v1829
        %v2096 = vpop.f32.mrb[0].mxu0
        %v2097 = vadd.f32 %v1842, %v2096
        %v2098 = vpop.f32.mrb[0].mxu0
        %v2099 = vadd.f32 %v1846, %v2098
        %v2100 = vpop.f32.mrb[0].mxu0
        %v2101 = vadd.f32 %v1842, %v2100
        %v2102 = vpop.f32.mrb[0].mxu0
        %v2103 = vadd.f32 %v1846, %v2102
        %2104 = vmatprep.mubr.bf16.mxu0 0
        %2105 = vmatmul.mubr.bf16.gmra.mrb[0].mxu0 %v1830
        %v2106 = vpop.f32.mrb[0].mxu0
        %v2107 = vadd.f32 %v1842, %v2106
        %v2108 = vpop.f32.mrb[0].mxu0
        %v2109 = vadd.f32 %v1846, %v2108
        %v2110 = vpop.f32.mrb[0].mxu0
        %v2111 = vadd.f32 %v1842, %v2110
        %v2112 = vpop.f32.mrb[0].mxu0
        %v2113 = vadd.f32 %v1846, %v2112
        %2114 = vmatprep.mubr.bf16.mxu0 0
        %2115 = vmatmul.mubr.bf16.gmra.mrb[0].mxu0 %v1831
        %v2116 = vpop.f32.mrb[0].mxu0
        %v2117 = vadd.f32 %v1842, %v2116
        %v2118 = vpop.f32.mrb[0].mxu0
        %v2119 = vadd.f32 %v1846, %v2118
        %v2120 = vpop.f32.mrb[0].mxu0
        %v2121 = vadd.f32 %v1842, %v2120
        %v2122 = vpop.f32.mrb[0].mxu0
        %v2123 = vadd.f32 %v1846, %v2122
        %2124 = vmatprep.mubr.bf16.mxu0 0
        %2125 = vmatmul.mubr.bf16.gmra.mrb[0].mxu0 %v1832
        %v2126 = vpop.f32.mrb[0].mxu0
        %v2127 = vadd.f32 %v1842, %v2126
        %v2128 = vpop.f32.mrb[0].mxu0
        %v2129 = vadd.f32 %v1846, %v2128
        %v2130 = vpop.f32.mrb[0].mxu0
        %v2131 = vadd.f32 %v1842, %v2130
        %v2132 = vpop.f32.mrb[0].mxu0
        %v2133 = vadd.f32 %v1846, %v2132
        %2134 = vmatprep.mubr.bf16.mxu0 0
        %2135 = vmatmul.mubr.bf16.gmra.mrb[0].mxu0 %v1833
        %v2136 = vpop.f32.mrb[0].mxu0
        %v2137 = vadd.f32 %v1842, %v2136
        %v2138 = vpop.f32.mrb[0].mxu0
        %v2139 = vadd.f32 %v1846, %v2138
        %v2140 = vpop.f32.mrb[0].mxu0
        %v2141 = vadd.f32 %v1842, %v2140
        %v2142 = vpop.f32.mrb[0].mxu0
        %v2143 = vadd.f32 %v1846, %v2142
        %2144 = vmatprep.mubr.bf16.mxu0 0
        %2145 = vmatmul.mubr.bf16.gmra.mrb[0].mxu0 %v1834
        %v2146 = vpop.f32.mrb[0].mxu0
        %v2147 = vadd.f32 %v1842, %v2146
        %v2148 = vpop.f32.mrb[0].mxu0
        %v2149 = vadd.f32 %v1846, %v2148
        %v2150 = vpop.f32.mrb[0].mxu0
        %v2151 = vadd.f32 %v1842, %v2150
        %v2152 = vpop.f32.mrb[0].mxu0
        %v2153 = vadd.f32 %v1846, %v2152
        %2154 = vmatprep.mubr.bf16.mxu0 0
        %2155 = vmatmul.mubr.bf16.gmra.mrb[0].mxu0 %v1835
        %v2156 = vpop.f32.mrb[0].mxu0
        %v2157 = vadd.f32 %v1842, %v2156
        %v2158 = vpop.f32.mrb[0].mxu0
        %v2159 = vadd.f32 %v1846, %v2158
        %v2160 = vpop.f32.mrb[0].mxu0
        %v2161 = vadd.f32 %v1842, %v2160
        %v2162 = vpop.f32.mrb[0].mxu0
        %v2163 = vadd.f32 %v1846, %v2162
        %2164 = vmatprep.mubr.bf16.mxu0 0
        %2165 = vmatmul.mubr.bf16.gmra.mrb[0].mxu0 %v1836
        %v2166 = vpop.f32.mrb[0].mxu0
        %v2167 = vadd.f32 %v1842, %v2166
        %v2168 = vpop.f32.mrb[0].mxu0
        %v2169 = vadd.f32 %v1846, %v2168
        %v2170 = vpop.f32.mrb[0].mxu0
        %v2171 = vadd.f32 %v1842, %v2170
        %v2172 = vpop.f32.mrb[0].mxu0
        %v2173 = vadd.f32 %v1846, %v2172
        %2174 = vdwg.mxu0
        %2175 = vmatprep.subr.bf16.mxu0 0
        %2176 = vmatpush1.bf16.msra.mxu0 %v1936
        %2177 = vmatprep.subr.bf16.mxu0 0
        %2178 = vmatpush1.bf16.msra.mxu0 %v1939
        %2179 = vmatprep.subr.bf16.mxu0 0
        %2180 = vmatpush1.bf16.msra.mxu0 %v1942
        %2181 = vmatprep.subr.bf16.mxu0 0
        %2182 = vmatpush1.bf16.msra.mxu0 %v1945
        %2183 = vmatprep.subr.bf16.mxu0 0
        %2184 = vmatpush1.bf16.msra.mxu0 %v1948
        %2185 = vmatprep.subr.bf16.mxu0 0
        %2186 = vmatpush1.bf16.msra.mxu0 %v1951
        %2187 = vmatprep.subr.bf16.mxu0 0
        %2188 = vmatpush1.bf16.msra.mxu0 %v1954
        %2189 = vmatprep.subr.bf16.mxu0 0
        %2190 = vmatpush1.bf16.msra.mxu0 %v1957
        %2191 = vmatprep.subr.bf16.mxu0 0
        %2192 = vmatpush1.bf16.msra.mxu0 0
        %2193 = vmatprep.subr.bf16.mxu0 0
        %2194 = vmatpush1.bf16.msra.mxu0 0
        %2195 = vmatprep.subr.bf16.mxu0 0
        %2196 = vmatpush1.bf16.msra.mxu0 0
        %2197 = vmatprep.subr.bf16.mxu0 0
        %2198 = vmatpush1.bf16.msra.mxu0 0
        %2199 = vmatprep.subr.bf16.mxu0 0
        %2200 = vmatpush1.bf16.msra.mxu0 0
        %2201 = vmatprep.subr.bf16.mxu0 0
        %2202 = vmatpush1.bf16.msra.mxu0 0
        %2203 = vmatprep.subr.bf16.mxu0 0
        %2204 = vmatpush1.bf16.msra.mxu0 0
        %2205 = vmatprep.subr.bf16.mxu0 0
        %2206 = vmatpush1.bf16.msra.mxu0 0
        %2207 = vmatprep.mubr.bf16.mxu0 0
        %2208 = vmatmul.mubr.bf16.gmra.mrb[0].mxu0 %v1821
        %v2209 = vpop.f32.mrb[0].mxu0
        %v2210 = vadd.f32 %v1850, %v2209
        %v2211 = vpop.f32.mrb[0].mxu0
        %v2212 = vpop.f32.mrb[0].mxu0
        %v2213 = vadd.f32 %v1850, %v2212
        %v2214 = vpop.f32.mrb[0].mxu0
        %2215 = vmatprep.mubr.bf16.mxu0 0
        %2216 = vmatmul.mubr.bf16.gmra.mrb[0].mxu0 %v1822
        %v2217 = vpop.f32.mrb[0].mxu0
        %v2218 = vadd.f32 %v1850, %v2217
        %v2219 = vpop.f32.mrb[0].mxu0
        %v2220 = vpop.f32.mrb[0].mxu0
        %v2221 = vadd.f32 %v1850, %v2220
        %v2222 = vpop.f32.mrb[0].mxu0
        %2223 = vmatprep.mubr.bf16.mxu0 0
        %2224 = vmatmul.mubr.bf16.gmra.mrb[0].mxu0 %v1823
        %v2225 = vpop.f32.mrb[0].mxu0
        %v2226 = vadd.f32 %v1850, %v2225
        %v2227 = vpop.f32.mrb[0].mxu0
        %v2228 = vpop.f32.mrb[0].mxu0
        %v2229 = vadd.f32 %v1850, %v2228
        %v2230 = vpop.f32.mrb[0].mxu0
        %2231 = vmatprep.mubr.bf16.mxu0 0
        %2232 = vmatmul.mubr.bf16.gmra.mrb[0].mxu0 %v1824
        %v2233 = vpop.f32.mrb[0].mxu0
        %v2234 = vadd.f32 %v1850, %v2233
        %v2235 = vpop.f32.mrb[0].mxu0
        %v2236 = vpop.f32.mrb[0].mxu0
        %v2237 = vadd.f32 %v1850, %v2236
        %v2238 = vpop.f32.mrb[0].mxu0
        %2239 = vmatprep.mubr.bf16.mxu0 0
        %2240 = vmatmul.mubr.bf16.gmra.mrb[0].mxu0 %v1825
        %v2241 = vpop.f32.mrb[0].mxu0
        %v2242 = vadd.f32 %v1850, %v2241
        %v2243 = vpop.f32.mrb[0].mxu0
        %v2244 = vpop.f32.mrb[0].mxu0
        %v2245 = vadd.f32 %v1850, %v2244
        %v2246 = vpop.f32.mrb[0].mxu0
        %2247 = vmatprep.mubr.bf16.mxu0 0
        %2248 = vmatmul.mubr.bf16.gmra.mrb[0].mxu0 %v1826
        %v2249 = vpop.f32.mrb[0].mxu0
        %v2250 = vadd.f32 %v1850, %v2249
        %v2251 = vpop.f32.mrb[0].mxu0
        %v2252 = vpop.f32.mrb[0].mxu0
        %v2253 = vadd.f32 %v1850, %v2252
        %v2254 = vpop.f32.mrb[0].mxu0
        %2255 = vmatprep.mubr.bf16.mxu0 0
        %2256 = vmatmul.mubr.bf16.gmra.mrb[0].mxu0 %v1827
        %v2257 = vpop.f32.mrb[0].mxu0
        %v2258 = vadd.f32 %v1850, %v2257
        %v2259 = vpop.f32.mrb[0].mxu0
        %v2260 = vpop.f32.mrb[0].mxu0
        %v2261 = vadd.f32 %v1850, %v2260
        %v2262 = vpop.f32.mrb[0].mxu0
        %2263 = vmatprep.mubr.bf16.mxu0 0
        %2264 = vmatmul.mubr.bf16.gmra.mrb[0].mxu0 %v1828
        %v2265 = vpop.f32.mrb[0].mxu0
        %v2266 = vadd.f32 %v1850, %v2265
        %v2267 = vpop.f32.mrb[0].mxu0
        %v2268 = vpop.f32.mrb[0].mxu0
        %v2269 = vadd.f32 %v1850, %v2268
        %v2270 = vpop.f32.mrb[0].mxu0
        %2271 = vmatprep.mubr.bf16.mxu0 0
        %2272 = vmatmul.mubr.bf16.gmra.mrb[0].mxu0 %v1829
        %v2273 = vpop.f32.mrb[0].mxu0
        %v2274 = vadd.f32 %v1850, %v2273
        %v2275 = vpop.f32.mrb[0].mxu0
        %v2276 = vpop.f32.mrb[0].mxu0
        %v2277 = vadd.f32 %v1850, %v2276
        %v2278 = vpop.f32.mrb[0].mxu0
        %2279 = vmatprep.mubr.bf16.mxu0 0
        %2280 = vmatmul.mubr.bf16.gmra.mrb[0].mxu0 %v1830
        %v2281 = vpop.f32.mrb[0].mxu0
        %v2282 = vadd.f32 %v1850, %v2281
        %v2283 = vpop.f32.mrb[0].mxu0
        %v2284 = vpop.f32.mrb[0].mxu0
        %v2285 = vadd.f32 %v1850, %v2284
        %v2286 = vpop.f32.mrb[0].mxu0
        %2287 = vmatprep.mubr.bf16.mxu0 0
        %2288 = vmatmul.mubr.bf16.gmra.mrb[0].mxu0 %v1831
        %v2289 = vpop.f32.mrb[0].mxu0
        %v2290 = vadd.f32 %v1850, %v2289
        %v2291 = vpop.f32.mrb[0].mxu0
        %v2292 = vpop.f32.mrb[0].mxu0
        %v2293 = vadd.f32 %v1850, %v2292
        %v2294 = vpop.f32.mrb[0].mxu0
        %2295 = vmatprep.mubr.bf16.mxu0 0
        %2296 = vmatmul.mubr.bf16.gmra.mrb[0].mxu0 %v1832
        %v2297 = vpop.f32.mrb[0].mxu0
        %v2298 = vadd.f32 %v1850, %v2297
        %v2299 = vpop.f32.mrb[0].mxu0
        %v2300 = vpop.f32.mrb[0].mxu0
        %v2301 = vadd.f32 %v1850, %v2300
        %v2302 = vpop.f32.mrb[0].mxu0
        %2303 = vmatprep.mubr.bf16.mxu0 0
        %2304 = vmatmul.mubr.bf16.gmra.mrb[0].mxu0 %v1833
        %v2305 = vpop.f32.mrb[0].mxu0
        %v2306 = vadd.f32 %v1850, %v2305
        %v2307 = vpop.f32.mrb[0].mxu0
        %v2308 = vpop.f32.mrb[0].mxu0
        %v2309 = vadd.f32 %v1850, %v2308
        %v2310 = vpop.f32.mrb[0].mxu0
        %2311 = vmatprep.mubr.bf16.mxu0 0
        %2312 = vmatmul.mubr.bf16.gmra.mrb[0].mxu0 %v1834
        %v2313 = vpop.f32.mrb[0].mxu0
        %v2314 = vadd.f32 %v1850, %v2313
        %v2315 = vpop.f32.mrb[0].mxu0
        %v2316 = vpop.f32.mrb[0].mxu0
        %v2317 = vadd.f32 %v1850, %v2316
        %v2318 = vpop.f32.mrb[0].mxu0
        %2319 = vmatprep.mubr.bf16.mxu0 0
        %2320 = vmatmul.mubr.bf16.gmra.mrb[0].mxu0 %v1835
        %v2321 = vpop.f32.mrb[0].mxu0
        %v2322 = vadd.f32 %v1850, %v2321
        %v2323 = vpop.f32.mrb[0].mxu0
        %v2324 = vpop.f32.mrb[0].mxu0
        %v2325 = vadd.f32 %v1850, %v2324
        %v2326 = vpop.f32.mrb[0].mxu0
        %2327 = vmatprep.mubr.bf16.mxu0 0
        %2328 = vmatmul.mubr.bf16.gmra.mrb[0].mxu0 %v1836
        %v2329 = vpop.f32.mrb[0].mxu0
        %v2330 = vadd.f32 %v1850, %v2329
        %v2331 = vpop.f32.mrb[0].mxu0
        %v2332 = vpop.f32.mrb[0].mxu0
        %v2333 = vadd.f32 %v1850, %v2332
        %v2334 = vpop.f32.mrb[0].mxu0
        %2335 = vdwg.mxu0
        %v2336 = vadd.f32 %v1470, %v2017
        %v2337 = vadd.f32 %v1474, %v2021
        %v2338 = vadd.f32 %v1480, %v2027
        %v2339 = vadd.f32 %v1484, %v2031
        %v2340 = vadd.f32 %v1490, %v2037
        %v2341 = vadd.f32 %v1494, %v2041
        %v2342 = vadd.f32 %v1500, %v2047
        %v2343 = vadd.f32 %v1504, %v2051
        %v2344 = vadd.f32 %v1510, %v2057
        %v2345 = vadd.f32 %v1514, %v2061
        %v2346 = vadd.f32 %v1520, %v2067
        %v2347 = vadd.f32 %v1524, %v2071
        %v2348 = vadd.f32 %v1530, %v2077
        %v2349 = vadd.f32 %v1534, %v2081
        %v2350 = vadd.f32 %v1540, %v2087
        %v2351 = vadd.f32 %v1544, %v2091
        %v2352 = vadd.f32 %v1550, %v2097
        %v2353 = vadd.f32 %v1554, %v2101
        %v2354 = vadd.f32 %v1560, %v2107
        %v2355 = vadd.f32 %v1564, %v2111
        %v2356 = vadd.f32 %v1570, %v2117
        %v2357 = vadd.f32 %v1574, %v2121
        %v2358 = vadd.f32 %v1580, %v2127
        %v2359 = vadd.f32 %v1584, %v2131
        %v2360 = vadd.f32 %v1590, %v2137
        %v2361 = vadd.f32 %v1594, %v2141
        %v2362 = vadd.f32 %v1600, %v2147
        %v2363 = vadd.f32 %v1604, %v2151
        %v2364 = vadd.f32 %v1610, %v2157
        %v2365 = vadd.f32 %v1614, %v2161
        %v2366 = vadd.f32 %v1620, %v2167
        %v2367 = vadd.f32 %v1624, %v2171
        %v2368 = vxor.u32 %v2336, 2147483648
        %v2369 = vxor.u32 %v2337, 2147483648
        %v2370 = vxor.u32 %v2338, 2147483648
        %v2371 = vxor.u32 %v2339, 2147483648
        %v2372 = vxor.u32 %v2340, 2147483648
        %v2373 = vxor.u32 %v2341, 2147483648
        %v2374 = vxor.u32 %v2342, 2147483648
        %v2375 = vxor.u32 %v2343, 2147483648
        %v2376 = vxor.u32 %v2344, 2147483648
        %v2377 = vxor.u32 %v2345, 2147483648
        %v2378 = vxor.u32 %v2346, 2147483648
        %v2379 = vxor.u32 %v2347, 2147483648
        %v2380 = vxor.u32 %v2348, 2147483648
        %v2381 = vxor.u32 %v2349, 2147483648
        %v2382 = vxor.u32 %v2350, 2147483648
        %v2383 = vxor.u32 %v2351, 2147483648
        %v2384 = vxor.u32 %v2352, 2147483648
        %v2385 = vxor.u32 %v2353, 2147483648
        %v2386 = vxor.u32 %v2354, 2147483648
        %v2387 = vxor.u32 %v2355, 2147483648
        %v2388 = vxor.u32 %v2356, 2147483648
        %v2389 = vxor.u32 %v2357, 2147483648
        %v2390 = vxor.u32 %v2358, 2147483648
        %v2391 = vxor.u32 %v2359, 2147483648
        %v2392 = vxor.u32 %v2360, 2147483648
        %v2393 = vxor.u32 %v2361, 2147483648
        %v2394 = vxor.u32 %v2362, 2147483648
        %v2395 = vxor.u32 %v2363, 2147483648
        %v2396 = vxor.u32 %v2364, 2147483648
        %v2397 = vxor.u32 %v2365, 2147483648
        %v2398 = vxor.u32 %v2366, 2147483648
        %v2399 = vxor.u32 %v2367, 2147483648
        %v2400 = vmul.f32 %v2368, 1.442695
        %v2401 = vpow.pop %v2400
        %v2402 = vmul.f32 %v2369, 1.442695
        %v2403 = vpow.pop %v2402
        %v2404 = vmul.f32 %v2370, 1.442695
        %v2405 = vpow.pop %v2404
        %v2406 = vmul.f32 %v2371, 1.442695
        %v2407 = vpow.pop %v2406
        %v2408 = vmul.f32 %v2372, 1.442695
        %v2409 = vpow.pop %v2408
        %v2410 = vmul.f32 %v2373, 1.442695
        %v2411 = vpow.pop %v2410
        %v2412 = vmul.f32 %v2374, 1.442695
        %v2413 = vpow.pop %v2412
        %v2414 = vmul.f32 %v2375, 1.442695
        %v2415 = vpow.pop %v2414
        %v2416 = vmul.f32 %v2376, 1.442695
        %v2417 = vpow.pop %v2416
        %v2418 = vmul.f32 %v2377, 1.442695
        %v2419 = vpow.pop %v2418
        %v2420 = vmul.f32 %v2378, 1.442695
        %v2421 = vpow.pop %v2420
        %v2422 = vmul.f32 %v2379, 1.442695
        %v2423 = vpow.pop %v2422
        %v2424 = vmul.f32 %v2380, 1.442695
        %v2425 = vpow.pop %v2424
        %v2426 = vmul.f32 %v2381, 1.442695
        %v2427 = vpow.pop %v2426
        %v2428 = vmul.f32 %v2382, 1.442695
        %v2429 = vpow.pop %v2428
        %v2430 = vmul.f32 %v2383, 1.442695
        %v2431 = vpow.pop %v2430
        %v2432 = vmul.f32 %v2384, 1.442695
        %v2433 = vpow.pop %v2432
        %v2434 = vmul.f32 %v2385, 1.442695
        %v2435 = vpow.pop %v2434
        %v2436 = vmul.f32 %v2386, 1.442695
        %v2437 = vpow.pop %v2436
        %v2438 = vmul.f32 %v2387, 1.442695
        %v2439 = vpow.pop %v2438
        %v2440 = vmul.f32 %v2388, 1.442695
        %v2441 = vpow.pop %v2440
        %v2442 = vmul.f32 %v2389, 1.442695
        %v2443 = vpow.pop %v2442
        %v2444 = vmul.f32 %v2390, 1.442695
        %v2445 = vpow.pop %v2444
        %v2446 = vmul.f32 %v2391, 1.442695
        %v2447 = vpow.pop %v2446
        %v2448 = vmul.f32 %v2392, 1.442695
        %v2449 = vpow.pop %v2448
        %v2450 = vmul.f32 %v2393, 1.442695
        %v2451 = vpow.pop %v2450
        %v2452 = vmul.f32 %v2394, 1.442695
        %v2453 = vpow.pop %v2452
        %v2454 = vmul.f32 %v2395, 1.442695
        %v2455 = vpow.pop %v2454
        %v2456 = vmul.f32 %v2396, 1.442695
        %v2457 = vpow.pop %v2456
        %v2458 = vmul.f32 %v2397, 1.442695
        %v2459 = vpow.pop %v2458
        %v2460 = vmul.f32 %v2398, 1.442695
        %v2461 = vpow.pop %v2460
        %v2462 = vmul.f32 %v2399, 1.442695
        %v2463 = vpow.pop %v2462
        %v2464 = vadd.f32 %v2401, 1.0
        %v2465 = vadd.f32 %v2403, 1.0
        %v2466 = vadd.f32 %v2405, 1.0
        %v2467 = vadd.f32 %v2407, 1.0
        %v2468 = vadd.f32 %v2409, 1.0
        %v2469 = vadd.f32 %v2411, 1.0
        %v2470 = vadd.f32 %v2413, 1.0
        %v2471 = vadd.f32 %v2415, 1.0
        %v2472 = vadd.f32 %v2417, 1.0
        %v2473 = vadd.f32 %v2419, 1.0
        %v2474 = vadd.f32 %v2421, 1.0
        %v2475 = vadd.f32 %v2423, 1.0
        %v2476 = vadd.f32 %v2425, 1.0
        %v2477 = vadd.f32 %v2427, 1.0
        %v2478 = vadd.f32 %v2429, 1.0
        %v2479 = vadd.f32 %v2431, 1.0
        %v2480 = vadd.f32 %v2433, 1.0
        %v2481 = vadd.f32 %v2435, 1.0
        %v2482 = vadd.f32 %v2437, 1.0
        %v2483 = vadd.f32 %v2439, 1.0
        %v2484 = vadd.f32 %v2441, 1.0
        %v2485 = vadd.f32 %v2443, 1.0
        %v2486 = vadd.f32 %v2445, 1.0
        %v2487 = vadd.f32 %v2447, 1.0
        %v2488 = vadd.f32 %v2449, 1.0
        %v2489 = vadd.f32 %v2451, 1.0
        %v2490 = vadd.f32 %v2453, 1.0
        %v2491 = vadd.f32 %v2455, 1.0
        %v2492 = vadd.f32 %v2457, 1.0
        %v2493 = vadd.f32 %v2459, 1.0
        %v2494 = vadd.f32 %v2461, 1.0
        %v2495 = vadd.f32 %v2463, 1.0
        %v2496 = vrcp.pop %v2464
        %v2497 = vmul.f32 1.0, %v2496
        %v2498 = vrcp.pop %v2465
        %v2499 = vmul.f32 1.0, %v2498
        %v2500 = vrcp.pop %v2466
        %v2501 = vmul.f32 1.0, %v2500
        %v2502 = vrcp.pop %v2467
        %v2503 = vmul.f32 1.0, %v2502
        %v2504 = vrcp.pop %v2468
        %v2505 = vmul.f32 1.0, %v2504
        %v2506 = vrcp.pop %v2469
        %v2507 = vmul.f32 1.0, %v2506
        %v2508 = vrcp.pop %v2470
        %v2509 = vmul.f32 1.0, %v2508
        %v2510 = vrcp.pop %v2471
        %v2511 = vmul.f32 1.0, %v2510
        %v2512 = vrcp.pop %v2472
        %v2513 = vmul.f32 1.0, %v2512
        %v2514 = vrcp.pop %v2473
        %v2515 = vmul.f32 1.0, %v2514
        %v2516 = vrcp.pop %v2474
        %v2517 = vmul.f32 1.0, %v2516
        %v2518 = vrcp.pop %v2475
        %v2519 = vmul.f32 1.0, %v2518
        %v2520 = vrcp.pop %v2476
        %v2521 = vmul.f32 1.0, %v2520
        %v2522 = vrcp.pop %v2477
        %v2523 = vmul.f32 1.0, %v2522
        %v2524 = vrcp.pop %v2478
        %v2525 = vmul.f32 1.0, %v2524
        %v2526 = vrcp.pop %v2479
        %v2527 = vmul.f32 1.0, %v2526
        %v2528 = vrcp.pop %v2480
        %v2529 = vmul.f32 1.0, %v2528
        %v2530 = vrcp.pop %v2481
        %v2531 = vmul.f32 1.0, %v2530
        %v2532 = vrcp.pop %v2482
        %v2533 = vmul.f32 1.0, %v2532
        %v2534 = vrcp.pop %v2483
        %v2535 = vmul.f32 1.0, %v2534
        %v2536 = vrcp.pop %v2484
        %v2537 = vmul.f32 1.0, %v2536
        %v2538 = vrcp.pop %v2485
        %v2539 = vmul.f32 1.0, %v2538
        %v2540 = vrcp.pop %v2486
        %v2541 = vmul.f32 1.0, %v2540
        %v2542 = vrcp.pop %v2487
        %v2543 = vmul.f32 1.0, %v2542
        %v2544 = vrcp.pop %v2488
        %v2545 = vmul.f32 1.0, %v2544
        %v2546 = vrcp.pop %v2489
        %v2547 = vmul.f32 1.0, %v2546
        %v2548 = vrcp.pop %v2490
        %v2549 = vmul.f32 1.0, %v2548
        %v2550 = vrcp.pop %v2491
        %v2551 = vmul.f32 1.0, %v2550
        %v2552 = vrcp.pop %v2492
        %v2553 = vmul.f32 1.0, %v2552
        %v2554 = vrcp.pop %v2493
        %v2555 = vmul.f32 1.0, %v2554
        %v2556 = vrcp.pop %v2494
        %v2557 = vmul.f32 1.0, %v2556
        %v2558 = vrcp.pop %v2495
        %v2559 = vmul.f32 1.0, %v2558
        %v2560 = vadd.f32 %v1472, %v2019
        %v2561 = vadd.f32 %v1476, %v2023
        %v2562 = vadd.f32 %v1482, %v2029
        %v2563 = vadd.f32 %v1486, %v2033
        %v2564 = vadd.f32 %v1492, %v2039
        %v2565 = vadd.f32 %v1496, %v2043
        %v2566 = vadd.f32 %v1502, %v2049
        %v2567 = vadd.f32 %v1506, %v2053
        %v2568 = vadd.f32 %v1512, %v2059
        %v2569 = vadd.f32 %v1516, %v2063
        %v2570 = vadd.f32 %v1522, %v2069
        %v2571 = vadd.f32 %v1526, %v2073
        %v2572 = vadd.f32 %v1532, %v2079
        %v2573 = vadd.f32 %v1536, %v2083
        %v2574 = vadd.f32 %v1542, %v2089
        %v2575 = vadd.f32 %v1546, %v2093
        %v2576 = vadd.f32 %v1552, %v2099
        %v2577 = vadd.f32 %v1556, %v2103
        %v2578 = vadd.f32 %v1562, %v2109
        %v2579 = vadd.f32 %v1566, %v2113
        %v2580 = vadd.f32 %v1572, %v2119
        %v2581 = vadd.f32 %v1576, %v2123
        %v2582 = vadd.f32 %v1582, %v2129
        %v2583 = vadd.f32 %v1586, %v2133
        %v2584 = vadd.f32 %v1592, %v2139
        %v2585 = vadd.f32 %v1596, %v2143
        %v2586 = vadd.f32 %v1602, %v2149
        %v2587 = vadd.f32 %v1606, %v2153
        %v2588 = vadd.f32 %v1612, %v2159
        %v2589 = vadd.f32 %v1616, %v2163
        %v2590 = vadd.f32 %v1622, %v2169
        %v2591 = vadd.f32 %v1626, %v2173
        %v2592 = vxor.u32 %v2560, 2147483648
        %v2593 = vxor.u32 %v2561, 2147483648
        %v2594 = vxor.u32 %v2562, 2147483648
        %v2595 = vxor.u32 %v2563, 2147483648
        %v2596 = vxor.u32 %v2564, 2147483648
        %v2597 = vxor.u32 %v2565, 2147483648
        %v2598 = vxor.u32 %v2566, 2147483648
        %v2599 = vxor.u32 %v2567, 2147483648
        %v2600 = vxor.u32 %v2568, 2147483648
        %v2601 = vxor.u32 %v2569, 2147483648
        %v2602 = vxor.u32 %v2570, 2147483648
        %v2603 = vxor.u32 %v2571, 2147483648
        %v2604 = vxor.u32 %v2572, 2147483648
        %v2605 = vxor.u32 %v2573, 2147483648
        %v2606 = vxor.u32 %v2574, 2147483648
        %v2607 = vxor.u32 %v2575, 2147483648
        %v2608 = vxor.u32 %v2576, 2147483648
        %v2609 = vxor.u32 %v2577, 2147483648
        %v2610 = vxor.u32 %v2578, 2147483648
        %v2611 = vxor.u32 %v2579, 2147483648
        %v2612 = vxor.u32 %v2580, 2147483648
        %v2613 = vxor.u32 %v2581, 2147483648
        %v2614 = vxor.u32 %v2582, 2147483648
        %v2615 = vxor.u32 %v2583, 2147483648
        %v2616 = vxor.u32 %v2584, 2147483648
        %v2617 = vxor.u32 %v2585, 2147483648
        %v2618 = vxor.u32 %v2586, 2147483648
        %v2619 = vxor.u32 %v2587, 2147483648
        %v2620 = vxor.u32 %v2588, 2147483648
        %v2621 = vxor.u32 %v2589, 2147483648
        %v2622 = vxor.u32 %v2590, 2147483648
        %v2623 = vxor.u32 %v2591, 2147483648
        %v2624 = vmul.f32 %v2592, 1.442695
        %v2625 = vpow.pop %v2624
        %v2626 = vmul.f32 %v2593, 1.442695
        %v2627 = vpow.pop %v2626
        %v2628 = vmul.f32 %v2594, 1.442695
        %v2629 = vpow.pop %v2628
        %v2630 = vmul.f32 %v2595, 1.442695
        %v2631 = vpow.pop %v2630
        %v2632 = vmul.f32 %v2596, 1.442695
        %v2633 = vpow.pop %v2632
        %v2634 = vmul.f32 %v2597, 1.442695
        %v2635 = vpow.pop %v2634
        %v2636 = vmul.f32 %v2598, 1.442695
        %v2637 = vpow.pop %v2636
        %v2638 = vmul.f32 %v2599, 1.442695
        %v2639 = vpow.pop %v2638
        %v2640 = vmul.f32 %v2600, 1.442695
        %v2641 = vpow.pop %v2640
        %v2642 = vmul.f32 %v2601, 1.442695
        %v2643 = vpow.pop %v2642
        %v2644 = vmul.f32 %v2602, 1.442695
        %v2645 = vpow.pop %v2644
        %v2646 = vmul.f32 %v2603, 1.442695
        %v2647 = vpow.pop %v2646
        %v2648 = vmul.f32 %v2604, 1.442695
        %v2649 = vpow.pop %v2648
        %v2650 = vmul.f32 %v2605, 1.442695
        %v2651 = vpow.pop %v2650
        %v2652 = vmul.f32 %v2606, 1.442695
        %v2653 = vpow.pop %v2652
        %v2654 = vmul.f32 %v2607, 1.442695
        %v2655 = vpow.pop %v2654
        %v2656 = vmul.f32 %v2608, 1.442695
        %v2657 = vpow.pop %v2656
        %v2658 = vmul.f32 %v2609, 1.442695
        %v2659 = vpow.pop %v2658
        %v2660 = vmul.f32 %v2610, 1.442695
        %v2661 = vpow.pop %v2660
        %v2662 = vmul.f32 %v2611, 1.442695
        %v2663 = vpow.pop %v2662
        %v2664 = vmul.f32 %v2612, 1.442695
        %v2665 = vpow.pop %v2664
        %v2666 = vmul.f32 %v2613, 1.442695
        %v2667 = vpow.pop %v2666
        %v2668 = vmul.f32 %v2614, 1.442695
        %v2669 = vpow.pop %v2668
        %v2670 = vmul.f32 %v2615, 1.442695
        %v2671 = vpow.pop %v2670
        %v2672 = vmul.f32 %v2616, 1.442695
        %v2673 = vpow.pop %v2672
        %v2674 = vmul.f32 %v2617, 1.442695
        %v2675 = vpow.pop %v2674
        %v2676 = vmul.f32 %v2618, 1.442695
        %v2677 = vpow.pop %v2676
        %v2678 = vmul.f32 %v2619, 1.442695
        %v2679 = vpow.pop %v2678
        %v2680 = vmul.f32 %v2620, 1.442695
        %v2681 = vpow.pop %v2680
        %v2682 = vmul.f32 %v2621, 1.442695
        %v2683 = vpow.pop %v2682
        %v2684 = vmul.f32 %v2622, 1.442695
        %v2685 = vpow.pop %v2684
        %v2686 = vmul.f32 %v2623, 1.442695
        %v2687 = vpow.pop %v2686
        %v2688 = vadd.f32 %v2625, 1.0
        %v2689 = vadd.f32 %v2627, 1.0
        %v2690 = vadd.f32 %v2629, 1.0
        %v2691 = vadd.f32 %v2631, 1.0
        %v2692 = vadd.f32 %v2633, 1.0
        %v2693 = vadd.f32 %v2635, 1.0
        %v2694 = vadd.f32 %v2637, 1.0
        %v2695 = vadd.f32 %v2639, 1.0
        %v2696 = vadd.f32 %v2641, 1.0
        %v2697 = vadd.f32 %v2643, 1.0
        %v2698 = vadd.f32 %v2645, 1.0
        %v2699 = vadd.f32 %v2647, 1.0
        %v2700 = vadd.f32 %v2649, 1.0
        %v2701 = vadd.f32 %v2651, 1.0
        %v2702 = vadd.f32 %v2653, 1.0
        %v2703 = vadd.f32 %v2655, 1.0
        %v2704 = vadd.f32 %v2657, 1.0
        %v2705 = vadd.f32 %v2659, 1.0
        %v2706 = vadd.f32 %v2661, 1.0
        %v2707 = vadd.f32 %v2663, 1.0
        %v2708 = vadd.f32 %v2665, 1.0
        %v2709 = vadd.f32 %v2667, 1.0
        %v2710 = vadd.f32 %v2669, 1.0
        %v2711 = vadd.f32 %v2671, 1.0
        %v2712 = vadd.f32 %v2673, 1.0
        %v2713 = vadd.f32 %v2675, 1.0
        %v2714 = vadd.f32 %v2677, 1.0
        %v2715 = vadd.f32 %v2679, 1.0
        %v2716 = vadd.f32 %v2681, 1.0
        %v2717 = vadd.f32 %v2683, 1.0
        %v2718 = vadd.f32 %v2685, 1.0
        %v2719 = vadd.f32 %v2687, 1.0
        %v2720 = vrcp.pop %v2688
        %v2721 = vmul.f32 1.0, %v2720
        %v2722 = vrcp.pop %v2689
        %v2723 = vmul.f32 1.0, %v2722
        %v2724 = vrcp.pop %v2690
        %v2725 = vmul.f32 1.0, %v2724
        %v2726 = vrcp.pop %v2691
        %v2727 = vmul.f32 1.0, %v2726
        %v2728 = vrcp.pop %v2692
        %v2729 = vmul.f32 1.0, %v2728
        %v2730 = vrcp.pop %v2693
        %v2731 = vmul.f32 1.0, %v2730
        %v2732 = vrcp.pop %v2694
        %v2733 = vmul.f32 1.0, %v2732
        %v2734 = vrcp.pop %v2695
        %v2735 = vmul.f32 1.0, %v2734
        %v2736 = vrcp.pop %v2696
        %v2737 = vmul.f32 1.0, %v2736
        %v2738 = vrcp.pop %v2697
        %v2739 = vmul.f32 1.0, %v2738
        %v2740 = vrcp.pop %v2698
        %v2741 = vmul.f32 1.0, %v2740
        %v2742 = vrcp.pop %v2699
        %v2743 = vmul.f32 1.0, %v2742
        %v2744 = vrcp.pop %v2700
        %v2745 = vmul.f32 1.0, %v2744
        %v2746 = vrcp.pop %v2701
        %v2747 = vmul.f32 1.0, %v2746
        %v2748 = vrcp.pop %v2702
        %v2749 = vmul.f32 1.0, %v2748
        %v2750 = vrcp.pop %v2703
        %v2751 = vmul.f32 1.0, %v2750
        %v2752 = vrcp.pop %v2704
        %v2753 = vmul.f32 1.0, %v2752
        %v2754 = vrcp.pop %v2705
        %v2755 = vmul.f32 1.0, %v2754
        %v2756 = vrcp.pop %v2706
        %v2757 = vmul.f32 1.0, %v2756
        %v2758 = vrcp.pop %v2707
        %v2759 = vmul.f32 1.0, %v2758
        %v2760 = vrcp.pop %v2708
        %v2761 = vmul.f32 1.0, %v2760
        %v2762 = vrcp.pop %v2709
        %v2763 = vmul.f32 1.0, %v2762
        %v2764 = vrcp.pop %v2710
        %v2765 = vmul.f32 1.0, %v2764
        %v2766 = vrcp.pop %v2711
        %v2767 = vmul.f32 1.0, %v2766
        %v2768 = vrcp.pop %v2712
        %v2769 = vmul.f32 1.0, %v2768
        %v2770 = vrcp.pop %v2713
        %v2771 = vmul.f32 1.0, %v2770
        %v2772 = vrcp.pop %v2714
        %v2773 = vmul.f32 1.0, %v2772
        %v2774 = vrcp.pop %v2715
        %v2775 = vmul.f32 1.0, %v2774
        %v2776 = vrcp.pop %v2716
        %v2777 = vmul.f32 1.0, %v2776
        %v2778 = vrcp.pop %v2717
        %v2779 = vmul.f32 1.0, %v2778
        %v2780 = vrcp.pop %v2718
        %v2781 = vmul.f32 1.0, %v2780
        %v2782 = vrcp.pop %v2719
        %v2783 = vmul.f32 1.0, %v2782
        %v2784 = vmul.f32 %v2497, %v2210
        %v2785 = vmul.f32 %v2499, %v2213
        %v2786 = vmul.f32 %v2501, %v2218
        %v2787 = vmul.f32 %v2503, %v2221
        %v2788 = vmul.f32 %v2505, %v2226
        %v2789 = vmul.f32 %v2507, %v2229
        %v2790 = vmul.f32 %v2509, %v2234
        %v2791 = vmul.f32 %v2511, %v2237
        %v2792 = vmul.f32 %v2513, %v2242
        %v2793 = vmul.f32 %v2515, %v2245
        %v2794 = vmul.f32 %v2517, %v2250
        %v2795 = vmul.f32 %v2519, %v2253
        %v2796 = vmul.f32 %v2521, %v2258
        %v2797 = vmul.f32 %v2523, %v2261
        %v2798 = vmul.f32 %v2525, %v2266
        %v2799 = vmul.f32 %v2527, %v2269
        %v2800 = vmul.f32 %v2529, %v2274
        %v2801 = vmul.f32 %v2531, %v2277
        %v2802 = vmul.f32 %v2533, %v2282
        %v2803 = vmul.f32 %v2535, %v2285
        %v2804 = vmul.f32 %v2537, %v2290
        %v2805 = vmul.f32 %v2539, %v2293
        %v2806 = vmul.f32 %v2541, %v2298
        %v2807 = vmul.f32 %v2543, %v2301
        %v2808 = vmul.f32 %v2545, %v2306
        %v2809 = vmul.f32 %v2547, %v2309
        %v2810 = vmul.f32 %v2549, %v2314
        %v2811 = vmul.f32 %v2551, %v2317
        %v2812 = vmul.f32 %v2553, %v2322
        %v2813 = vmul.f32 %v2555, %v2325
        %v2814 = vmul.f32 %v2557, %v2330
        %v2815 = vmul.f32 %v2559, %v2333
        %v2816 = vadd.f32 %v1663, %v2784
        %v2817 = vadd.f32 %v1666, %v2785
        %v2818 = vadd.f32 %v1671, %v2786
        %v2819 = vadd.f32 %v1674, %v2787
        %v2820 = vadd.f32 %v1679, %v2788
        %v2821 = vadd.f32 %v1682, %v2789
        %v2822 = vadd.f32 %v1687, %v2790
        %v2823 = vadd.f32 %v1690, %v2791
        %v2824 = vadd.f32 %v1695, %v2792
        %v2825 = vadd.f32 %v1698, %v2793
        %v2826 = vadd.f32 %v1703, %v2794
        %v2827 = vadd.f32 %v1706, %v2795
        %v2828 = vadd.f32 %v1711, %v2796
        %v2829 = vadd.f32 %v1714, %v2797
        %v2830 = vadd.f32 %v1719, %v2798
        %v2831 = vadd.f32 %v1722, %v2799
        %v2832 = vadd.f32 %v1727, %v2800
        %v2833 = vadd.f32 %v1730, %v2801
        %v2834 = vadd.f32 %v1735, %v2802
        %v2835 = vadd.f32 %v1738, %v2803
        %v2836 = vadd.f32 %v1743, %v2804
        %v2837 = vadd.f32 %v1746, %v2805
        %v2838 = vadd.f32 %v1751, %v2806
        %v2839 = vadd.f32 %v1754, %v2807
        %v2840 = vadd.f32 %v1759, %v2808
        %v2841 = vadd.f32 %v1762, %v2809
        %v2842 = vadd.f32 %v1767, %v2810
        %v2843 = vadd.f32 %v1770, %v2811
        %v2844 = vadd.f32 %v1775, %v2812
        %v2845 = vadd.f32 %v1778, %v2813
        %v2846 = vadd.f32 %v1783, %v2814
        %v2847 = vadd.f32 %v1786, %v2815
        %v2848 = vtanh.pop %v2816
        %v2849 = vtanh.pop %v2817
        %v2850 = vtanh.pop %v2818
        %v2851 = vtanh.pop %v2819
        %v2852 = vtanh.pop %v2820
        %v2853 = vtanh.pop %v2821
        %v2854 = vtanh.pop %v2822
        %v2855 = vtanh.pop %v2823
        %v2856 = vtanh.pop %v2824
        %v2857 = vtanh.pop %v2825
        %v2858 = vtanh.pop %v2826
        %v2859 = vtanh.pop %v2827
        %v2860 = vtanh.pop %v2828
        %v2861 = vtanh.pop %v2829
        %v2862 = vtanh.pop %v2830
        %v2863 = vtanh.pop %v2831
        %v2864 = vtanh.pop %v2832
        %v2865 = vtanh.pop %v2833
        %v2866 = vtanh.pop %v2834
        %v2867 = vtanh.pop %v2835
        %v2868 = vtanh.pop %v2836
        %v2869 = vtanh.pop %v2837
        %v2870 = vtanh.pop %v2838
        %v2871 = vtanh.pop %v2839
        %v2872 = vtanh.pop %v2840
        %v2873 = vtanh.pop %v2841
        %v2874 = vtanh.pop %v2842
        %v2875 = vtanh.pop %v2843
        %v2876 = vtanh.pop %v2844
        %v2877 = vtanh.pop %v2845
        %v2878 = vtanh.pop %v2846
        %v2879 = vtanh.pop %v2847
        %v2880 = vsub.f32 1.0, %v2721
        %v2881 = vsub.f32 1.0, %v2723
        %v2882 = vsub.f32 1.0, %v2725
        %v2883 = vsub.f32 1.0, %v2727
        %v2884 = vsub.f32 1.0, %v2729
        %v2885 = vsub.f32 1.0, %v2731
        %v2886 = vsub.f32 1.0, %v2733
        %v2887 = vsub.f32 1.0, %v2735
        %v2888 = vsub.f32 1.0, %v2737
        %v2889 = vsub.f32 1.0, %v2739
        %v2890 = vsub.f32 1.0, %v2741
        %v2891 = vsub.f32 1.0, %v2743
        %v2892 = vsub.f32 1.0, %v2745
        %v2893 = vsub.f32 1.0, %v2747
        %v2894 = vsub.f32 1.0, %v2749
        %v2895 = vsub.f32 1.0, %v2751
        %v2896 = vsub.f32 1.0, %v2753
        %v2897 = vsub.f32 1.0, %v2755
        %v2898 = vsub.f32 1.0, %v2757
        %v2899 = vsub.f32 1.0, %v2759
        %v2900 = vsub.f32 1.0, %v2761
        %v2901 = vsub.f32 1.0, %v2763
        %v2902 = vsub.f32 1.0, %v2765
        %v2903 = vsub.f32 1.0, %v2767
        %v2904 = vsub.f32 1.0, %v2769
        %v2905 = vsub.f32 1.0, %v2771
        %v2906 = vsub.f32 1.0, %v2773
        %v2907 = vsub.f32 1.0, %v2775
        %v2908 = vsub.f32 1.0, %v2777
        %v2909 = vsub.f32 1.0, %v2779
        %v2910 = vsub.f32 1.0, %v2781
        %v2911 = vsub.f32 1.0, %v2783
        %v2912 = vmul.f32 %v2880, %v2848
        %v2913 = vmul.f32 %v2881, %v2849
        %v2914 = vmul.f32 %v2882, %v2850
        %v2915 = vmul.f32 %v2883, %v2851
        %v2916 = vmul.f32 %v2884, %v2852
        %v2917 = vmul.f32 %v2885, %v2853
        %v2918 = vmul.f32 %v2886, %v2854
        %v2919 = vmul.f32 %v2887, %v2855
        %v2920 = vmul.f32 %v2888, %v2856
        %v2921 = vmul.f32 %v2889, %v2857
        %v2922 = vmul.f32 %v2890, %v2858
        %v2923 = vmul.f32 %v2891, %v2859
        %v2924 = vmul.f32 %v2892, %v2860
        %v2925 = vmul.f32 %v2893, %v2861
        %v2926 = vmul.f32 %v2894, %v2862
        %v2927 = vmul.f32 %v2895, %v2863
        %v2928 = vmul.f32 %v2896, %v2864
        %v2929 = vmul.f32 %v2897, %v2865
        %v2930 = vmul.f32 %v2898, %v2866
        %v2931 = vmul.f32 %v2899, %v2867
        %v2932 = vmul.f32 %v2900, %v2868
        %v2933 = vmul.f32 %v2901, %v2869
        %v2934 = vmul.f32 %v2902, %v2870
        %v2935 = vmul.f32 %v2903, %v2871
        %v2936 = vmul.f32 %v2904, %v2872
        %v2937 = vmul.f32 %v2905, %v2873
        %v2938 = vmul.f32 %v2906, %v2874
        %v2939 = vmul.f32 %v2907, %v2875
        %v2940 = vmul.f32 %v2908, %v2876
        %v2941 = vmul.f32 %v2909, %v2877
        %v2942 = vmul.f32 %v2910, %v2878
        %v2943 = vmul.f32 %v2911, %v2879
        %v2944 = vmul.f32 %v2721, %v1210
        %v2945 = vmul.f32 %v2723, %v1211
        %v2946 = vmul.f32 %v2725, %v1212
        %v2947 = vmul.f32 %v2727, %v1213
        %v2948 = vmul.f32 %v2729, %v1214
        %v2949 = vmul.f32 %v2731, %v1215
        %v2950 = vmul.f32 %v2733, %v1216
        %v2951 = vmul.f32 %v2735, %v1217
        %v2952 = vmul.f32 %v2737, %v1218
        %v2953 = vmul.f32 %v2739, %v1219
        %v2954 = vmul.f32 %v2741, %v1220
        %v2955 = vmul.f32 %v2743, %v1221
        %v2956 = vmul.f32 %v2745, %v1222
        %v2957 = vmul.f32 %v2747, %v1223
        %v2958 = vmul.f32 %v2749, %v1224
        %v2959 = vmul.f32 %v2751, %v1225
        %v2960 = vmul.f32 %v2753, %v1226
        %v2961 = vmul.f32 %v2755, %v1227
        %v2962 = vmul.f32 %v2757, %v1228
        %v2963 = vmul.f32 %v2759, %v1229
        %v2964 = vmul.f32 %v2761, %v1230
        %v2965 = vmul.f32 %v2763, %v1231
        %v2966 = vmul.f32 %v2765, %v1232
        %v2967 = vmul.f32 %v2767, %v1233
        %v2968 = vmul.f32 %v2769, %v1234
        %v2969 = vmul.f32 %v2771, %v1235
        %v2970 = vmul.f32 %v2773, %v1236
        %v2971 = vmul.f32 %v2775, %v1237
        %v2972 = vmul.f32 %v2777, %v1238
        %v2973 = vmul.f32 %v2779, %v1239
        %v2974 = vmul.f32 %v2781, %v1240
        %v2975 = vmul.f32 %v2783, %v1241
        %v2976 = vadd.f32 %v2912, %v2944
        %v2977 = vadd.f32 %v2913, %v2945
        %v2978 = vadd.f32 %v2914, %v2946
        %v2979 = vadd.f32 %v2915, %v2947
        %v2980 = vadd.f32 %v2916, %v2948
        %v2981 = vadd.f32 %v2917, %v2949
        %v2982 = vadd.f32 %v2918, %v2950
        %v2983 = vadd.f32 %v2919, %v2951
        %v2984 = vadd.f32 %v2920, %v2952
        %v2985 = vadd.f32 %v2921, %v2953
        %v2986 = vadd.f32 %v2922, %v2954
        %v2987 = vadd.f32 %v2923, %v2955
        %v2988 = vadd.f32 %v2924, %v2956
        %v2989 = vadd.f32 %v2925, %v2957
        %v2990 = vadd.f32 %v2926, %v2958
        %v2991 = vadd.f32 %v2927, %v2959
        %v2992 = vadd.f32 %v2928, %v2960
        %v2993 = vadd.f32 %v2929, %v2961
        %v2994 = vadd.f32 %v2930, %v2962
        %v2995 = vadd.f32 %v2931, %v2963
        %v2996 = vadd.f32 %v2932, %v2964
        %v2997 = vadd.f32 %v2933, %v2965
        %v2998 = vadd.f32 %v2934, %v2966
        %v2999 = vadd.f32 %v2935, %v2967
        %v3000 = vadd.f32 %v2936, %v2968
        %v3001 = vadd.f32 %v2937, %v2969
        %v3002 = vadd.f32 %v2938, %v2970
        %v3003 = vadd.f32 %v2939, %v2971
        %v3004 = vadd.f32 %v2940, %v2972
        %v3005 = vadd.f32 %v2941, %v2973
        %v3006 = vadd.f32 %v2942, %v2974
        %v3007 = vadd.f32 %v2943, %v2975
        %3008 = vst [vmem:[%s1209] sm:$0xff] %v2976
        %3009 = vst [vmem:[%s1209 + $0x8] sm:$0xff] %v2977
        %3010 = vst [vmem:[%s1209 + $0x10] sm:$0xff] %v2978
        %3011 = vst [vmem:[%s1209 + $0x18] sm:$0xff] %v2979
        %3012 = vst [vmem:[%s1209 + $0x20] sm:$0xff] %v2980
        %3013 = vst [vmem:[%s1209 + $0x28] sm:$0xff] %v2981
        %3014 = vst [vmem:[%s1209 + $0x30] sm:$0xff] %v2982
        %3015 = vst [vmem:[%s1209 + $0x38] sm:$0xff] %v2983
        %3016 = vst [vmem:[%s1209 + $0x40] sm:$0xff] %v2984
        %3017 = vst [vmem:[%s1209 + $0x48] sm:$0xff] %v2985
        %3018 = vst [vmem:[%s1209 + $0x50] sm:$0xff] %v2986
        %3019 = vst [vmem:[%s1209 + $0x58] sm:$0xff] %v2987
        %3020 = vst [vmem:[%s1209 + $0x60] sm:$0xff] %v2988
        %3021 = vst [vmem:[%s1209 + $0x68] sm:$0xff] %v2989
        %3022 = vst [vmem:[%s1209 + $0x70] sm:$0xff] %v2990
        %3023 = vst [vmem:[%s1209 + $0x78] sm:$0xff] %v2991
        %3024 = vst [vmem:[%s1209 + $0x80] sm:$0xff] %v2992
        %3025 = vst [vmem:[%s1209 + $0x88] sm:$0xff] %v2993
        %3026 = vst [vmem:[%s1209 + $0x90] sm:$0xff] %v2994
        %3027 = vst [vmem:[%s1209 + $0x98] sm:$0xff] %v2995
        %3028 = vst [vmem:[%s1209 + $0xa0] sm:$0xff] %v2996
        %3029 = vst [vmem:[%s1209 + $0xa8] sm:$0xff] %v2997
        %3030 = vst [vmem:[%s1209 + $0xb0] sm:$0xff] %v2998
        %3031 = vst [vmem:[%s1209 + $0xb8] sm:$0xff] %v2999
        %3032 = vst [vmem:[%s1209 + $0xc0] sm:$0xff] %v3000
        %3033 = vst [vmem:[%s1209 + $0xc8] sm:$0xff] %v3001
        %3034 = vst [vmem:[%s1209 + $0xd0] sm:$0xff] %v3002
        %3035 = vst [vmem:[%s1209 + $0xd8] sm:$0xff] %v3003
        %3036 = vst [vmem:[%s1209 + $0xe0] sm:$0xff] %v3004
        %3037 = vst [vmem:[%s1209 + $0xe8] sm:$0xff] %v3005
        %3038 = vst [vmem:[%s1209 + $0xf0] sm:$0xff] %v3006
        %3039 = vst [vmem:[%s1209 + $0xf8] sm:$0xff] %v3007
        %p3040 = scmp.eq.s32.totalorder %s25, 2
        %p3041 = scmp.eq.s32.totalorder %s26, 1
        %p3042 = pnand %p3040, %p3041
        %p3043 = pneg %p3042
        // Predicated region
        $region65: #{tpu_custom_call.1} parent=39 // pred_check
          _
        $region66: #{tpu_custom_call.1} parent=39 // pred_check_branch
          %3045 = sbr.rel (%p3042) target = $region68
        $region67: #{tpu_custom_call.1} parent=39 // pred_region
          // Predicated region
          $region69: #{tpu_custom_call.1} parent=67 // pred_check
            _
          $region70: #{tpu_custom_call.1} parent=67 // pred_check_branch
            %3047 = sbr.rel target = $region72
          $region71: #{tpu_custom_call.1} parent=67 // pred_region
            %3048 = sst [smem:[#allocation13]] [#allocation18]
            %3049 = sst [smem:[#allocation14]] [#allocation17]
          $region72: #{tpu_custom_call.1} parent=67 // pred_fallthru
            _
          %3051 = shalt.err (0)
          %s3053 = sshll.u32 [#allocation2], 4
          %s3054 = int_to_ptr.vmem [resolvable:$true] %s3053
          %3056 = dma.vmem_to_hbm [thread:$0]  %s3054, 8192, %s7, [#allocation5]
          %s3057 = smul.u32 512, 1
          %s3058 = sshll.u32 %s3057, 4
          %3059 = dma.done [#allocation5], %s3058
        $region68: #{tpu_custom_call.1} parent=39 // pred_fallthru
          _
      $region40: #{tpu_custom_call.1} parent=5 // pred_fallthru
        _
    $region6: #{tpu_custom_call.1} parent=1 // loop_footer
      %s21 = sadd.s32 1, %s17
    $region7: #{tpu_custom_call.1} parent=1 // loop_footer_branch
      %16 = sbr.rel target = $region3
    $region8: #{tpu_custom_call.1} parent=1 // loop_exit
      _
    %3060 = vsyncpa [#allocation7], 1
    %s3061 = scalar_lea.sflag [#allocation7], 1
    %3062 = vsyncpa %s3061, 1
    %3063 = vsyncpa [#allocation9], 1
  %3064 = vsyncmov [#allocation5]
  %s3065 = vpop.sfrf %3064
  %p3066 = scmp.eq.s32.totalorder %s3065, 0
  %p3067 = pneg %p3066
  %3069 = shalt.err (%p3067)
  %s3070 = scalar_lea.sflag [#allocation5], 1
  %3071 = vsyncmov %s3070
  %s3072 = vpop.sfrf %3071
  %p3073 = scmp.eq.s32.totalorder %s3072, 0
  %p3074 = pneg %p3073
  %3076 = shalt.err (%p3074)

</llo_original>
